<compile_context>
chip_gen: v5e
topology: v5e:2x2
jax: 0.10.0
libtpu: 0.0.40
codegen_flags: <defaults>
</compile_context>

<pallas_src>
import math
import functools

import jax
import jax.numpy as jnp
from jax import lax
from jax.experimental import pallas as pl
from jax.experimental.pallas import tpu as pltpu

_F32 = jnp.float32
_BF16 = jnp.bfloat16


def _bf16(x):
    return x.astype(_BF16)


def _layernorm(t, w, b):
    # PyTorch nn.LayerNorm over the last dim (eps=1e-5, biased variance), f32 stats.
    mu = jnp.mean(t, axis=-1, keepdims=True)
    tc = t - mu
    var = jnp.mean(tc * tc, axis=-1, keepdims=True)
    return tc * lax.rsqrt(var + 1e-5) * w + b


# --------------------------------------------------------------------------------------
# Kernel A ("prep"): one grid step == one batch element (needs the full spatial extent).
#   GroupNorm -> conv_input (1x1) -> [LayerNorm_1 -> self-attn K/V projections]
# --------------------------------------------------------------------------------------
def _prep_kernel(x_ref, onehot_ref, gn_w_ref, gn_b_ref, ci_w_ref, ci_b_ref,
                 ln1_w_ref, ln1_b_ref, a1_kw_ref, a1_vw_ref,
                 h0_ref, k1_ref, v1_ref):
    x = x_ref[...]                                   # (HW, C) f32 spatial tokens
    hw, c = x.shape
    n_groups = onehot_ref.shape[1]
    inv_cnt = 1.0 / float(hw * (c // n_groups))      # elements per GroupNorm group

    onehot = onehot_ref[...]                         # (C, G) channel->group membership

    # GroupNorm(32, C, eps=1e-6): centered, two-pass statistics (f32, no E[x^2]-E[x]^2).
    col_sum = jnp.sum(x, axis=0, keepdims=True)                                  # (1, C)
    g_mean = jnp.dot(col_sum, onehot, preferred_element_type=_F32) * inv_cnt     # (1, G)
    mean_c = lax.dot_general(g_mean, onehot, (((1,), (1,)), ((), ())),
                             preferred_element_type=_F32)                        # (1, C)
    xc = x - mean_c
    col_sq = jnp.sum(xc * xc, axis=0, keepdims=True)                             # (1, C)
    g_var = jnp.dot(col_sq, onehot, preferred_element_type=_F32) * inv_cnt       # (1, G)
    var_c = lax.dot_general(g_var, onehot, (((1,), (1,)), ((), ())),
                            preferred_element_type=_F32)                         # (1, C)
    h = xc * lax.rsqrt(var_c + 1e-6) * gn_w_ref[...] + gn_b_ref[...]

    # conv_input (1x1 conv == channel matmul): bf16 x bf16 -> f32 accumulate.
    h0 = jnp.dot(_bf16(h), ci_w_ref[...], preferred_element_type=_F32) + ci_b_ref[...]
    h0_ref[...] = h0

    # LayerNorm_1 + self-attention K / V projections over the whole batch element
    # (precomputed once so the main kernel can tile over HW query tiles).
    t = _bf16(_layernorm(h0, ln1_w_ref[...], ln1_b_ref[...]))
    k1_ref[...] = jnp.dot(t, a1_kw_ref[...], preferred_element_type=_F32).astype(_BF16)
    v1_ref[...] = jnp.dot(t, a1_vw_ref[...], preferred_element_type=_F32).astype(_BF16)


# --------------------------------------------------------------------------------------
# Kernel B ("main"): one grid step == one (batch, HW query tile).
#   self-attn (flash-style K-chunked) -> cross-attn -> GEGLU -> conv_output (+residuals)
# --------------------------------------------------------------------------------------
def _main_kernel(x_ref, h0_ref, k1_ref, v1_ref, ctx_ref,
                 ln1_w_ref, ln1_b_ref, a1_qw_ref, a1_ow_ref, a1_ob_ref,
                 ln2_w_ref, ln2_b_ref, a2_qw_ref, a2_kw_ref, a2_vw_ref,
                 a2_ow_ref, a2_ob_ref,
                 ln3_w_ref, ln3_b_ref, g1_w_ref, g1_b_ref, g2_w_ref, g2_b_ref,
                 co_w_ref, co_b_ref,
                 o_ref, *, n_heads, kv_chunk):
    x = x_ref[...]                                   # (TQ, C) f32 -- long residual
    h0 = h0_ref[...]                                 # (TQ, C) f32 -- post conv_input
    tq, c = h0.shape
    d_head = c // n_heads
    scale = 1.0 / math.sqrt(d_head)
    hw_kv = k1_ref.shape[0]
    n_chunks = hw_kv // kv_chunk

    def split_heads(t2d):
        # (n_tok, C) -> (n_heads, n_tok, d_head); head-batched layout for the MXU.
        n_tok = t2d.shape[0]
        return jnp.transpose(t2d.reshape(n_tok, n_heads, d_head), (1, 0, 2))

    def merge_heads(a3d):
        # (n_heads, n_tok, d_head) -> (n_tok, C)
        n_tok = a3d.shape[1]
        return jnp.transpose(a3d, (1, 0, 2)).reshape(n_tok, c)

    # ------------ LayerNorm_1 + self-attention (K-chunked online softmax) --------------
    t = _layernorm(h0, ln1_w_ref[...], ln1_b_ref[...])
    # 1/sqrt(d_head) folded into q (in_proj has no bias, so this is exact).
    q = jnp.dot(_bf16(t), a1_qw_ref[...], preferred_element_type=_F32) * scale
    q_h = split_heads(_bf16(q))                      # (nH, TQ, dH) bf16

    def kv_step(i, carry):
        m_i, l_i, acc = carry
        start = pl.multiple_of(i * kv_chunk, kv_chunk)
        k_h = split_heads(k1_ref[pl.ds(start, kv_chunk), :])   # (nH, KC, dH) bf16
        v_h = split_heads(v1_ref[pl.ds(start, kv_chunk), :])
        s = jnp.einsum('hqd,hkd->hqk', q_h, k_h,
                       preferred_element_type=_F32)            # (nH, TQ, KC) f32
        m_new = jnp.maximum(m_i, jnp.max(s, axis=-1, keepdims=True))
        alpha = jnp.exp(m_i - m_new)
        p = jnp.exp(s - m_new)
        l_new = alpha * l_i + jnp.sum(p, axis=-1, keepdims=True)
        pv = jnp.einsum('hqk,hkd->hqd', _bf16(p), v_h, preferred_element_type=_F32)
        return m_new, l_new, alpha * acc + pv

    m0 = jnp.full((n_heads, tq, 1), -jnp.inf, _F32)
    l0 = jnp.zeros((n_heads, tq, 1), _F32)
    a0 = jnp.zeros((n_heads, tq, d_head), _F32)
    _, l_f, acc = lax.fori_loop(0, n_chunks, kv_step, (m0, l0, a0))
    attn = merge_heads(acc * pl.reciprocal(l_f, approx=True))
    h = jnp.dot(_bf16(attn), a1_ow_ref[...], preferred_element_type=_F32) + a1_ob_ref[...]
    h = h + h0                                       # residue_short #1 (f32)

    # ------------ LayerNorm_2 + cross-attention over the (small) context ---------------
    residue = h
    t = _layernorm(h, ln2_w_ref[...], ln2_b_ref[...])
    q = jnp.dot(_bf16(t), a2_qw_ref[...], preferred_element_type=_F32) * scale
    ctx = _bf16(ctx_ref[...])                        # (S, Dc)
    k = jnp.dot(ctx, a2_kw_ref[...], preferred_element_type=_F32)
    v = jnp.dot(ctx, a2_vw_ref[...], preferred_element_type=_F32)
    q_h = split_heads(_bf16(q))
    k_h = split_heads(_bf16(k))
    v_h = split_heads(_bf16(v))
    s = jnp.einsum('hqd,hkd->hqk', q_h, k_h, preferred_element_type=_F32)
    s = s - jnp.max(s, axis=-1, keepdims=True)
    p = jnp.exp(s)
    p = p * pl.reciprocal(jnp.sum(p, axis=-1, keepdims=True), approx=True)
    attn = merge_heads(jnp.einsum('hqk,hkd->hqd', _bf16(p), v_h,
                                  preferred_element_type=_F32))
    h = jnp.dot(_bf16(attn), a2_ow_ref[...], preferred_element_type=_F32) + a2_ob_ref[...]
    h = h + residue                                  # residue_short #2

    # ------------ LayerNorm_3 + GEGLU (bounded (TQ, 8C) slab thanks to HW tiling) ------
    residue = h
    t = _layernorm(h, ln3_w_ref[...], ln3_b_ref[...])
    g = jnp.dot(_bf16(t), g1_w_ref[...], preferred_element_type=_F32) + g1_b_ref[...]
    xg, gate = g[:, :4 * c], g[:, 4 * c:]
    gelu_gate = 0.5 * gate * (1.0 + lax.erf(gate * (1.0 / math.sqrt(2.0))))  # exact GELU
    t = xg * gelu_gate
    h = jnp.dot(_bf16(t), g2_w_ref[...], preferred_element_type=_F32) + g2_b_ref[...]
    h = h + residue                                  # residue_short #3

    # ------------ conv_output (1x1) + long residual -------------------------------------
    out = jnp.dot(_bf16(h), co_w_ref[...], preferred_element_type=_F32) + co_b_ref[...]
    o_ref[...] = out + x


# --------------------------------------------------------------------------------------
# Wrapper: layout plumbing + the two pallas_calls.
# --------------------------------------------------------------------------------------
def _vmem_limit_bytes():
    # ~100 MB on v5e/v6e (128 MiB physical VMEM), <= ~56 MB on v7x (64 MiB physical).
    try:
        cap = int(pltpu.get_tpu_info().vmem_capacity_bytes)
        return max(min(cap - (8 << 20), 100 << 20), 32 << 20)
    except Exception:
        return 48 << 20  # conservative default that fits every TPU generation


def _forward(x_nchw, context, params, *, n_heads, q_tile, kv_chunk, single_buffer_weights):
    N, C, H, W = x_nchw.shape
    HW = H * W
    _, S, Dc = context.shape
    assert C % n_heads == 0
    assert HW % q_tile == 0 and q_tile % 8 == 0
    assert HW % kv_chunk == 0 and kv_chunk % 8 == 0

    # NCHW -> (N, HW, C): the 1x1 convs become plain channel matmuls in this layout.
    x_tok = jnp.transpose(x_nchw.reshape(N, C, HW), (0, 2, 1))
    vmem_limit = _vmem_limit_bytes()

    def wspec(shape):
        # Grid-invariant weights: no point double-buffering constants.
        nd = len(shape)
        if single_buffer_weights:
            return pl.BlockSpec(shape, lambda *_: (0,) * nd, pipeline_mode=pl.Buffered(1))
        return pl.BlockSpec(shape, lambda *_: (0,) * nd)

    # ---------------- kernel A: GroupNorm + conv_input + LN1 + self-attn K/V ------------
    prep_w = [params[k] for k in ("onehot", "gn_w", "gn_b", "ci_w", "ci_b",
                                  "ln1_w", "ln1_b", "a1_kw", "a1_vw")]
    prep_flops = int(6 * N * HW * C * C)
    prep_bytes = int(4 * N * HW * C * 2 + 2 * N * HW * C * 2
                     + sum(w.size * w.dtype.itemsize for w in prep_w))

    h0, k1, v1 = pl.pallas_call(
        _prep_kernel,
        grid=(N,),
        in_specs=[pl.BlockSpec((None, HW, C), lambda n: (n, 0, 0))]
                 + [wspec(w.shape) for w in prep_w],
        out_specs=(
            pl.BlockSpec((None, HW, C), lambda n: (n, 0, 0)),
            pl.BlockSpec((None, HW, C), lambda n: (n, 0, 0)),
            pl.BlockSpec((None, HW, C), lambda n: (n, 0, 0)),
        ),
        out_shape=(
            jax.ShapeDtypeStruct((N, HW, C), _F32),    # h0 (residue_short, f32)
            jax.ShapeDtypeStruct((N, HW, C), _BF16),   # self-attn K
            jax.ShapeDtypeStruct((N, HW, C), _BF16),   # self-attn V
        ),
        compiler_params=pltpu.CompilerParams(
            dimension_semantics=("parallel",), vmem_limit_bytes=vmem_limit),
        cost_estimate=pl.CostEstimate(flops=prep_flops, transcendentals=int(N * HW),
                                      bytes_accessed=prep_bytes),
    )(x_tok, *prep_w)

    # ---------------- kernel B: attention / GEGLU / conv_output, tiled over HW ----------
    main_w = [params[k] for k in ("ln1_w", "ln1_b", "a1_qw", "a1_ow", "a1_ob",
                                  "ln2_w", "ln2_b", "a2_qw", "a2_kw", "a2_vw",
                                  "a2_ow", "a2_ob",
                                  "ln3_w", "ln3_b", "g1_w", "g1_b", "g2_w", "g2_b",
                                  "co_w", "co_b")]
    main_flops = int(N * (2 * HW * C * C * 17 + 4 * HW * HW * C
                          + 4 * HW * S * C + 4 * S * Dc * C))
    main_trans = int(N * (n_heads * HW * HW + n_heads * HW * S + HW * 4 * C))
    main_bytes = int(4 * N * HW * C * 3 + 2 * N * HW * C * 2 + 4 * N * S * Dc
                     + sum(w.size * w.dtype.itemsize for w in main_w))

    out_tok = pl.pallas_call(
        functools.partial(_main_kernel, n_heads=n_heads, kv_chunk=kv_chunk),
        grid=(N, HW // q_tile),
        in_specs=[
            pl.BlockSpec((None, q_tile, C), lambda n, t: (n, t, 0)),   # x tokens (residual)
            pl.BlockSpec((None, q_tile, C), lambda n, t: (n, t, 0)),   # h0 tile
            pl.BlockSpec((None, HW, C), lambda n, t: (n, 0, 0)),       # K (full, per batch)
            pl.BlockSpec((None, HW, C), lambda n, t: (n, 0, 0)),       # V (full, per batch)
            pl.BlockSpec((None, S, Dc), lambda n, t: (n, 0, 0)),       # cross-attn context
        ] + [wspec(w.shape) for w in main_w],
        out_specs=pl.BlockSpec((None, q_tile, C), lambda n, t: (n, t, 0)),
        out_shape=jax.ShapeDtypeStruct((N, HW, C), _F32),
        compiler_params=pltpu.CompilerParams(
            dimension_semantics=("parallel", "parallel"), vmem_limit_bytes=vmem_limit),
        cost_estimate=pl.CostEstimate(flops=main_flops, transcendentals=main_trans,
                                      bytes_accessed=main_bytes),
    )(x_tok, h0, k1, v1, context, *main_w)

    # (N, HW, C) -> NCHW
    return jnp.transpose(out_tok, (0, 2, 1)).reshape(N, C, H, W)


def unet_attention_block(x_nchw, context, params, *, n_heads, q_tile=None, kv_chunk=None):
    HW = x_nchw.shape[2] * x_nchw.shape[3]
    if q_tile is None:
        q_tile = next((t for t in (256, 128, 64, 32, 16, 8) if HW % t == 0), HW)
    if kv_chunk is None:
        kv_chunk = next((t for t in (512, 256, 128, 64, 32, 16, 8) if HW % t == 0), HW)
    kw = dict(n_heads=n_heads, q_tile=q_tile, kv_chunk=kv_chunk)
    try:
        return _forward(x_nchw, context, params, single_buffer_weights=True, **kw)
    except Exception:
        # pl.Buffered(1) (single-buffered constant weights) not supported on this
        # jax/libtpu combination -- fall back to default double-buffered weight specs.
        return _forward(x_nchw, context, params, single_buffer_weights=False, **kw)


# --------------------------------------------------------------------------------------
# Deterministic synthetic parameters (shapes follow the PyTorch module's __init__).
# Linear / 1x1-conv weights are stored pre-transposed as (in, out); matmul weights in
# bf16, biases / norm affine params / statistics helpers in f32.
# --------------------------------------------------------------------------------------
def init_params(key, n_heads, n_embed, d_context):
    C = n_heads * n_embed
    G = 32
    assert C % G == 0, "GroupNorm(32, C) requires channels divisible by 32"

    keys = iter(jax.random.split(key, 32))

    def nrm(shape, dtype, scale=0.05):
        return (scale * jax.random.normal(next(keys), shape, _F32)).astype(dtype)

    # Channel -> group one-hot membership (independent of spatial resolution).
    gid = jnp.arange(C) // (C // G)
    onehot = (gid[:, None] == jnp.arange(G)[None, :]).astype(_F32)      # (C, G)

    # attention_1 in_proj is a single (C, 3C) no-bias linear; split into q/k/v so that
    # K and V can be precomputed once per batch element in the prep kernel.
    in_proj = nrm((C, 3 * C), _BF16)

    return {
        "onehot": onehot,
        "gn_w": nrm((1, C), _F32) + 1.0, "gn_b": nrm((1, C), _F32),
        "ci_w": nrm((C, C), _BF16), "ci_b": nrm((1, C), _F32),
        "ln1_w": nrm((1, C), _F32) + 1.0, "ln1_b": nrm((1, C), _F32),
        "a1_qw": in_proj[:, :C], "a1_kw": in_proj[:, C:2 * C], "a1_vw": in_proj[:, 2 * C:],
        "a1_ow": nrm((C, C), _BF16), "a1_ob": nrm((1, C), _F32),
        "ln2_w": nrm((1, C), _F32) + 1.0, "ln2_b": nrm((1, C), _F32),
        "a2_qw": nrm((C, C), _BF16),
        "a2_kw": nrm((d_context, C), _BF16), "a2_vw": nrm((d_context, C), _BF16),
        "a2_ow": nrm((C, C), _BF16), "a2_ob": nrm((1, C), _F32),
        "ln3_w": nrm((1, C), _F32) + 1.0, "ln3_b": nrm((1, C), _F32),
        "g1_w": nrm((C, 8 * C), _BF16), "g1_b": nrm((1, 8 * C), _F32),
        "g2_w": nrm((4 * C, C), _BF16), "g2_b": nrm((1, C), _F32),
        "co_w": nrm((C, C), _BF16), "co_b": nrm((1, C), _F32),
    }


if __name__ == "__main__":
    # Small shapes consistent with the module: channels = n_heads * n_embed must be a
    # multiple of 32 (GroupNorm); C and d_context chosen lane-dense (multiples of 128).
    N = 2
    n_heads, n_embed = 4, 32            # channels C = 128
    H = W = 8                           # HW = 64 spatial tokens
    S_ctx, d_context = 8, 128

    key = jax.random.PRNGKey(0)
    kx, kc, kp = jax.random.split(key, 3)
    C = n_heads * n_embed
    x = jax.random.normal(kx, (N, C, H, W), _F32)
    context = jax.random.normal(kc, (N, S_ctx, d_context), _F32)
    params = init_params(kp, n_heads, n_embed, d_context)

    # q_tile=32 / kv_chunk=32 exercise both the HW tiling and the online-softmax loop.
    out = unet_attention_block(x, context, params, n_heads=n_heads,
                               q_tile=32, kv_chunk=32)
    out = jax.block_until_ready(out)
    assert out.shape == (N, C, H, W)
    assert bool(jnp.all(jnp.isfinite(out)))
    print("KERNEL_OK")
</pallas_src>

<mosaic_0001>
module attributes {stable_mosaic.version = 11 : i64} {
  func.func @_prep_kernel(%arg0: i32, %arg1: memref<1x64x128xf32, #tpu.memory_space<vmem>>, %arg2: memref<128x32xf32, #tpu.memory_space<vmem>>, %arg3: memref<1x128xf32, #tpu.memory_space<vmem>>, %arg4: memref<1x128xf32, #tpu.memory_space<vmem>>, %arg5: memref<128x128xbf16, #tpu.memory_space<vmem>>, %arg6: memref<1x128xf32, #tpu.memory_space<vmem>>, %arg7: memref<1x128xf32, #tpu.memory_space<vmem>>, %arg8: memref<1x128xf32, #tpu.memory_space<vmem>>, %arg9: memref<128x128xbf16, #tpu.memory_space<vmem>>, %arg10: memref<128x128xbf16, #tpu.memory_space<vmem>>, %arg11: memref<1x64x128xf32, #tpu.memory_space<vmem>>, %arg12: memref<1x64x128xbf16, #tpu.memory_space<vmem>>, %arg13: memref<1x64x128xbf16, #tpu.memory_space<vmem>>) attributes {dimension_semantics = [#tpu.dimension_semantics<parallel>], iteration_bounds = array<i64: 2>, scalar_prefetch = 0 : i64, scratch_operands = 0 : i64, tpu.core_type = #tpu.core_type<tc>, window_params = [{transform_indices = @transform_0, window_bounds = array<i64: 1, 64, 128>}, {pipeline_mode = #tpu.pipeline_mode<synchronous>, transform_indices = @transform_1, window_bounds = array<i64: 128, 32>}, {pipeline_mode = #tpu.pipeline_mode<synchronous>, transform_indices = @transform_2, window_bounds = array<i64: 1, 128>}, {pipeline_mode = #tpu.pipeline_mode<synchronous>, transform_indices = @transform_3, window_bounds = array<i64: 1, 128>}, {pipeline_mode = #tpu.pipeline_mode<synchronous>, transform_indices = @transform_4, window_bounds = array<i64: 128, 128>}, {pipeline_mode = #tpu.pipeline_mode<synchronous>, transform_indices = @transform_5, window_bounds = array<i64: 1, 128>}, {pipeline_mode = #tpu.pipeline_mode<synchronous>, transform_indices = @transform_6, window_bounds = array<i64: 1, 128>}, {pipeline_mode = #tpu.pipeline_mode<synchronous>, transform_indices = @transform_7, window_bounds = array<i64: 1, 128>}, {pipeline_mode = #tpu.pipeline_mode<synchronous>, transform_indices = @transform_8, window_bounds = array<i64: 128, 128>}, {pipeline_mode = #tpu.pipeline_mode<synchronous>, transform_indices = @transform_9, window_bounds = array<i64: 128, 128>}, {transform_indices = @transform_10, window_bounds = array<i64: 1, 64, 128>}, {transform_indices = @transform_11, window_bounds = array<i64: 1, 64, 128>}, {transform_indices = @transform_12, window_bounds = array<i64: 1, 64, 128>}]} {
    %c0 = arith.constant 0 : index
    %c0_0 = arith.constant 0 : index
    %c0_1 = arith.constant 0 : index
    %0 = vector.load %arg1[%c0, %c0_0, %c0_1] : memref<1x64x128xf32, #tpu.memory_space<vmem>>, vector<1x64x128xf32>
    %1 = vector.shape_cast %0 : vector<1x64x128xf32> to vector<64x128xf32>
    %c0_2 = arith.constant 0 : index
    %c0_3 = arith.constant 0 : index
    %2 = vector.load %arg2[%c0_2, %c0_3] : memref<128x32xf32, #tpu.memory_space<vmem>>, vector<128x32xf32>
    %cst = arith.constant dense<0.000000e+00> : vector<128xf32>
    %3 = vector.multi_reduction <add>, %1, %cst [0] : vector<64x128xf32> to vector<128xf32>
    %4 = vector.shape_cast %3 : vector<128xf32> to vector<1x128xf32>
    %cst_4 = arith.constant dense<0.000000e+00> : vector<1x32xf32>
    %5 = tpu.matmul %4, %2, %cst_4 {dimension_numbers = #tpu.dot_dimension_numbers<[1], [0], [0], [1], [0, 0, 1, 1], [], []>} : vector<1x128xf32>, vector<128x32xf32>, vector<1x32xf32> -> vector<1x32xf32>
    %cst_5 = arith.constant 3.906250e-03 : f32
    %6 = vector.broadcast %cst_5 : f32 to vector<1x32xf32>
    %7 = arith.mulf %5, %6 : vector<1x32xf32>
    %cst_6 = arith.constant dense<0.000000e+00> : vector<1x128xf32>
    %8 = tpu.matmul %7, %2, %cst_6 {dimension_numbers = #tpu.dot_dimension_numbers<[1], [1], [0], [0], [0, 0, 1, 0], [], []>} : vector<1x32xf32>, vector<128x32xf32>, vector<1x128xf32> -> vector<1x128xf32>
    %9 = vector.broadcast %8 : vector<1x128xf32> to vector<64x128xf32>
    %10 = arith.subf %1, %9 : vector<64x128xf32>
    %11 = arith.mulf %10, %10 : vector<64x128xf32>
    %cst_7 = arith.constant dense<0.000000e+00> : vector<128xf32>
    %12 = vector.multi_reduction <add>, %11, %cst_7 [0] : vector<64x128xf32> to vector<128xf32>
    %13 = vector.shape_cast %12 : vector<128xf32> to vector<1x128xf32>
    %cst_8 = arith.constant dense<0.000000e+00> : vector<1x32xf32>
    %14 = tpu.matmul %13, %2, %cst_8 {dimension_numbers = #tpu.dot_dimension_numbers<[1], [0], [0], [1], [0, 0, 1, 1], [], []>} : vector<1x128xf32>, vector<128x32xf32>, vector<1x32xf32> -> vector<1x32xf32>
    %cst_9 = arith.constant 3.906250e-03 : f32
    %15 = vector.broadcast %cst_9 : f32 to vector<1x32xf32>
    %16 = arith.mulf %14, %15 : vector<1x32xf32>
    %cst_10 = arith.constant dense<0.000000e+00> : vector<1x128xf32>
    %17 = tpu.matmul %16, %2, %cst_10 {dimension_numbers = #tpu.dot_dimension_numbers<[1], [1], [0], [0], [0, 0, 1, 0], [], []>} : vector<1x32xf32>, vector<128x32xf32>, vector<1x128xf32> -> vector<1x128xf32>
    %cst_11 = arith.constant 9.99999997E-7 : f32
    %18 = vector.broadcast %cst_11 : f32 to vector<1x128xf32>
    %19 = arith.addf %17, %18 : vector<1x128xf32>
    %20 = math.rsqrt %19 : vector<1x128xf32>
    %21 = vector.broadcast %20 : vector<1x128xf32> to vector<64x128xf32>
    %22 = arith.mulf %10, %21 : vector<64x128xf32>
    %c0_12 = arith.constant 0 : index
    %c0_13 = arith.constant 0 : index
    %23 = vector.load %arg3[%c0_12, %c0_13] : memref<1x128xf32, #tpu.memory_space<vmem>>, vector<1x128xf32>
    %24 = vector.broadcast %23 : vector<1x128xf32> to vector<64x128xf32>
    %25 = arith.mulf %22, %24 : vector<64x128xf32>
    %c0_14 = arith.constant 0 : index
    %c0_15 = arith.constant 0 : index
    %26 = vector.load %arg4[%c0_14, %c0_15] : memref<1x128xf32, #tpu.memory_space<vmem>>, vector<1x128xf32>
    %27 = vector.broadcast %26 : vector<1x128xf32> to vector<64x128xf32>
    %28 = arith.addf %25, %27 : vector<64x128xf32>
    %29 = arith.truncf %28 : vector<64x128xf32> to vector<64x128xbf16>
    %c0_16 = arith.constant 0 : index
    %c0_17 = arith.constant 0 : index
    %30 = vector.load %arg5[%c0_16, %c0_17] : memref<128x128xbf16, #tpu.memory_space<vmem>>, vector<128x128xbf16>
    %cst_18 = arith.constant dense<0.000000e+00> : vector<64x128xf32>
    %31 = tpu.matmul %29, %30, %cst_18 {dimension_numbers = #tpu.dot_dimension_numbers<[1], [0], [0], [1], [0, 0, 1, 1], [], []>} : vector<64x128xbf16>, vector<128x128xbf16>, vector<64x128xf32> -> vector<64x128xf32>
    %c0_19 = arith.constant 0 : index
    %c0_20 = arith.constant 0 : index
    %32 = vector.load %arg6[%c0_19, %c0_20] : memref<1x128xf32, #tpu.memory_space<vmem>>, vector<1x128xf32>
    %33 = vector.broadcast %32 : vector<1x128xf32> to vector<64x128xf32>
    %34 = arith.addf %31, %33 : vector<64x128xf32>
    %c0_21 = arith.constant 0 : index
    %c0_22 = arith.constant 0 : index
    %c0_23 = arith.constant 0 : index
    %35 = vector.load %arg11[%c0_21, %c0_22, %c0_23] : memref<1x64x128xf32, #tpu.memory_space<vmem>>, vector<1x64x128xf32>
    %36 = vector.shape_cast %35 : vector<1x64x128xf32> to vector<64x128xf32>
    %37 = vector.shape_cast %34 : vector<64x128xf32> to vector<1x64x128xf32>
    tpu.vector_store %arg11[%c0_21, %c0_22, %c0_23], %37 {strides = array<i32>} : memref<1x64x128xf32, #tpu.memory_space<vmem>>, vector<1x64x128xf32>,
    %c0_24 = arith.constant 0 : index
    %c0_25 = arith.constant 0 : index
    %38 = vector.load %arg7[%c0_24, %c0_25] : memref<1x128xf32, #tpu.memory_space<vmem>>, vector<1x128xf32>
    %c0_26 = arith.constant 0 : index
    %c0_27 = arith.constant 0 : index
    %39 = vector.load %arg8[%c0_26, %c0_27] : memref<1x128xf32, #tpu.memory_space<vmem>>, vector<1x128xf32>
    %cst_28 = arith.constant dense<0.000000e+00> : vector<64xf32>
    %40 = vector.multi_reduction <add>, %34, %cst_28 [1] : vector<64x128xf32> to vector<64xf32>
    %41 = vector.shape_cast %40 : vector<64xf32> to vector<64x1xf32>
    %cst_29 = arith.constant 1.280000e+02 : f32
    %42 = vector.broadcast %cst_29 : f32 to vector<64x1xf32>
    %43 = arith.divf %41, %42 : vector<64x1xf32>
    %44 = vector.broadcast %43 : vector<64x1xf32> to vector<64x128xf32>
    %45 = arith.subf %34, %44 : vector<64x128xf32>
    %46 = arith.mulf %45, %45 : vector<64x128xf32>
    %cst_30 = arith.constant dense<0.000000e+00> : vector<64xf32>
    %47 = vector.multi_reduction <add>, %46, %cst_30 [1] : vector<64x128xf32> to vector<64xf32>
    %48 = vector.shape_cast %47 : vector<64xf32> to vector<64x1xf32>
    %cst_31 = arith.constant 1.280000e+02 : f32
    %49 = vector.broadcast %cst_31 : f32 to vector<64x1xf32>
    %50 = arith.divf %48, %49 : vector<64x1xf32>
    %cst_32 = arith.constant 9.99999974E-6 : f32
    %51 = vector.broadcast %cst_32 : f32 to vector<64x1xf32>
    %52 = arith.addf %50, %51 : vector<64x1xf32>
    %53 = math.rsqrt %52 : vector<64x1xf32>
    %54 = vector.broadcast %53 : vector<64x1xf32> to vector<64x128xf32>
    %55 = arith.mulf %45, %54 : vector<64x128xf32>
    %56 = vector.broadcast %38 : vector<1x128xf32> to vector<64x128xf32>
    %57 = arith.mulf %55, %56 : vector<64x128xf32>
    %58 = vector.broadcast %39 : vector<1x128xf32> to vector<64x128xf32>
    %59 = arith.addf %57, %58 : vector<64x128xf32>
    %60 = arith.truncf %59 : vector<64x128xf32> to vector<64x128xbf16>
    %c0_33 = arith.constant 0 : index
    %c0_34 = arith.constant 0 : index
    %61 = vector.load %arg9[%c0_33, %c0_34] : memref<128x128xbf16, #tpu.memory_space<vmem>>, vector<128x128xbf16>
    %cst_35 = arith.constant dense<0.000000e+00> : vector<64x128xf32>
    %62 = tpu.matmul %60, %61, %cst_35 {dimension_numbers = #tpu.dot_dimension_numbers<[1], [0], [0], [1], [0, 0, 1, 1], [], []>} : vector<64x128xbf16>, vector<128x128xbf16>, vector<64x128xf32> -> vector<64x128xf32>
    %63 = arith.truncf %62 : vector<64x128xf32> to vector<64x128xbf16>
    %c0_36 = arith.constant 0 : index
    %c0_37 = arith.constant 0 : index
    %c0_38 = arith.constant 0 : index
    %64 = vector.load %arg12[%c0_36, %c0_37, %c0_38] : memref<1x64x128xbf16, #tpu.memory_space<vmem>>, vector<1x64x128xbf16>
    %65 = vector.shape_cast %64 : vector<1x64x128xbf16> to vector<64x128xbf16>
    %66 = vector.shape_cast %63 : vector<64x128xbf16> to vector<1x64x128xbf16>
    tpu.vector_store %arg12[%c0_36, %c0_37, %c0_38], %66 {strides = array<i32>} : memref<1x64x128xbf16, #tpu.memory_space<vmem>>, vector<1x64x128xbf16>,
    %c0_39 = arith.constant 0 : index
    %c0_40 = arith.constant 0 : index
    %67 = vector.load %arg10[%c0_39, %c0_40] : memref<128x128xbf16, #tpu.memory_space<vmem>>, vector<128x128xbf16>
    %cst_41 = arith.constant dense<0.000000e+00> : vector<64x128xf32>
    %68 = tpu.matmul %60, %67, %cst_41 {dimension_numbers = #tpu.dot_dimension_numbers<[1], [0], [0], [1], [0, 0, 1, 1], [], []>} : vector<64x128xbf16>, vector<128x128xbf16>, vector<64x128xf32> -> vector<64x128xf32>
    %69 = arith.truncf %68 : vector<64x128xf32> to vector<64x128xbf16>
    %c0_42 = arith.constant 0 : index
    %c0_43 = arith.constant 0 : index
    %c0_44 = arith.constant 0 : index
    %70 = vector.load %arg13[%c0_42, %c0_43, %c0_44] : memref<1x64x128xbf16, #tpu.memory_space<vmem>>, vector<1x64x128xbf16>
    %71 = vector.shape_cast %70 : vector<1x64x128xbf16> to vector<64x128xbf16>
    %72 = vector.shape_cast %69 : vector<64x128xbf16> to vector<1x64x128xbf16>
    tpu.vector_store %arg13[%c0_42, %c0_43, %c0_44], %72 {strides = array<i32>} : memref<1x64x128xbf16, #tpu.memory_space<vmem>>, vector<1x64x128xbf16>,
    return
  }
  func.func @transform_0(%arg0: i32) -> (i32, i32, i32) {
    %c0_i32 = arith.constant 0 : i32
    %c0_i32_0 = arith.constant 0 : i32
    %c0_i32_1 = arith.constant 0 : i32
    return %arg0, %c0_i32, %c0_i32_0 : i32, i32, i32
  }
  func.func @transform_1(%arg0: i32) -> (i32, i32) {
    %c0_i32 = arith.constant 0 : i32
    %c0_i32_0 = arith.constant 0 : i32
    %c0_i32_1 = arith.constant 0 : i32
    return %c0_i32, %c0_i32_0 : i32, i32
  }
  func.func @transform_2(%arg0: i32) -> (i32, i32) {
    %c0_i32 = arith.constant 0 : i32
    %c0_i32_0 = arith.constant 0 : i32
    %c0_i32_1 = arith.constant 0 : i32
    return %c0_i32, %c0_i32_0 : i32, i32
  }
  func.func @transform_3(%arg0: i32) -> (i32, i32) {
    %c0_i32 = arith.constant 0 : i32
    %c0_i32_0 = arith.constant 0 : i32
    %c0_i32_1 = arith.constant 0 : i32
    return %c0_i32, %c0_i32_0 : i32, i32
  }
  func.func @transform_4(%arg0: i32) -> (i32, i32) {
    %c0_i32 = arith.constant 0 : i32
    %c0_i32_0 = arith.constant 0 : i32
    %c0_i32_1 = arith.constant 0 : i32
    return %c0_i32, %c0_i32_0 : i32, i32
  }
  func.func @transform_5(%arg0: i32) -> (i32, i32) {
    %c0_i32 = arith.constant 0 : i32
    %c0_i32_0 = arith.constant 0 : i32
    %c0_i32_1 = arith.constant 0 : i32
    return %c0_i32, %c0_i32_0 : i32, i32
  }
  func.func @transform_6(%arg0: i32) -> (i32, i32) {
    %c0_i32 = arith.constant 0 : i32
    %c0_i32_0 = arith.constant 0 : i32
    %c0_i32_1 = arith.constant 0 : i32
    return %c0_i32, %c0_i32_0 : i32, i32
  }
  func.func @transform_7(%arg0: i32) -> (i32, i32) {
    %c0_i32 = arith.constant 0 : i32
    %c0_i32_0 = arith.constant 0 : i32
    %c0_i32_1 = arith.constant 0 : i32
    return %c0_i32, %c0_i32_0 : i32, i32
  }
  func.func @transform_8(%arg0: i32) -> (i32, i32) {
    %c0_i32 = arith.constant 0 : i32
    %c0_i32_0 = arith.constant 0 : i32
    %c0_i32_1 = arith.constant 0 : i32
    return %c0_i32, %c0_i32_0 : i32, i32
  }
  func.func @transform_9(%arg0: i32) -> (i32, i32) {
    %c0_i32 = arith.constant 0 : i32
    %c0_i32_0 = arith.constant 0 : i32
    %c0_i32_1 = arith.constant 0 : i32
    return %c0_i32, %c0_i32_0 : i32, i32
  }
  func.func @transform_10(%arg0: i32) -> (i32, i32, i32) {
    %c0_i32 = arith.constant 0 : i32
    %c0_i32_0 = arith.constant 0 : i32
    %c0_i32_1 = arith.constant 0 : i32
    return %arg0, %c0_i32, %c0_i32_0 : i32, i32, i32
  }
  func.func @transform_11(%arg0: i32) -> (i32, i32, i32) {
    %c0_i32 = arith.constant 0 : i32
    %c0_i32_0 = arith.constant 0 : i32
    %c0_i32_1 = arith.constant 0 : i32
    return %arg0, %c0_i32, %c0_i32_0 : i32, i32, i32
  }
  func.func @transform_12(%arg0: i32) -> (i32, i32, i32) {
    %c0_i32 = arith.constant 0 : i32
    %c0_i32_0 = arith.constant 0 : i32
    %c0_i32_1 = arith.constant 0 : i32
    return %arg0, %c0_i32, %c0_i32_0 : i32, i32, i32
  }
}

module attributes {stable_mosaic.version = 11 : i64} {
  func.func @_prep_kernel(%arg0: i32, %arg1: memref<1x64x128xf32, #tpu.memory_space<vmem>>, %arg2: memref<128x32xf32, #tpu.memory_space<vmem>>, %arg3: memref<1x128xf32, #tpu.memory_space<vmem>>, %arg4: memref<1x128xf32, #tpu.memory_space<vmem>>, %arg5: memref<128x128xbf16, #tpu.memory_space<vmem>>, %arg6: memref<1x128xf32, #tpu.memory_space<vmem>>, %arg7: memref<1x128xf32, #tpu.memory_space<vmem>>, %arg8: memref<1x128xf32, #tpu.memory_space<vmem>>, %arg9: memref<128x128xbf16, #tpu.memory_space<vmem>>, %arg10: memref<128x128xbf16, #tpu.memory_space<vmem>>, %arg11: memref<1x64x128xf32, #tpu.memory_space<vmem>>, %arg12: memref<1x64x128xbf16, #tpu.memory_space<vmem>>, %arg13: memref<1x64x128xbf16, #tpu.memory_space<vmem>>) attributes {dimension_semantics = [#tpu.dimension_semantics<parallel>], iteration_bounds = array<i64: 2>, scalar_prefetch = 0 : i64, scratch_operands = 0 : i64, tpu.core_type = #tpu.core_type<tc>, window_params = [{transform_indices = @transform_0, window_bounds = array<i64: 1, 64, 128>}, {pipeline_mode = #tpu.pipeline_mode<synchronous>, transform_indices = @transform_1, window_bounds = array<i64: 128, 32>}, {pipeline_mode = #tpu.pipeline_mode<synchronous>, transform_indices = @transform_2, window_bounds = array<i64: 1, 128>}, {pipeline_mode = #tpu.pipeline_mode<synchronous>, transform_indices = @transform_3, window_bounds = array<i64: 1, 128>}, {pipeline_mode = #tpu.pipeline_mode<synchronous>, transform_indices = @transform_4, window_bounds = array<i64: 128, 128>}, {pipeline_mode = #tpu.pipeline_mode<synchronous>, transform_indices = @transform_5, window_bounds = array<i64: 1, 128>}, {pipeline_mode = #tpu.pipeline_mode<synchronous>, transform_indices = @transform_6, window_bounds = array<i64: 1, 128>}, {pipeline_mode = #tpu.pipeline_mode<synchronous>, transform_indices = @transform_7, window_bounds = array<i64: 1, 128>}, {pipeline_mode = #tpu.pipeline_mode<synchronous>, transform_indices = @transform_8, window_bounds = array<i64: 128, 128>}, {pipeline_mode = #tpu.pipeline_mode<synchronous>, transform_indices = @transform_9, window_bounds = array<i64: 128, 128>}, {transform_indices = @transform_10, window_bounds = array<i64: 1, 64, 128>}, {transform_indices = @transform_11, window_bounds = array<i64: 1, 64, 128>}, {transform_indices = @transform_12, window_bounds = array<i64: 1, 64, 128>}]} {
    %c0 = arith.constant 0 : index
    %c0_0 = arith.constant 0 : index
    %c0_1 = arith.constant 0 : index
    %0 = vector.load %arg1[%c0, %c0_0, %c0_1] : memref<1x64x128xf32, #tpu.memory_space<vmem>>, vector<1x64x128xf32>
    %1 = vector.shape_cast %0 : vector<1x64x128xf32> to vector<64x128xf32>
    %c0_2 = arith.constant 0 : index
    %c0_3 = arith.constant 0 : index
    %2 = vector.load %arg2[%c0_2, %c0_3] : memref<128x32xf32, #tpu.memory_space<vmem>>, vector<128x32xf32>
    %cst = arith.constant dense<0.000000e+00> : vector<128xf32>
    %3 = vector.multi_reduction <add>, %1, %cst [0] : vector<64x128xf32> to vector<128xf32>
    %4 = vector.shape_cast %3 : vector<128xf32> to vector<1x128xf32>
    %cst_4 = arith.constant dense<0.000000e+00> : vector<1x32xf32>
    %5 = tpu.matmul %4, %2, %cst_4 {dimension_numbers = #tpu.dot_dimension_numbers<[1], [0], [0], [1], [0, 0, 1, 1], [], []>} : vector<1x128xf32>, vector<128x32xf32>, vector<1x32xf32> -> vector<1x32xf32>
    %cst_5 = arith.constant 3.906250e-03 : f32
    %6 = vector.broadcast %cst_5 : f32 to vector<1x32xf32>
    %7 = arith.mulf %5, %6 : vector<1x32xf32>
    %cst_6 = arith.constant dense<0.000000e+00> : vector<1x128xf32>
    %8 = tpu.matmul %7, %2, %cst_6 {dimension_numbers = #tpu.dot_dimension_numbers<[1], [1], [0], [0], [0, 0, 1, 0], [], []>} : vector<1x32xf32>, vector<128x32xf32>, vector<1x128xf32> -> vector<1x128xf32>
    %9 = vector.broadcast %8 : vector<1x128xf32> to vector<64x128xf32>
    %10 = arith.subf %1, %9 : vector<64x128xf32>
    %11 = arith.mulf %10, %10 : vector<64x128xf32>
    %cst_7 = arith.constant dense<0.000000e+00> : vector<128xf32>
    %12 = vector.multi_reduction <add>, %11, %cst_7 [0] : vector<64x128xf32> to vector<128xf32>
    %13 = vector.shape_cast %12 : vector<128xf32> to vector<1x128xf32>
    %cst_8 = arith.constant dense<0.000000e+00> : vector<1x32xf32>
    %14 = tpu.matmul %13, %2, %cst_8 {dimension_numbers = #tpu.dot_dimension_numbers<[1], [0], [0], [1], [0, 0, 1, 1], [], []>} : vector<1x128xf32>, vector<128x32xf32>, vector<1x32xf32> -> vector<1x32xf32>
    %cst_9 = arith.constant 3.906250e-03 : f32
    %15 = vector.broadcast %cst_9 : f32 to vector<1x32xf32>
    %16 = arith.mulf %14, %15 : vector<1x32xf32>
    %cst_10 = arith.constant dense<0.000000e+00> : vector<1x128xf32>
    %17 = tpu.matmul %16, %2, %cst_10 {dimension_numbers = #tpu.dot_dimension_numbers<[1], [1], [0], [0], [0, 0, 1, 0], [], []>} : vector<1x32xf32>, vector<128x32xf32>, vector<1x128xf32> -> vector<1x128xf32>
    %cst_11 = arith.constant 9.99999997E-7 : f32
    %18 = vector.broadcast %cst_11 : f32 to vector<1x128xf32>
    %19 = arith.addf %17, %18 : vector<1x128xf32>
    %20 = math.rsqrt %19 : vector<1x128xf32>
    %21 = vector.broadcast %20 : vector<1x128xf32> to vector<64x128xf32>
    %22 = arith.mulf %10, %21 : vector<64x128xf32>
    %c0_12 = arith.constant 0 : index
    %c0_13 = arith.constant 0 : index
    %23 = vector.load %arg3[%c0_12, %c0_13] : memref<1x128xf32, #tpu.memory_space<vmem>>, vector<1x128xf32>
    %24 = vector.broadcast %23 : vector<1x128xf32> to vector<64x128xf32>
    %25 = arith.mulf %22, %24 : vector<64x128xf32>
    %c0_14 = arith.constant 0 : index
    %c0_15 = arith.constant 0 : index
    %26 = vector.load %arg4[%c0_14, %c0_15] : memref<1x128xf32, #tpu.memory_space<vmem>>, vector<1x128xf32>
    %27 = vector.broadcast %26 : vector<1x128xf32> to vector<64x128xf32>
    %28 = arith.addf %25, %27 : vector<64x128xf32>
    %29 = arith.truncf %28 : vector<64x128xf32> to vector<64x128xbf16>
    %c0_16 = arith.constant 0 : index
    %c0_17 = arith.constant 0 : index
    %30 = vector.load %arg5[%c0_16, %c0_17] : memref<128x128xbf16, #tpu.memory_space<vmem>>, vector<128x128xbf16>
    %cst_18 = arith.constant dense<0.000000e+00> : vector<64x128xf32>
    %31 = tpu.matmul %29, %30, %cst_18 {dimension_numbers = #tpu.dot_dimension_numbers<[1], [0], [0], [1], [0, 0, 1, 1], [], []>} : vector<64x128xbf16>, vector<128x128xbf16>, vector<64x128xf32> -> vector<64x128xf32>
    %c0_19 = arith.constant 0 : index
    %c0_20 = arith.constant 0 : index
    %32 = vector.load %arg6[%c0_19, %c0_20] : memref<1x128xf32, #tpu.memory_space<vmem>>, vector<1x128xf32>
    %33 = vector.broadcast %32 : vector<1x128xf32> to vector<64x128xf32>
    %34 = arith.addf %31, %33 : vector<64x128xf32>
    %c0_21 = arith.constant 0 : index
    %c0_22 = arith.constant 0 : index
    %c0_23 = arith.constant 0 : index
    %35 = vector.load %arg11[%c0_21, %c0_22, %c0_23] : memref<1x64x128xf32, #tpu.memory_space<vmem>>, vector<1x64x128xf32>
    %36 = vector.shape_cast %35 : vector<1x64x128xf32> to vector<64x128xf32>
    %37 = vector.shape_cast %34 : vector<64x128xf32> to vector<1x64x128xf32>
    tpu.vector_store %arg11[%c0_21, %c0_22, %c0_23], %37 {strides = array<i32>} : memref<1x64x128xf32, #tpu.memory_space<vmem>>, vector<1x64x128xf32>,
    %c0_24 = arith.constant 0 : index
    %c0_25 = arith.constant 0 : index
    %38 = vector.load %arg7[%c0_24, %c0_25] : memref<1x128xf32, #tpu.memory_space<vmem>>, vector<1x128xf32>
    %c0_26 = arith.constant 0 : index
    %c0_27 = arith.constant 0 : index
    %39 = vector.load %arg8[%c0_26, %c0_27] : memref<1x128xf32, #tpu.memory_space<vmem>>, vector<1x128xf32>
    %cst_28 = arith.constant dense<0.000000e+00> : vector<64xf32>
    %40 = vector.multi_reduction <add>, %34, %cst_28 [1] : vector<64x128xf32> to vector<64xf32>
    %41 = vector.shape_cast %40 : vector<64xf32> to vector<64x1xf32>
    %cst_29 = arith.constant 1.280000e+02 : f32
    %42 = vector.broadcast %cst_29 : f32 to vector<64x1xf32>
    %43 = arith.divf %41, %42 : vector<64x1xf32>
    %44 = vector.broadcast %43 : vector<64x1xf32> to vector<64x128xf32>
    %45 = arith.subf %34, %44 : vector<64x128xf32>
    %46 = arith.mulf %45, %45 : vector<64x128xf32>
    %cst_30 = arith.constant dense<0.000000e+00> : vector<64xf32>
    %47 = vector.multi_reduction <add>, %46, %cst_30 [1] : vector<64x128xf32> to vector<64xf32>
    %48 = vector.shape_cast %47 : vector<64xf32> to vector<64x1xf32>
    %cst_31 = arith.constant 1.280000e+02 : f32
    %49 = vector.broadcast %cst_31 : f32 to vector<64x1xf32>
    %50 = arith.divf %48, %49 : vector<64x1xf32>
    %cst_32 = arith.constant 9.99999974E-6 : f32
    %51 = vector.broadcast %cst_32 : f32 to vector<64x1xf32>
    %52 = arith.addf %50, %51 : vector<64x1xf32>
    %53 = math.rsqrt %52 : vector<64x1xf32>
    %54 = vector.broadcast %53 : vector<64x1xf32> to vector<64x128xf32>
    %55 = arith.mulf %45, %54 : vector<64x128xf32>
    %56 = vector.broadcast %38 : vector<1x128xf32> to vector<64x128xf32>
    %57 = arith.mulf %55, %56 : vector<64x128xf32>
    %58 = vector.broadcast %39 : vector<1x128xf32> to vector<64x128xf32>
    %59 = arith.addf %57, %58 : vector<64x128xf32>
    %60 = arith.truncf %59 : vector<64x128xf32> to vector<64x128xbf16>
    %c0_33 = arith.constant 0 : index
    %c0_34 = arith.constant 0 : index
    %61 = vector.load %arg9[%c0_33, %c0_34] : memref<128x128xbf16, #tpu.memory_space<vmem>>, vector<128x128xbf16>
    %cst_35 = arith.constant dense<0.000000e+00> : vector<64x128xf32>
    %62 = tpu.matmul %60, %61, %cst_35 {dimension_numbers = #tpu.dot_dimension_numbers<[1], [0], [0], [1], [0, 0, 1, 1], [], []>} : vector<64x128xbf16>, vector<128x128xbf16>, vector<64x128xf32> -> vector<64x128xf32>
    %63 = arith.truncf %62 : vector<64x128xf32> to vector<64x128xbf16>
    %c0_36 = arith.constant 0 : index
    %c0_37 = arith.constant 0 : index
    %c0_38 = arith.constant 0 : index
    %64 = vector.load %arg12[%c0_36, %c0_37, %c0_38] : memref<1x64x128xbf16, #tpu.memory_space<vmem>>, vector<1x64x128xbf16>
    %65 = vector.shape_cast %64 : vector<1x64x128xbf16> to vector<64x128xbf16>
    %66 = vector.shape_cast %63 : vector<64x128xbf16> to vector<1x64x128xbf16>
    tpu.vector_store %arg12[%c0_36, %c0_37, %c0_38], %66 {strides = array<i32>} : memref<1x64x128xbf16, #tpu.memory_space<vmem>>, vector<1x64x128xbf16>,
    %c0_39 = arith.constant 0 : index
    %c0_40 = arith.constant 0 : index
    %67 = vector.load %arg10[%c0_39, %c0_40] : memref<128x128xbf16, #tpu.memory_space<vmem>>, vector<128x128xbf16>
    %cst_41 = arith.constant dense<0.000000e+00> : vector<64x128xf32>
    %68 = tpu.matmul %60, %67, %cst_41 {dimension_numbers = #tpu.dot_dimension_numbers<[1], [0], [0], [1], [0, 0, 1, 1], [], []>} : vector<64x128xbf16>, vector<128x128xbf16>, vector<64x128xf32> -> vector<64x128xf32>
    %69 = arith.truncf %68 : vector<64x128xf32> to vector<64x128xbf16>
    %c0_42 = arith.constant 0 : index
    %c0_43 = arith.constant 0 : index
    %c0_44 = arith.constant 0 : index
    %70 = vector.load %arg13[%c0_42, %c0_43, %c0_44] : memref<1x64x128xbf16, #tpu.memory_space<vmem>>, vector<1x64x128xbf16>
    %71 = vector.shape_cast %70 : vector<1x64x128xbf16> to vector<64x128xbf16>
    %72 = vector.shape_cast %69 : vector<64x128xbf16> to vector<1x64x128xbf16>
    tpu.vector_store %arg13[%c0_42, %c0_43, %c0_44], %72 {strides = array<i32>} : memref<1x64x128xbf16, #tpu.memory_space<vmem>>, vector<1x64x128xbf16>,
    return
  }
  func.func @transform_0(%arg0: i32) -> (i32, i32, i32) {
    %c0_i32 = arith.constant 0 : i32
    %c0_i32_0 = arith.constant 0 : i32
    %c0_i32_1 = arith.constant 0 : i32
    return %arg0, %c0_i32, %c0_i32_0 : i32, i32, i32
  }
  func.func @transform_1(%arg0: i32) -> (i32, i32) {
    %c0_i32 = arith.constant 0 : i32
    %c0_i32_0 = arith.constant 0 : i32
    %c0_i32_1 = arith.constant 0 : i32
    return %c0_i32, %c0_i32_0 : i32, i32
  }
  func.func @transform_2(%arg0: i32) -> (i32, i32) {
    %c0_i32 = arith.constant 0 : i32
    %c0_i32_0 = arith.constant 0 : i32
    %c0_i32_1 = arith.constant 0 : i32
    return %c0_i32, %c0_i32_0 : i32, i32
  }
  func.func @transform_3(%arg0: i32) -> (i32, i32) {
    %c0_i32 = arith.constant 0 : i32
    %c0_i32_0 = arith.constant 0 : i32
    %c0_i32_1 = arith.constant 0 : i32
    return %c0_i32, %c0_i32_0 : i32, i32
  }
  func.func @transform_4(%arg0: i32) -> (i32, i32) {
    %c0_i32 = arith.constant 0 : i32
    %c0_i32_0 = arith.constant 0 : i32
    %c0_i32_1 = arith.constant 0 : i32
    return %c0_i32, %c0_i32_0 : i32, i32
  }
  func.func @transform_5(%arg0: i32) -> (i32, i32) {
    %c0_i32 = arith.constant 0 : i32
    %c0_i32_0 = arith.constant 0 : i32
    %c0_i32_1 = arith.constant 0 : i32
    return %c0_i32, %c0_i32_0 : i32, i32
  }
  func.func @transform_6(%arg0: i32) -> (i32, i32) {
    %c0_i32 = arith.constant 0 : i32
    %c0_i32_0 = arith.constant 0 : i32
    %c0_i32_1 = arith.constant 0 : i32
    return %c0_i32, %c0_i32_0 : i32, i32
  }
  func.func @transform_7(%arg0: i32) -> (i32, i32) {
    %c0_i32 = arith.constant 0 : i32
    %c0_i32_0 = arith.constant 0 : i32
    %c0_i32_1 = arith.constant 0 : i32
    return %c0_i32, %c0_i32_0 : i32, i32
  }
  func.func @transform_8(%arg0: i32) -> (i32, i32) {
    %c0_i32 = arith.constant 0 : i32
    %c0_i32_0 = arith.constant 0 : i32
    %c0_i32_1 = arith.constant 0 : i32
    return %c0_i32, %c0_i32_0 : i32, i32
  }
  func.func @transform_9(%arg0: i32) -> (i32, i32) {
    %c0_i32 = arith.constant 0 : i32
    %c0_i32_0 = arith.constant 0 : i32
    %c0_i32_1 = arith.constant 0 : i32
    return %c0_i32, %c0_i32_0 : i32, i32
  }
  func.func @transform_10(%arg0: i32) -> (i32, i32, i32) {
    %c0_i32 = arith.constant 0 : i32
    %c0_i32_0 = arith.constant 0 : i32
    %c0_i32_1 = arith.constant 0 : i32
    return %arg0, %c0_i32, %c0_i32_0 : i32, i32, i32
  }
  func.func @transform_11(%arg0: i32) -> (i32, i32, i32) {
    %c0_i32 = arith.constant 0 : i32
    %c0_i32_0 = arith.constant 0 : i32
    %c0_i32_1 = arith.constant 0 : i32
    return %arg0, %c0_i32, %c0_i32_0 : i32, i32, i32
  }
  func.func @transform_12(%arg0: i32) -> (i32, i32, i32) {
    %c0_i32 = arith.constant 0 : i32
    %c0_i32_0 = arith.constant 0 : i32
    %c0_i32_1 = arith.constant 0 : i32
    return %arg0, %c0_i32, %c0_i32_0 : i32, i32, i32
  }
}

</mosaic_0001>

<llo_original>
// kernel: tpu_custom_call.1
$region0: #{tpu_custom_call.1}
  #allocation0 [shape = 'u32[]', space=smem, size = 0x4, offset = 0x4, fixed_abs, tag = 'smem constant byte address 0x4 - core index']
  #allocation1 [shape = 'u32[72,128]{1,0:T(1,128)}', space=vmem, size = 0x9000, scoped, tag = 'internal scratch']
  %s0 = inlined_call_operand.vmem [shape: f32[2,64,128], index: 0, kind: input, shape index: {}]
  %s1 = inlined_call_operand.vmem [shape: f32[128,32], index: 1, kind: input, shape index: {}]
  %s2 = inlined_call_operand.vmem [shape: f32[1,128], index: 2, kind: input, shape index: {}]
  %s3 = inlined_call_operand.vmem [shape: f32[1,128], index: 3, kind: input, shape index: {}]
  %s4 = inlined_call_operand.hbm [shape: bf16[128,128], index: 4, kind: input, shape index: {}]
  %s5 = inlined_call_operand.vmem [shape: f32[1,128], index: 5, kind: input, shape index: {}]
  %s6 = inlined_call_operand.vmem [shape: f32[1,128], index: 6, kind: input, shape index: {}]
  %s7 = inlined_call_operand.vmem [shape: f32[1,128], index: 7, kind: input, shape index: {}]
  %s8 = inlined_call_operand.hbm [shape: bf16[128,128], index: 8, kind: input, shape index: {}]
  %s9 = inlined_call_operand.hbm [shape: bf16[128,128], index: 9, kind: input, shape index: {}]
  %s10 = inlined_call_operand.hbm [shape: f32[2,64,128], index: 10, kind: output, shape index: {0}]
  %s11 = inlined_call_operand.hbm [shape: bf16[2,64,128], index: 11, kind: output, shape index: {1}]
  %s12 = inlined_call_operand.hbm [shape: bf16[2,64,128], index: 12, kind: output, shape index: {2}]
  %13 = xla_tuple %s10, %s11, %s12
  %s14 = sld [smem:[#allocation0]]
  $region101: #{tpu_custom_call.1} parent=0
    _
  %s16 = ssub.s32 1, %s14
  %s17 = scalar_select 0, %s16, %s14
  $region1: #{tpu_custom_call.1} parent=0
    #allocation2 [shape = 'u8[32768]{0}', space=vmem, size = 0x8000, scoped, tag = 'input window, operand 4, single buffered']
    #allocation3 [shape = 's32[2]{0}', space=sflag, size = 0x8, scoped, tag = 'scoped memory for tpu_custom_call.1']
    #allocation4 [shape = 's32[2]{0}', space=sflag, size = 0x8, scoped, tag = 'scoped memory for tpu_custom_call.1']
    #allocation5 [shape = 'u8[32768]{0}', space=vmem, size = 0x8000, scoped, tag = 'input window, operand 8, single buffered']
    #allocation6 [shape = 's32[1]{0}', space=sflag, size = 0x4, scoped, tag = 'scoped memory for tpu_custom_call.1']
    #allocation7 [shape = 'u8[32768]{0}', space=vmem, size = 0x8000, scoped, tag = 'input window, operand 9, single buffered']
    #allocation8 [shape = 'u8[65536]{0}', space=vmem, size = 0x10000, scoped, tag = 'output window, operand 0']
    #allocation9 [shape = 'u8[32768]{0}', space=vmem, size = 0x8000, scoped, tag = 'output window, operand 1']
    #allocation10 [shape = 's32[2]{0}', space=sflag, size = 0x8, scoped, tag = 'scoped memory for tpu_custom_call.1']
    #allocation11 [shape = 'u8[32768]{0}', space=vmem, size = 0x8000, scoped, tag = 'output window, operand 2']
    %18 = vsyncpa [#allocation3], 0
    %19 = vsyncpa [#allocation6], 0
    %20 = vsyncpa [#allocation4], 0
    %s21 = scalar_lea.sflag [#allocation4], 1
    %22 = vsyncpa %s21, 0
    %23 = vsyncpa [#allocation10], 0
    %s24 = scalar_lea.sflag [#allocation10], 1
    %25 = vsyncpa %s24, 0
    loop: start=0, step=1, limit=4
    $region2: #{tpu_custom_call.1} parent=1 // loop_pre_header
      _
    $region3: #{tpu_custom_call.1} parent=1 // loop_header
      %s27 = sphi 0, %s31
      %p28 = scmp.ge.s32.totalorder %s27, 4
      %s37 = sphi 0, %s39
      %s40 = sphi 0, %s37
      %s41 = sphi 0, %s40
      %s57 = sphi 0, %s41
      %s61 = sphi 0, %s61
      %s63 = sphi 0, %s61
      %s64 = sphi 0, %s63
      %s78 = sphi 0, %s64
      %s82 = sphi 0, %s82
      %s84 = sphi 0, %s82
      %s85 = sphi 0, %s84
      %s99 = sphi 0, %s85
      %s103 = sphi 0, %s103
      %s105 = sphi 0, %s103
      %s106 = sphi 0, %s105
      %s120 = sphi 0, %s106
      %s124 = sphi 0, %s124
      %s126 = sphi 0, %s124
      %s127 = sphi 0, %s126
      %s141 = sphi 0, %s127
      %s145 = sphi 0, %s145
      %s147 = sphi 0, %s145
      %s148 = sphi 0, %s147
      %s162 = sphi 0, %s148
      %s166 = sphi 0, %s166
      %s168 = sphi 0, %s166
      %s169 = sphi 0, %s168
      %s183 = sphi 0, %s169
      %s187 = sphi 0, %s187
      %s189 = sphi 0, %s187
      %s190 = sphi 0, %s189
      %s204 = sphi 0, %s190
      %s208 = sphi 0, %s208
      %s210 = sphi 0, %s208
      %s211 = sphi 0, %s210
      %s225 = sphi 0, %s211
      %s229 = sphi 0, %s229
      %s231 = sphi 0, %s229
      %s232 = sphi 0, %s231
      %s246 = sphi 0, %s232
      %s252 = sphi 0, %s254
      %s255 = sphi 0, %s252
      %s256 = sphi 0, %s255
      %s272 = sphi 0, %s256
      %s278 = sphi 0, %s280
      %s281 = sphi 0, %s278
      %s282 = sphi 0, %s281
      %s298 = sphi 0, %s282
      %s304 = sphi 0, %s306
      %s307 = sphi 0, %s304
      %s308 = sphi 0, %s307
      %s324 = sphi 0, %s308
    $region4: #{tpu_custom_call.1} parent=1 // loop_header_branch
      %30 = sbr.rel (%p28) target = $region8
    $region5: #{tpu_custom_call.1} parent=1 // loop_body
      %s32 = ssub.s32 %s27, 1
      %s33 = ssub.s32 %s27, 2
      %s34 = sadd.s32 %s27, 1
      %s35 = ssub.s32 %s27, %s34
      %p36 = scmp.eq.s32.totalorder %s35, 0
      %s38 = sadd.s32 %s37, 1
      %s39 = scalar_select %p36, %s37, %s38
      %p42 = pneg %p36
      %p43 = scmp.eq.s32.totalorder %s27, 1
      %p44 = por %p42, %p43
      %p45 = scmp.ne.s32.totalorder %s37, %s40
      %p46 = scmp.eq.s32.totalorder %s27, 0
      %p47 = por %p45, %p46
      %p48 = scmp.ne.s32.totalorder %s37, %s40
      %p49 = scmp.eq.s32.totalorder %s32, 1
      %p50 = por %p48, %p49
      %p51 = scmp.ne.s32.totalorder %s40, %s41
      %p52 = scmp.eq.s32.totalorder %s32, 0
      %p53 = por %p51, %p52
      %p54 = scmp.ne.s32.totalorder %s40, %s41
      %p55 = scmp.eq.s32.totalorder %s33, 1
      %p56 = por %p54, %p55
      %p58 = scmp.ne.s32.totalorder %s41, %s57
      %p59 = scmp.eq.s32.totalorder %s33, 0
      %p60 = por %p58, %p59
      %s62 = sadd.s32 %s61, 1
      %p65 = scmp.eq.s32.totalorder %s27, 1
      %p66 = scmp.ne.s32.totalorder %s61, %s63
      %p67 = scmp.eq.s32.totalorder %s27, 0
      %p68 = por %p66, %p67
      %p69 = scmp.ne.s32.totalorder %s61, %s63
      %p70 = scmp.eq.s32.totalorder %s32, 1
      %p71 = por %p69, %p70
      %p72 = scmp.ne.s32.totalorder %s63, %s64
      %p73 = scmp.eq.s32.totalorder %s32, 0
      %p74 = por %p72, %p73
      %p75 = scmp.ne.s32.totalorder %s63, %s64
      %p76 = scmp.eq.s32.totalorder %s33, 1
      %p77 = por %p75, %p76
      %p79 = scmp.ne.s32.totalorder %s64, %s78
      %p80 = scmp.eq.s32.totalorder %s33, 0
      %p81 = por %p79, %p80
      %s83 = sadd.s32 %s82, 1
      %p86 = scmp.eq.s32.totalorder %s27, 1
      %p87 = scmp.ne.s32.totalorder %s82, %s84
      %p88 = scmp.eq.s32.totalorder %s27, 0
      %p89 = por %p87, %p88
      %p90 = scmp.ne.s32.totalorder %s82, %s84
      %p91 = scmp.eq.s32.totalorder %s32, 1
      %p92 = por %p90, %p91
      %p93 = scmp.ne.s32.totalorder %s84, %s85
      %p94 = scmp.eq.s32.totalorder %s32, 0
      %p95 = por %p93, %p94
      %p96 = scmp.ne.s32.totalorder %s84, %s85
      %p97 = scmp.eq.s32.totalorder %s33, 1
      %p98 = por %p96, %p97
      %p100 = scmp.ne.s32.totalorder %s85, %s99
      %p101 = scmp.eq.s32.totalorder %s33, 0
      %p102 = por %p100, %p101
      %s104 = sadd.s32 %s103, 1
      %p107 = scmp.eq.s32.totalorder %s27, 1
      %p108 = scmp.ne.s32.totalorder %s103, %s105
      %p109 = scmp.eq.s32.totalorder %s27, 0
      %p110 = por %p108, %p109
      %p111 = scmp.ne.s32.totalorder %s103, %s105
      %p112 = scmp.eq.s32.totalorder %s32, 1
      %p113 = por %p111, %p112
      %p114 = scmp.ne.s32.totalorder %s105, %s106
      %p115 = scmp.eq.s32.totalorder %s32, 0
      %p116 = por %p114, %p115
      %p117 = scmp.ne.s32.totalorder %s105, %s106
      %p118 = scmp.eq.s32.totalorder %s33, 1
      %p119 = por %p117, %p118
      %p121 = scmp.ne.s32.totalorder %s106, %s120
      %p122 = scmp.eq.s32.totalorder %s33, 0
      %p123 = por %p121, %p122
      %s125 = sadd.s32 %s124, 1
      %p128 = scmp.eq.s32.totalorder %s27, 1
      %p129 = scmp.ne.s32.totalorder %s124, %s126
      %p130 = scmp.eq.s32.totalorder %s27, 0
      %p131 = por %p129, %p130
      %p132 = scmp.ne.s32.totalorder %s124, %s126
      %p133 = scmp.eq.s32.totalorder %s32, 1
      %p134 = por %p132, %p133
      %p135 = scmp.ne.s32.totalorder %s126, %s127
      %p136 = scmp.eq.s32.totalorder %s32, 0
      %p137 = por %p135, %p136
      %p138 = scmp.ne.s32.totalorder %s126, %s127
      %p139 = scmp.eq.s32.totalorder %s33, 1
      %p140 = por %p138, %p139
      %p142 = scmp.ne.s32.totalorder %s127, %s141
      %p143 = scmp.eq.s32.totalorder %s33, 0
      %p144 = por %p142, %p143
      %s146 = sadd.s32 %s145, 1
      %p149 = scmp.eq.s32.totalorder %s27, 1
      %p150 = scmp.ne.s32.totalorder %s145, %s147
      %p151 = scmp.eq.s32.totalorder %s27, 0
      %p152 = por %p150, %p151
      %p153 = scmp.ne.s32.totalorder %s145, %s147
      %p154 = scmp.eq.s32.totalorder %s32, 1
      %p155 = por %p153, %p154
      %p156 = scmp.ne.s32.totalorder %s147, %s148
      %p157 = scmp.eq.s32.totalorder %s32, 0
      %p158 = por %p156, %p157
      %p159 = scmp.ne.s32.totalorder %s147, %s148
      %p160 = scmp.eq.s32.totalorder %s33, 1
      %p161 = por %p159, %p160
      %p163 = scmp.ne.s32.totalorder %s148, %s162
      %p164 = scmp.eq.s32.totalorder %s33, 0
      %p165 = por %p163, %p164
      %s167 = sadd.s32 %s166, 1
      %p170 = scmp.eq.s32.totalorder %s27, 1
      %p171 = scmp.ne.s32.totalorder %s166, %s168
      %p172 = scmp.eq.s32.totalorder %s27, 0
      %p173 = por %p171, %p172
      %p174 = scmp.ne.s32.totalorder %s166, %s168
      %p175 = scmp.eq.s32.totalorder %s32, 1
      %p176 = por %p174, %p175
      %p177 = scmp.ne.s32.totalorder %s168, %s169
      %p178 = scmp.eq.s32.totalorder %s32, 0
      %p179 = por %p177, %p178
      %p180 = scmp.ne.s32.totalorder %s168, %s169
      %p181 = scmp.eq.s32.totalorder %s33, 1
      %p182 = por %p180, %p181
      %p184 = scmp.ne.s32.totalorder %s169, %s183
      %p185 = scmp.eq.s32.totalorder %s33, 0
      %p186 = por %p184, %p185
      %s188 = sadd.s32 %s187, 1
      %p191 = scmp.eq.s32.totalorder %s27, 1
      %p192 = scmp.ne.s32.totalorder %s187, %s189
      %p193 = scmp.eq.s32.totalorder %s27, 0
      %p194 = por %p192, %p193
      %p195 = scmp.ne.s32.totalorder %s187, %s189
      %p196 = scmp.eq.s32.totalorder %s32, 1
      %p197 = por %p195, %p196
      %p198 = scmp.ne.s32.totalorder %s189, %s190
      %p199 = scmp.eq.s32.totalorder %s32, 0
      %p200 = por %p198, %p199
      %p201 = scmp.ne.s32.totalorder %s189, %s190
      %p202 = scmp.eq.s32.totalorder %s33, 1
      %p203 = por %p201, %p202
      %p205 = scmp.ne.s32.totalorder %s190, %s204
      %p206 = scmp.eq.s32.totalorder %s33, 0
      %p207 = por %p205, %p206
      %s209 = sadd.s32 %s208, 1
      %p212 = scmp.eq.s32.totalorder %s27, 1
      %p213 = scmp.ne.s32.totalorder %s208, %s210
      %p214 = scmp.eq.s32.totalorder %s27, 0
      %p215 = por %p213, %p214
      %p216 = scmp.ne.s32.totalorder %s208, %s210
      %p217 = scmp.eq.s32.totalorder %s32, 1
      %p218 = por %p216, %p217
      %p219 = scmp.ne.s32.totalorder %s210, %s211
      %p220 = scmp.eq.s32.totalorder %s32, 0
      %p221 = por %p219, %p220
      %p222 = scmp.ne.s32.totalorder %s210, %s211
      %p223 = scmp.eq.s32.totalorder %s33, 1
      %p224 = por %p222, %p223
      %p226 = scmp.ne.s32.totalorder %s211, %s225
      %p227 = scmp.eq.s32.totalorder %s33, 0
      %p228 = por %p226, %p227
      %s230 = sadd.s32 %s229, 1
      %p233 = scmp.eq.s32.totalorder %s27, 1
      %p234 = scmp.ne.s32.totalorder %s229, %s231
      %p235 = scmp.eq.s32.totalorder %s27, 0
      %p236 = por %p234, %p235
      %p237 = scmp.ne.s32.totalorder %s229, %s231
      %p238 = scmp.eq.s32.totalorder %s32, 1
      %p239 = por %p237, %p238
      %p240 = scmp.ne.s32.totalorder %s231, %s232
      %p241 = scmp.eq.s32.totalorder %s32, 0
      %p242 = por %p240, %p241
      %p243 = scmp.ne.s32.totalorder %s231, %s232
      %p244 = scmp.eq.s32.totalorder %s33, 1
      %p245 = por %p243, %p244
      %p247 = scmp.ne.s32.totalorder %s232, %s246
      %p248 = scmp.eq.s32.totalorder %s33, 0
      %p249 = por %p247, %p248
      %s250 = ssub.s32 %s27, %s34
      %p251 = scmp.eq.s32.totalorder %s250, 0
      %s253 = sadd.s32 %s252, 1
      %s254 = scalar_select %p251, %s252, %s253
      %p257 = pneg %p251
      %p258 = scmp.eq.s32.totalorder %s27, 1
      %p259 = por %p257, %p258
      %p260 = scmp.ne.s32.totalorder %s252, %s255
      %p261 = scmp.eq.s32.totalorder %s27, 0
      %p262 = por %p260, %p261
      %p263 = scmp.ne.s32.totalorder %s252, %s255
      %p264 = scmp.eq.s32.totalorder %s32, 1
      %p265 = por %p263, %p264
      %p266 = scmp.ne.s32.totalorder %s255, %s256
      %p267 = scmp.eq.s32.totalorder %s32, 0
      %p268 = por %p266, %p267
      %p269 = scmp.ne.s32.totalorder %s255, %s256
      %p270 = scmp.eq.s32.totalorder %s33, 1
      %p271 = por %p269, %p270
      %p273 = scmp.ne.s32.totalorder %s256, %s272
      %p274 = scmp.eq.s32.totalorder %s33, 0
      %p275 = por %p273, %p274
      %s276 = ssub.s32 %s27, %s34
      %p277 = scmp.eq.s32.totalorder %s276, 0
      %s279 = sadd.s32 %s278, 1
      %s280 = scalar_select %p277, %s278, %s279
      %p283 = pneg %p277
      %p284 = scmp.eq.s32.totalorder %s27, 1
      %p285 = por %p283, %p284
      %p286 = scmp.ne.s32.totalorder %s278, %s281
      %p287 = scmp.eq.s32.totalorder %s27, 0
      %p288 = por %p286, %p287
      %p289 = scmp.ne.s32.totalorder %s278, %s281
      %p290 = scmp.eq.s32.totalorder %s32, 1
      %p291 = por %p289, %p290
      %p292 = scmp.ne.s32.totalorder %s281, %s282
      %p293 = scmp.eq.s32.totalorder %s32, 0
      %p294 = por %p292, %p293
      %p295 = scmp.ne.s32.totalorder %s281, %s282
      %p296 = scmp.eq.s32.totalorder %s33, 1
      %p297 = por %p295, %p296
      %p299 = scmp.ne.s32.totalorder %s282, %s298
      %p300 = scmp.eq.s32.totalorder %s33, 0
      %p301 = por %p299, %p300
      %s302 = ssub.s32 %s27, %s34
      %p303 = scmp.eq.s32.totalorder %s302, 0
      %s305 = sadd.s32 %s304, 1
      %s306 = scalar_select %p303, %s304, %s305
      %p309 = pneg %p303
      %p310 = scmp.eq.s32.totalorder %s27, 1
      %p311 = por %p309, %p310
      %p312 = scmp.ne.s32.totalorder %s304, %s307
      %p313 = scmp.eq.s32.totalorder %s27, 0
      %p314 = por %p312, %p313
      %p315 = scmp.ne.s32.totalorder %s304, %s307
      %p316 = scmp.eq.s32.totalorder %s32, 1
      %p317 = por %p315, %p316
      %p318 = scmp.ne.s32.totalorder %s307, %s308
      %p319 = scmp.eq.s32.totalorder %s32, 0
      %p320 = por %p318, %p319
      %p321 = scmp.ne.s32.totalorder %s307, %s308
      %p322 = scmp.eq.s32.totalorder %s33, 1
      %p323 = por %p321, %p322
      %p325 = scmp.ne.s32.totalorder %s308, %s324
      %p326 = scmp.eq.s32.totalorder %s33, 0
      %p327 = por %p325, %p326
      %p328 = scmp.le.s32.totalorder 1, %s27
      %p329 = scmp.lt.s32.totalorder %s27, 3
      %p330 = pnand %p328, %p329
      %p331 = pneg %p330
      // Predicated region
      $region9: #{tpu_custom_call.1} parent=5 // pred_check
        _
      $region10: #{tpu_custom_call.1} parent=5 // pred_check_branch
        %333 = sbr.rel (%p330) target = $region12
      $region11: #{tpu_custom_call.1} parent=5 // pred_region
        %s334 = ssub.s32 %s27, 1
        // Predicated region
        $region13: #{tpu_custom_call.1} parent=11 // pred_check
          %p335 = pneg %p74
        $region14: #{tpu_custom_call.1} parent=11 // pred_check_branch
          %337 = sbr.rel (%p335) target = $region16
        $region15: #{tpu_custom_call.1} parent=11 // pred_region
          _
        $region16: #{tpu_custom_call.1} parent=11 // pred_fallthru
          _
        // Predicated region
        $region17: #{tpu_custom_call.1} parent=11 // pred_check
          %p338 = pneg %p95
        $region18: #{tpu_custom_call.1} parent=11 // pred_check_branch
          %340 = sbr.rel (%p338) target = $region20
        $region19: #{tpu_custom_call.1} parent=11 // pred_region
          _
        $region20: #{tpu_custom_call.1} parent=11 // pred_fallthru
          _
        // Predicated region
        $region21: #{tpu_custom_call.1} parent=11 // pred_check
          %p341 = pneg %p116
        $region22: #{tpu_custom_call.1} parent=11 // pred_check_branch
          %343 = sbr.rel (%p341) target = $region24
        $region23: #{tpu_custom_call.1} parent=11 // pred_region
          _
        $region24: #{tpu_custom_call.1} parent=11 // pred_fallthru
          _
        // Predicated region
        $region25: #{tpu_custom_call.1} parent=11 // pred_check
          %p344 = pneg %p137
        $region26: #{tpu_custom_call.1} parent=11 // pred_check_branch
          %346 = sbr.rel (%p344) target = $region28
        $region27: #{tpu_custom_call.1} parent=11 // pred_region
          %348 = vsyncadd [#allocation3], 0
          %s349 = sshll.u32 %s4, 4
          %s350 = int_to_ptr.hbm [resolvable:$true] %s349
          %s351 = sshll.u32 [#allocation2], 4
          %s352 = int_to_ptr.vmem [resolvable:$true] %s351
          %357 = dma.hbm_to_vmem [thread:$0]  %s350, 1024, %s352, [#allocation3], 64, 64, 4
        $region28: #{tpu_custom_call.1} parent=11 // pred_fallthru
          _
        // Predicated region
        $region29: #{tpu_custom_call.1} parent=11 // pred_check
          %p358 = pneg %p158
        $region30: #{tpu_custom_call.1} parent=11 // pred_check_branch
          %360 = sbr.rel (%p358) target = $region32
        $region31: #{tpu_custom_call.1} parent=11 // pred_region
          _
        $region32: #{tpu_custom_call.1} parent=11 // pred_fallthru
          _
        // Predicated region
        $region33: #{tpu_custom_call.1} parent=11 // pred_check
          %p361 = pneg %p179
        $region34: #{tpu_custom_call.1} parent=11 // pred_check_branch
          %363 = sbr.rel (%p361) target = $region36
        $region35: #{tpu_custom_call.1} parent=11 // pred_region
          _
        $region36: #{tpu_custom_call.1} parent=11 // pred_fallthru
          _
        // Predicated region
        $region37: #{tpu_custom_call.1} parent=11 // pred_check
          %p364 = pneg %p200
        $region38: #{tpu_custom_call.1} parent=11 // pred_check_branch
          %366 = sbr.rel (%p364) target = $region40
        $region39: #{tpu_custom_call.1} parent=11 // pred_region
          _
        $region40: #{tpu_custom_call.1} parent=11 // pred_fallthru
          _
        // Predicated region
        $region41: #{tpu_custom_call.1} parent=11 // pred_check
          %p367 = pneg %p221
        $region42: #{tpu_custom_call.1} parent=11 // pred_check_branch
          %369 = sbr.rel (%p367) target = $region44
        $region43: #{tpu_custom_call.1} parent=11 // pred_region
          %371 = vsyncadd [#allocation6], 0
          %s372 = sshll.u32 %s8, 4
          %s373 = int_to_ptr.hbm [resolvable:$true] %s372
          %s374 = sshll.u32 [#allocation5], 4
          %s375 = int_to_ptr.vmem [resolvable:$true] %s374
          %380 = dma.hbm_to_vmem [thread:$0]  %s373, 1024, %s375, [#allocation6], 64, 64, 4
        $region44: #{tpu_custom_call.1} parent=11 // pred_fallthru
          _
        // Predicated region
        $region45: #{tpu_custom_call.1} parent=11 // pred_check
          %p381 = pneg %p242
        $region46: #{tpu_custom_call.1} parent=11 // pred_check_branch
          %383 = sbr.rel (%p381) target = $region48
        $region47: #{tpu_custom_call.1} parent=11 // pred_region
          %385 = vsyncadd [#allocation6], 0
          %s386 = sshll.u32 %s9, 4
          %s387 = int_to_ptr.hbm [resolvable:$true] %s386
          %s388 = sshll.u32 [#allocation7], 4
          %s389 = int_to_ptr.vmem [resolvable:$true] %s388
          %394 = dma.hbm_to_vmem [thread:$0]  %s387, 1024, %s389, [#allocation6], 64, 64, 4
        $region48: #{tpu_custom_call.1} parent=11 // pred_fallthru
          _
      $region12: #{tpu_custom_call.1} parent=5 // pred_fallthru
        _
      %p395 = scmp.lt.s32.totalorder %s27, 2
      // Predicated region
      $region49: #{tpu_custom_call.1} parent=5 // pred_check
        %p396 = pneg %p395
      $region50: #{tpu_custom_call.1} parent=5 // pred_check_branch
        %398 = sbr.rel (%p396) target = $region52
      $region51: #{tpu_custom_call.1} parent=5 // pred_region
        // Predicated region
        $region53: #{tpu_custom_call.1} parent=51 // pred_check
          %p399 = pneg %p47
        $region54: #{tpu_custom_call.1} parent=51 // pred_check_branch
          %401 = sbr.rel (%p399) target = $region56
        $region55: #{tpu_custom_call.1} parent=51 // pred_region
          %p402 = scmp.lt.s32.totalorder %s27, 1
          %s403 = scalar_select %p402, %s27, 1
          %s404 = smul.addr %s403, 8
          %s405 = smul.addr %s404, 8
          %s406 = scalar_lea.vmem %s0, %s405
        $region56: #{tpu_custom_call.1} parent=51 // pred_fallthru
          _
      $region52: #{tpu_custom_call.1} parent=5 // pred_fallthru
        _
      %p407 = scmp.le.s32.totalorder 1, %s27
      %p408 = scmp.lt.s32.totalorder %s27, 3
      %p409 = pnand %p407, %p408
      %p410 = pneg %p409
      // Predicated region
      $region57: #{tpu_custom_call.1} parent=5 // pred_check
        _
      $region58: #{tpu_custom_call.1} parent=5 // pred_check_branch
        %412 = sbr.rel (%p409) target = $region60
      $region59: #{tpu_custom_call.1} parent=5 // pred_region
        %s413 = ssub.s32 %s27, 1
        // Predicated region
        $region61: #{tpu_custom_call.1} parent=59 // pred_check
          %p414 = pneg %p137
        $region62: #{tpu_custom_call.1} parent=59 // pred_check_branch
          %416 = sbr.rel (%p414) target = $region64
        $region63: #{tpu_custom_call.1} parent=59 // pred_region
          %418 = dma.done [#allocation3], 1024
        $region64: #{tpu_custom_call.1} parent=59 // pred_fallthru
          _
        // Predicated region
        $region65: #{tpu_custom_call.1} parent=59 // pred_check
          %p419 = pneg %p221
        $region66: #{tpu_custom_call.1} parent=59 // pred_check_branch
          %421 = sbr.rel (%p419) target = $region68
        $region67: #{tpu_custom_call.1} parent=59 // pred_region
          %423 = dma.done [#allocation6], 1024
        $region68: #{tpu_custom_call.1} parent=59 // pred_fallthru
          _
        // Predicated region
        $region69: #{tpu_custom_call.1} parent=59 // pred_check
          %p424 = pneg %p242
        $region70: #{tpu_custom_call.1} parent=59 // pred_check_branch
          %426 = sbr.rel (%p424) target = $region72
        $region71: #{tpu_custom_call.1} parent=59 // pred_region
          %428 = dma.done [#allocation6], 1024
        $region72: #{tpu_custom_call.1} parent=59 // pred_fallthru
          _
        %p429 = scmp.lt.s32.totalorder %s32, 1
        %s430 = scalar_select %p429, %s32, 1
        %s431 = smul.addr %s430, 8
        %s432 = smul.addr %s431, 8
        %s433 = scalar_lea.vmem %s0, %s432
        %p434 = pneg %p53
        %p435 = pneg %p50
        %p436 = pneg %p74
        %p437 = pneg %p71
        %p438 = pneg %p95
        %p439 = pneg %p92
        %p440 = pneg %p116
        %p441 = pneg %p113
        %p442 = pneg %p137
        %p443 = pneg %p134
        %p444 = pneg %p158
        %p445 = pneg %p155
        %p446 = pneg %p179
        %p447 = pneg %p176
        %p448 = pneg %p200
        %p449 = pneg %p197
        %p450 = pneg %p221
        %p451 = pneg %p218
        %p452 = pneg %p242
        %p453 = pneg %p239
        %p454 = pneg %p268
        %p455 = pneg %p265
        %s456 = sand.u32 %s255, 1
        %s457 = scalar_lea.sflag [#allocation4], %s456
        %s458 = sand.u32 %s255, 1
        %s459 = smul.addr %s458, 64
        %s460 = scalar_lea.vmem [#allocation8], %s459
        %p461 = pneg %p294
        %p462 = pneg %p291
        %s463 = sand.u32 %s32, 1
        %s464 = scalar_lea.sflag [#allocation10], %s463
        %s465 = sand.u32 %s281, 1
        %s466 = smul.addr %s465, 32
        %s467 = scalar_lea.vmem [#allocation9], %s466
        %p468 = pneg %p320
        %p469 = pneg %p317
        %s470 = sand.u32 %s32, 1
        %s471 = scalar_lea.sflag [#allocation10], %s470
        %s472 = sand.u32 %s307, 1
        %s473 = smul.addr %s472, 32
        %s474 = scalar_lea.vmem [#allocation11], %s473
        %p475 = scmp.lt.s32.totalorder %s32, 1
        %s476 = scalar_select %p475, %s32, 1
        %s477 = smul.addr %s476, 8
        %s478 = smul.addr %s477, 8
        %s479 = scalar_lea.vmem %s0, %s478
        %v480 = vld [vmem:[%s479] sm:$0xff]
        %v481 = vld [vmem:[%s479 + $0x8] sm:$0xff]
        %v482 = vld [vmem:[%s479 + $0x10] sm:$0xff]
        %v483 = vld [vmem:[%s479 + $0x18] sm:$0xff]
        %v484 = vld [vmem:[%s479 + $0x20] sm:$0xff]
        %v485 = vld [vmem:[%s479 + $0x28] sm:$0xff]
        %v486 = vld [vmem:[%s479 + $0x30] sm:$0xff]
        %v487 = vld [vmem:[%s479 + $0x38] sm:$0xff]
        %v488 = vld [vmem:[%s1] sm:$0xff]
        %v489 = vld [vmem:[%s1 + $0x8] sm:$0xff]
        %v490 = vld [vmem:[%s1 + $0x10] sm:$0xff]
        %v491 = vld [vmem:[%s1 + $0x18] sm:$0xff]
        %v492 = vld [vmem:[%s1 + $0x20] sm:$0xff]
        %v493 = vld [vmem:[%s1 + $0x28] sm:$0xff]
        %v494 = vld [vmem:[%s1 + $0x30] sm:$0xff]
        %v495 = vld [vmem:[%s1 + $0x38] sm:$0xff]
        %v496 = vld [vmem:[%s1 + $0x40] sm:$0xff]
        %v497 = vld [vmem:[%s1 + $0x48] sm:$0xff]
        %v498 = vld [vmem:[%s1 + $0x50] sm:$0xff]
        %v499 = vld [vmem:[%s1 + $0x58] sm:$0xff]
        %v500 = vld [vmem:[%s1 + $0x60] sm:$0xff]
        %v501 = vld [vmem:[%s1 + $0x68] sm:$0xff]
        %v502 = vld [vmem:[%s1 + $0x70] sm:$0xff]
        %v503 = vld [vmem:[%s1 + $0x78] sm:$0xff]
        %v504 = vadd.f32 %v480, %v481
        %v505 = vadd.f32 %v504, %v482
        %v506 = vadd.f32 %v505, %v483
        %v507 = vadd.f32 %v506, %v484
        %v508 = vadd.f32 %v507, %v485
        %v509 = vadd.f32 %v508, %v486
        %v510 = vadd.f32 %v509, %v487
        %v511 = vrot.slane %v510, 4
        %v512 = vadd.f32 %v510, %v511
        %v513 = vrot.slane %v512, 2
        %v514 = vadd.f32 %v512, %v513
        %v515 = vrot.slane %v514, 1
        %v516 = vadd.f32 %v514, %v515
        %517 = vmatpush.msra.mxu0 %v503
        %518 = vmatpush.msra.mxu0 %v502
        %519 = vmatpush.msra.mxu0 %v501
        %520 = vmatpush.msra.mxu0 %v500
        %521 = vmatpush.msra.mxu0 %v499
        %522 = vmatpush.msra.mxu0 %v498
        %523 = vmatpush.msra.mxu0 %v497
        %524 = vmatpush.msra.mxu0 %v496
        %525 = vmatpush.msra.mxu0 %v495
        %526 = vmatpush.msra.mxu0 %v494
        %527 = vmatpush.msra.mxu0 %v493
        %528 = vmatpush.msra.mxu0 %v492
        %529 = vmatpush.msra.mxu0 %v491
        %530 = vmatpush.msra.mxu0 %v490
        %531 = vmatpush.msra.mxu0 %v489
        %532 = vmatpush.msra.mxu0 %v488
        %533 = vmatmul.f32.gmra.mxu0 %v516
        %v534 = vpop.f32.mrf.mxu0
        %v535 = vadd.f32 0.0, %v534
        %536 = vdwg.mxu0
        %v537 = vmul.f32 %v535, 0.00390625
        %vm538 = vcmask 261120
        %v540 = vsel %vm538, %v537, 0
        %v543 = vsel %vm538, %v488, 0
        %v546 = vsel %vm538, %v489, 0
        %v549 = vsel %vm538, %v490, 0
        %v552 = vsel %vm538, %v491, 0
        %v555 = vsel %vm538, %v492, 0
        %v558 = vsel %vm538, %v493, 0
        %v561 = vsel %vm538, %v494, 0
        %v564 = vsel %vm538, %v495, 0
        %v567 = vsel %vm538, %v496, 0
        %v570 = vsel %vm538, %v497, 0
        %v573 = vsel %vm538, %v498, 0
        %v576 = vsel %vm538, %v499, 0
        %v579 = vsel %vm538, %v500, 0
        %v582 = vsel %vm538, %v501, 0
        %v585 = vsel %vm538, %v502, 0
        %v588 = vsel %vm538, %v503, 0
        %590 = vmatpush.xpose.msra.mxu0 %v588
        %591 = vmatpush.xpose.msra.mxu0 %v585
        %592 = vmatpush.xpose.msra.mxu0 %v582
        %593 = vmatpush.xpose.msra.mxu0 %v579
        %594 = vmatpush.xpose.msra.mxu0 %v576
        %595 = vmatpush.xpose.msra.mxu0 %v573
        %596 = vmatpush.xpose.msra.mxu0 %v570
        %597 = vmatpush.xpose.msra.mxu0 %v567
        %598 = vmatpush.xpose.msra.mxu0 %v564
        %599 = vmatpush.xpose.msra.mxu0 %v561
        %600 = vmatpush.xpose.msra.mxu0 %v558
        %601 = vmatpush.xpose.msra.mxu0 %v555
        %602 = vmatpush.xpose.msra.mxu0 %v552
        %603 = vmatpush.xpose.msra.mxu0 %v549
        %604 = vmatpush.xpose.msra.mxu0 %v546
        %605 = vmatpush.xpose.msra.mxu0 %v543
        %606 = vmatmul.f32.gmra.mxu0 %v540
        %v607 = vpop.f32.mrf.mxu0
        %v608 = vadd.f32 0.0, %v607
        %609 = vdwg.mxu0
        %v610 = vperm.slane %v608, 0
        %v611 = vsub.f32 %v480, %v610
        %v612 = vsub.f32 %v481, %v610
        %v613 = vsub.f32 %v482, %v610
        %v614 = vsub.f32 %v483, %v610
        %v615 = vsub.f32 %v484, %v610
        %v616 = vsub.f32 %v485, %v610
        %v617 = vsub.f32 %v486, %v610
        %v618 = vsub.f32 %v487, %v610
        %v619 = vmul.f32 %v611, %v611
        %v620 = vmul.f32 %v612, %v612
        %v621 = vmul.f32 %v613, %v613
        %v622 = vmul.f32 %v614, %v614
        %v623 = vmul.f32 %v615, %v615
        %v624 = vmul.f32 %v616, %v616
        %v625 = vmul.f32 %v617, %v617
        %v626 = vmul.f32 %v618, %v618
        %v627 = vadd.f32 %v619, %v620
        %v628 = vadd.f32 %v627, %v621
        %v629 = vadd.f32 %v628, %v622
        %v630 = vadd.f32 %v629, %v623
        %v631 = vadd.f32 %v630, %v624
        %v632 = vadd.f32 %v631, %v625
        %v633 = vadd.f32 %v632, %v626
        %v634 = vrot.slane %v633, 4
        %v635 = vadd.f32 %v633, %v634
        %v636 = vrot.slane %v635, 2
        %v637 = vadd.f32 %v635, %v636
        %v638 = vrot.slane %v637, 1
        %v639 = vadd.f32 %v637, %v638
        %640 = vmatpush.msra.mxu0 %v503
        %641 = vmatpush.msra.mxu0 %v502
        %642 = vmatpush.msra.mxu0 %v501
        %643 = vmatpush.msra.mxu0 %v500
        %644 = vmatpush.msra.mxu0 %v499
        %645 = vmatpush.msra.mxu0 %v498
        %646 = vmatpush.msra.mxu0 %v497
        %647 = vmatpush.msra.mxu0 %v496
        %648 = vmatpush.msra.mxu0 %v495
        %649 = vmatpush.msra.mxu0 %v494
        %650 = vmatpush.msra.mxu0 %v493
        %651 = vmatpush.msra.mxu0 %v492
        %652 = vmatpush.msra.mxu0 %v491
        %653 = vmatpush.msra.mxu0 %v490
        %654 = vmatpush.msra.mxu0 %v489
        %655 = vmatpush.msra.mxu0 %v488
        %656 = vmatmul.f32.gmra.mxu0 %v639
        %v657 = vpop.f32.mrf.mxu0
        %v658 = vadd.f32 0.0, %v657
        %659 = vdwg.mxu0
        %v660 = vmul.f32 %v658, 0.00390625
        %v662 = vsel %vm538, %v660, 0
        %664 = vmatpush.xpose.msra.mxu0 %v588
        %665 = vmatpush.xpose.msra.mxu0 %v585
        %666 = vmatpush.xpose.msra.mxu0 %v582
        %667 = vmatpush.xpose.msra.mxu0 %v579
        %668 = vmatpush.xpose.msra.mxu0 %v576
        %669 = vmatpush.xpose.msra.mxu0 %v573
        %670 = vmatpush.xpose.msra.mxu0 %v570
        %671 = vmatpush.xpose.msra.mxu0 %v567
        %672 = vmatpush.xpose.msra.mxu0 %v564
        %673 = vmatpush.xpose.msra.mxu0 %v561
        %674 = vmatpush.xpose.msra.mxu0 %v558
        %675 = vmatpush.xpose.msra.mxu0 %v555
        %676 = vmatpush.xpose.msra.mxu0 %v552
        %677 = vmatpush.xpose.msra.mxu0 %v549
        %678 = vmatpush.xpose.msra.mxu0 %v546
        %679 = vmatpush.xpose.msra.mxu0 %v543
        %680 = vmatmul.f32.gmra.mxu0 %v662
        %v681 = vpop.f32.mrf.mxu0
        %v682 = vadd.f32 1e-06, %v681
        %683 = vdwg.mxu0
        %v684 = vrsqrt.pop %v682
        %v685 = vmul.f32 %v684, %v682
        %v686 = vmul.f32 %v685, %v684
        %v687 = vmul.f32 0.5, %v686
        %v688 = vsub.f32 1.5, %v687
        %v689 = vmul.f32 %v684, %v688
        %vm690 = vweird.f32 %v682
        %vm691 = vweird.f32 %v684
        %vm692 = vmor %vm690, %vm691
        %v693 = vsel %vm692, %v684, %v689
        %v694 = vperm.slane %v693, 0
        %v695 = vmul.f32 %v611, %v694
        %v696 = vmul.f32 %v612, %v694
        %v697 = vmul.f32 %v613, %v694
        %v698 = vmul.f32 %v614, %v694
        %v699 = vmul.f32 %v615, %v694
        %v700 = vmul.f32 %v616, %v694
        %v701 = vmul.f32 %v617, %v694
        %v702 = vmul.f32 %v618, %v694
        %v703 = vld [vmem:[%s2] sm:$0x1]
        %v705 = vperm.slane %v703, 0
        %v707 = vmul.f32 %v695, %v705
        %v708 = vmul.f32 %v696, %v705
        %v709 = vmul.f32 %v697, %v705
        %v710 = vmul.f32 %v698, %v705
        %v711 = vmul.f32 %v699, %v705
        %v712 = vmul.f32 %v700, %v705
        %v713 = vmul.f32 %v701, %v705
        %v714 = vmul.f32 %v702, %v705
        %v715 = vld [vmem:[%s3] sm:$0x1]
        %v717 = vperm.slane %v715, 0
        %v719 = vadd.f32 %v707, %v717
        %v720 = vadd.f32 %v708, %v717
        %v721 = vadd.f32 %v709, %v717
        %v722 = vadd.f32 %v710, %v717
        %v723 = vadd.f32 %v711, %v717
        %v724 = vadd.f32 %v712, %v717
        %v725 = vadd.f32 %v713, %v717
        %v726 = vadd.f32 %v714, %v717
        %v727 = vpack.c.bf16 %v720, %v719
        %v728 = vpack.c.bf16 %v722, %v721
        %v729 = vpack.c.bf16 %v724, %v723
        %v730 = vpack.c.bf16 %v726, %v725
        %v731 = vld [vmem:[#allocation2] sm:$0xf]
        %v732 = vld [vmem:[#allocation2 + $0x4] sm:$0xf]
        %v733 = vld [vmem:[#allocation2 + $0x8] sm:$0xf]
        %v734 = vld [vmem:[#allocation2 + $0xc] sm:$0xf]
        %v735 = vld [vmem:[#allocation2 + $0x10] sm:$0xf]
        %v736 = vld [vmem:[#allocation2 + $0x14] sm:$0xf]
        %v737 = vld [vmem:[#allocation2 + $0x18] sm:$0xf]
        %v738 = vld [vmem:[#allocation2 + $0x1c] sm:$0xf]
        %v739 = vld [vmem:[#allocation2 + $0x20] sm:$0xf]
        %v740 = vld [vmem:[#allocation2 + $0x24] sm:$0xf]
        %v741 = vld [vmem:[#allocation2 + $0x28] sm:$0xf]
        %v742 = vld [vmem:[#allocation2 + $0x2c] sm:$0xf]
        %v743 = vld [vmem:[#allocation2 + $0x30] sm:$0xf]
        %v744 = vld [vmem:[#allocation2 + $0x34] sm:$0xf]
        %v745 = vld [vmem:[#allocation2 + $0x38] sm:$0xf]
        %v746 = vld [vmem:[#allocation2 + $0x3c] sm:$0xf]
        %v747 = vld [vmem:[%s5] sm:$0x1]
        %v749 = vperm.slane %v747, 0
        %v767 = vunpack.c.l.b16 %v731
        %v768 = vunpack.c.l.b16 %v732
        %v769 = vunpack.c.l.b16 %v733
        %v770 = vunpack.c.l.b16 %v734
        %v771 = vunpack.c.l.b16 %v735
        %v772 = vunpack.c.l.b16 %v736
        %v773 = vunpack.c.l.b16 %v737
        %v774 = vunpack.c.l.b16 %v738
        %v775 = vunpack.c.l.b16 %v739
        %v776 = vunpack.c.l.b16 %v740
        %v777 = vunpack.c.l.b16 %v741
        %v778 = vunpack.c.l.b16 %v742
        %v779 = vunpack.c.l.b16 %v743
        %v780 = vunpack.c.l.b16 %v744
        %v781 = vunpack.c.l.b16 %v745
        %v782 = vunpack.c.l.b16 %v746
        %v783 = vpack.c.b16 %v768, %v767
        %v784 = vpack.c.b16 %v770, %v769
        %v785 = vpack.c.b16 %v772, %v771
        %v786 = vpack.c.b16 %v774, %v773
        %v787 = vpack.c.b16 %v776, %v775
        %v788 = vpack.c.b16 %v778, %v777
        %v789 = vpack.c.b16 %v780, %v779
        %v790 = vpack.c.b16 %v782, %v781
        %799 = vmatpush.bf16.msra.mxu0 %v790
        %800 = vmatpush.bf16.msra.mxu0 %v789
        %801 = vmatpush.bf16.msra.mxu0 %v788
        %802 = vmatpush.bf16.msra.mxu0 %v787
        %803 = vmatpush.bf16.msra.mxu0 %v786
        %804 = vmatpush.bf16.msra.mxu0 %v785
        %805 = vmatpush.bf16.msra.mxu0 %v784
        %806 = vmatpush.bf16.msra.mxu0 %v783
        %807 = vmatmul.bf16.gmra.mxu0 %v727
        %v808 = vpop.f32.mrf.mxu0
        %v809 = vadd.f32 %v749, %v808
        %v810 = vpop.f32.mrf.mxu0
        %v811 = vadd.f32 %v749, %v810
        %812 = vmatmul.bf16.gmra.mxu0 %v728
        %v813 = vpop.f32.mrf.mxu0
        %v814 = vadd.f32 %v749, %v813
        %v815 = vpop.f32.mrf.mxu0
        %v816 = vadd.f32 %v749, %v815
        %817 = vmatmul.bf16.gmra.mxu0 %v729
        %v818 = vpop.f32.mrf.mxu0
        %v819 = vadd.f32 %v749, %v818
        %v820 = vpop.f32.mrf.mxu0
        %v821 = vadd.f32 %v749, %v820
        %822 = vmatmul.bf16.gmra.mxu0 %v730
        %v823 = vpop.f32.mrf.mxu0
        %v824 = vadd.f32 %v749, %v823
        %v825 = vpop.f32.mrf.mxu0
        %v826 = vadd.f32 %v749, %v825
        %827 = vdwg.mxu0
        %828 = vst [vmem:[%s460] sm:$0xff] %v809
        %829 = vst [vmem:[%s460 + $0x8] sm:$0xff] %v811
        %830 = vst [vmem:[%s460 + $0x10] sm:$0xff] %v814
        %831 = vst [vmem:[%s460 + $0x18] sm:$0xff] %v816
        %832 = vst [vmem:[%s460 + $0x20] sm:$0xff] %v819
        %833 = vst [vmem:[%s460 + $0x28] sm:$0xff] %v821
        %834 = vst [vmem:[%s460 + $0x30] sm:$0xff] %v824
        %835 = vst [vmem:[%s460 + $0x38] sm:$0xff] %v826
        %v836 = vld [vmem:[%s6] sm:$0x1]
        %v837 = vld [vmem:[%s7] sm:$0x1]
        %838 = vadd.xlane.f32.xlu0 %v809
        %v839 = vpop.xlane.xlu0 %838
        %840 = vadd.xlane.f32.xlu0 %v811
        %v841 = vpop.xlane.xlu0 %840
        %842 = vadd.xlane.f32.xlu0 %v814
        %v843 = vpop.xlane.xlu0 %842
        %844 = vadd.xlane.f32.xlu0 %v816
        %v845 = vpop.xlane.xlu0 %844
        %846 = vadd.xlane.f32.xlu0 %v819
        %v847 = vpop.xlane.xlu0 %846
        %848 = vadd.xlane.f32.xlu0 %v821
        %v849 = vpop.xlane.xlu0 %848
        %850 = vadd.xlane.f32.xlu0 %v824
        %v851 = vpop.xlane.xlu0 %850
        %852 = vadd.xlane.f32.xlu0 %v826
        %v853 = vpop.xlane.xlu0 %852
        %v854 = vrcp.pop 128.0
        %v855 = vmul.f32 128.0, %v854
        %v856 = vsub.f32 1.0, %v855
        %v857 = vmul.f32 %v854, %v856
        %v858 = vadd.f32 %v854, %v857
        %vm859 = vweird.f32 %v854
        %v860 = vsel %vm859, %v854, %v858
        %v861 = vmul.f32 %v839, %v860
        %v862 = vmul.f32 %v841, %v860
        %v863 = vmul.f32 %v843, %v860
        %v864 = vmul.f32 %v845, %v860
        %v865 = vmul.f32 %v847, %v860
        %v866 = vmul.f32 %v849, %v860
        %v867 = vmul.f32 %v851, %v860
        %v868 = vmul.f32 %v853, %v860
        %v869 = vsub.f32 %v809, %v861
        %v870 = vsub.f32 %v811, %v862
        %v871 = vsub.f32 %v814, %v863
        %v872 = vsub.f32 %v816, %v864
        %v873 = vsub.f32 %v819, %v865
        %v874 = vsub.f32 %v821, %v866
        %v875 = vsub.f32 %v824, %v867
        %v876 = vsub.f32 %v826, %v868
        %v877 = vmul.f32 %v869, %v869
        %v878 = vmul.f32 %v870, %v870
        %v879 = vmul.f32 %v871, %v871
        %v880 = vmul.f32 %v872, %v872
        %v881 = vmul.f32 %v873, %v873
        %v882 = vmul.f32 %v874, %v874
        %v883 = vmul.f32 %v875, %v875
        %v884 = vmul.f32 %v876, %v876
        %885 = vadd.xlane.f32.xlu0 %v877
        %v886 = vpop.xlane.xlu0 %885
        %887 = vadd.xlane.f32.xlu0 %v878
        %v888 = vpop.xlane.xlu0 %887
        %889 = vadd.xlane.f32.xlu0 %v879
        %v890 = vpop.xlane.xlu0 %889
        %891 = vadd.xlane.f32.xlu0 %v880
        %v892 = vpop.xlane.xlu0 %891
        %893 = vadd.xlane.f32.xlu0 %v881
        %v894 = vpop.xlane.xlu0 %893
        %895 = vadd.xlane.f32.xlu0 %v882
        %v896 = vpop.xlane.xlu0 %895
        %897 = vadd.xlane.f32.xlu0 %v883
        %v898 = vpop.xlane.xlu0 %897
        %899 = vadd.xlane.f32.xlu0 %v884
        %v900 = vpop.xlane.xlu0 %899
        %v901 = vmul.f32 %v886, %v860
        %v902 = vmul.f32 %v888, %v860
        %v903 = vmul.f32 %v890, %v860
        %v904 = vmul.f32 %v892, %v860
        %v905 = vmul.f32 %v894, %v860
        %v906 = vmul.f32 %v896, %v860
        %v907 = vmul.f32 %v898, %v860
        %v908 = vmul.f32 %v900, %v860
        %v909 = vadd.f32 %v901, 1e-05
        %v910 = vadd.f32 %v902, 1e-05
        %v911 = vadd.f32 %v903, 1e-05
        %v912 = vadd.f32 %v904, 1e-05
        %v913 = vadd.f32 %v905, 1e-05
        %v914 = vadd.f32 %v906, 1e-05
        %v915 = vadd.f32 %v907, 1e-05
        %v916 = vadd.f32 %v908, 1e-05
        %v917 = vrsqrt.pop %v909
        %v918 = vmul.f32 %v917, %v909
        %v919 = vmul.f32 %v918, %v917
        %v920 = vmul.f32 0.5, %v919
        %v921 = vsub.f32 1.5, %v920
        %v922 = vmul.f32 %v917, %v921
        %vm923 = vweird.f32 %v909
        %vm924 = vweird.f32 %v917
        %vm925 = vmor %vm923, %vm924
        %v926 = vsel %vm925, %v917, %v922
        %v927 = vrsqrt.pop %v910
        %v928 = vmul.f32 %v927, %v910
        %v929 = vmul.f32 %v928, %v927
        %v930 = vmul.f32 0.5, %v929
        %v931 = vsub.f32 1.5, %v930
        %v932 = vmul.f32 %v927, %v931
        %vm933 = vweird.f32 %v910
        %vm934 = vweird.f32 %v927
        %vm935 = vmor %vm933, %vm934
        %v936 = vsel %vm935, %v927, %v932
        %v937 = vrsqrt.pop %v911
        %v938 = vmul.f32 %v937, %v911
        %v939 = vmul.f32 %v938, %v937
        %v940 = vmul.f32 0.5, %v939
        %v941 = vsub.f32 1.5, %v940
        %v942 = vmul.f32 %v937, %v941
        %vm943 = vweird.f32 %v911
        %vm944 = vweird.f32 %v937
        %vm945 = vmor %vm943, %vm944
        %v946 = vsel %vm945, %v937, %v942
        %v947 = vrsqrt.pop %v912
        %v948 = vmul.f32 %v947, %v912
        %v949 = vmul.f32 %v948, %v947
        %v950 = vmul.f32 0.5, %v949
        %v951 = vsub.f32 1.5, %v950
        %v952 = vmul.f32 %v947, %v951
        %vm953 = vweird.f32 %v912
        %vm954 = vweird.f32 %v947
        %vm955 = vmor %vm953, %vm954
        %v956 = vsel %vm955, %v947, %v952
        %v957 = vrsqrt.pop %v913
        %v958 = vmul.f32 %v957, %v913
        %v959 = vmul.f32 %v958, %v957
        %v960 = vmul.f32 0.5, %v959
        %v961 = vsub.f32 1.5, %v960
        %v962 = vmul.f32 %v957, %v961
        %vm963 = vweird.f32 %v913
        %vm964 = vweird.f32 %v957
        %vm965 = vmor %vm963, %vm964
        %v966 = vsel %vm965, %v957, %v962
        %v967 = vrsqrt.pop %v914
        %v968 = vmul.f32 %v967, %v914
        %v969 = vmul.f32 %v968, %v967
        %v970 = vmul.f32 0.5, %v969
        %v971 = vsub.f32 1.5, %v970
        %v972 = vmul.f32 %v967, %v971
        %vm973 = vweird.f32 %v914
        %vm974 = vweird.f32 %v967
        %vm975 = vmor %vm973, %vm974
        %v976 = vsel %vm975, %v967, %v972
        %v977 = vrsqrt.pop %v915
        %v978 = vmul.f32 %v977, %v915
        %v979 = vmul.f32 %v978, %v977
        %v980 = vmul.f32 0.5, %v979
        %v981 = vsub.f32 1.5, %v980
        %v982 = vmul.f32 %v977, %v981
        %vm983 = vweird.f32 %v915
        %vm984 = vweird.f32 %v977
        %vm985 = vmor %vm983, %vm984
        %v986 = vsel %vm985, %v977, %v982
        %v987 = vrsqrt.pop %v916
        %v988 = vmul.f32 %v987, %v916
        %v989 = vmul.f32 %v988, %v987
        %v990 = vmul.f32 0.5, %v989
        %v991 = vsub.f32 1.5, %v990
        %v992 = vmul.f32 %v987, %v991
        %vm993 = vweird.f32 %v916
        %vm994 = vweird.f32 %v987
        %vm995 = vmor %vm993, %vm994
        %v996 = vsel %vm995, %v987, %v992
        %v997 = vmul.f32 %v869, %v926
        %v998 = vmul.f32 %v870, %v936
        %v999 = vmul.f32 %v871, %v946
        %v1000 = vmul.f32 %v872, %v956
        %v1001 = vmul.f32 %v873, %v966
        %v1002 = vmul.f32 %v874, %v976
        %v1003 = vmul.f32 %v875, %v986
        %v1004 = vmul.f32 %v876, %v996
        %v1006 = vperm.slane %v836, 0
        %v1008 = vmul.f32 %v997, %v1006
        %v1009 = vmul.f32 %v998, %v1006
        %v1010 = vmul.f32 %v999, %v1006
        %v1011 = vmul.f32 %v1000, %v1006
        %v1012 = vmul.f32 %v1001, %v1006
        %v1013 = vmul.f32 %v1002, %v1006
        %v1014 = vmul.f32 %v1003, %v1006
        %v1015 = vmul.f32 %v1004, %v1006
        %v1017 = vperm.slane %v837, 0
        %v1019 = vadd.f32 %v1008, %v1017
        %v1020 = vadd.f32 %v1009, %v1017
        %v1021 = vadd.f32 %v1010, %v1017
        %v1022 = vadd.f32 %v1011, %v1017
        %v1023 = vadd.f32 %v1012, %v1017
        %v1024 = vadd.f32 %v1013, %v1017
        %v1025 = vadd.f32 %v1014, %v1017
        %v1026 = vadd.f32 %v1015, %v1017
        %v1027 = vpack.c.bf16 %v1020, %v1019
        %v1028 = vpack.c.bf16 %v1022, %v1021
        %v1029 = vpack.c.bf16 %v1024, %v1023
        %v1030 = vpack.c.bf16 %v1026, %v1025
        %v1031 = vld [vmem:[#allocation5] sm:$0xf]
        %v1032 = vld [vmem:[#allocation5 + $0x4] sm:$0xf]
        %v1033 = vld [vmem:[#allocation5 + $0x8] sm:$0xf]
        %v1034 = vld [vmem:[#allocation5 + $0xc] sm:$0xf]
        %v1035 = vld [vmem:[#allocation5 + $0x10] sm:$0xf]
        %v1036 = vld [vmem:[#allocation5 + $0x14] sm:$0xf]
        %v1037 = vld [vmem:[#allocation5 + $0x18] sm:$0xf]
        %v1038 = vld [vmem:[#allocation5 + $0x1c] sm:$0xf]
        %v1039 = vld [vmem:[#allocation5 + $0x20] sm:$0xf]
        %v1040 = vld [vmem:[#allocation5 + $0x24] sm:$0xf]
        %v1041 = vld [vmem:[#allocation5 + $0x28] sm:$0xf]
        %v1042 = vld [vmem:[#allocation5 + $0x2c] sm:$0xf]
        %v1043 = vld [vmem:[#allocation5 + $0x30] sm:$0xf]
        %v1044 = vld [vmem:[#allocation5 + $0x34] sm:$0xf]
        %v1045 = vld [vmem:[#allocation5 + $0x38] sm:$0xf]
        %v1046 = vld [vmem:[#allocation5 + $0x3c] sm:$0xf]
        %v1063 = vunpack.c.l.b16 %v1031
        %v1064 = vunpack.c.l.b16 %v1032
        %v1065 = vunpack.c.l.b16 %v1033
        %v1066 = vunpack.c.l.b16 %v1034
        %v1067 = vunpack.c.l.b16 %v1035
        %v1068 = vunpack.c.l.b16 %v1036
        %v1069 = vunpack.c.l.b16 %v1037
        %v1070 = vunpack.c.l.b16 %v1038
        %v1071 = vunpack.c.l.b16 %v1039
        %v1072 = vunpack.c.l.b16 %v1040
        %v1073 = vunpack.c.l.b16 %v1041
        %v1074 = vunpack.c.l.b16 %v1042
        %v1075 = vunpack.c.l.b16 %v1043
        %v1076 = vunpack.c.l.b16 %v1044
        %v1077 = vunpack.c.l.b16 %v1045
        %v1078 = vunpack.c.l.b16 %v1046
        %v1079 = vpack.c.b16 %v1064, %v1063
        %v1080 = vpack.c.b16 %v1066, %v1065
        %v1081 = vpack.c.b16 %v1068, %v1067
        %v1082 = vpack.c.b16 %v1070, %v1069
        %v1083 = vpack.c.b16 %v1072, %v1071
        %v1084 = vpack.c.b16 %v1074, %v1073
        %v1085 = vpack.c.b16 %v1076, %v1075
        %v1086 = vpack.c.b16 %v1078, %v1077
        %1095 = vmatpush.bf16.msra.mxu0 %v1086
        %1096 = vmatpush.bf16.msra.mxu0 %v1085
        %1097 = vmatpush.bf16.msra.mxu0 %v1084
        %1098 = vmatpush.bf16.msra.mxu0 %v1083
        %1099 = vmatpush.bf16.msra.mxu0 %v1082
        %1100 = vmatpush.bf16.msra.mxu0 %v1081
        %1101 = vmatpush.bf16.msra.mxu0 %v1080
        %1102 = vmatpush.bf16.msra.mxu0 %v1079
        %1103 = vmatmul.bf16.gmra.mxu0 %v1027
        %v1104 = vpop.f32.mrf.mxu0
        %v1105 = vadd.f32 0.0, %v1104
        %v1106 = vpop.f32.mrf.mxu0
        %v1107 = vadd.f32 0.0, %v1106
        %1108 = vmatmul.bf16.gmra.mxu0 %v1028
        %v1109 = vpop.f32.mrf.mxu0
        %v1110 = vadd.f32 0.0, %v1109
        %v1111 = vpop.f32.mrf.mxu0
        %v1112 = vadd.f32 0.0, %v1111
        %1113 = vmatmul.bf16.gmra.mxu0 %v1029
        %v1114 = vpop.f32.mrf.mxu0
        %v1115 = vadd.f32 0.0, %v1114
        %v1116 = vpop.f32.mrf.mxu0
        %v1117 = vadd.f32 0.0, %v1116
        %1118 = vmatmul.bf16.gmra.mxu0 %v1030
        %v1119 = vpop.f32.mrf.mxu0
        %v1120 = vadd.f32 0.0, %v1119
        %v1121 = vpop.f32.mrf.mxu0
        %v1122 = vadd.f32 0.0, %v1121
        %1123 = vdwg.mxu0
        %v1124 = vpack.c.bf16 %v1105, %v1105
        %v1125 = vpack.c.bf16 %v1107, %v1107
        %v1126 = vpack.c.bf16 %v1110, %v1110
        %v1127 = vpack.c.bf16 %v1112, %v1112
        %v1128 = vpack.c.bf16 %v1115, %v1115
        %v1129 = vpack.c.bf16 %v1117, %v1117
        %v1130 = vpack.c.bf16 %v1120, %v1120
        %v1131 = vpack.c.bf16 %v1122, %v1122
        %1132 = vst [vmem:[%s467] sm:$0xf] %v1124
        %1133 = vst [vmem:[%s467 + $0x4] sm:$0xf] %v1125
        %1134 = vst [vmem:[%s467 + $0x8] sm:$0xf] %v1126
        %1135 = vst [vmem:[%s467 + $0xc] sm:$0xf] %v1127
        %1136 = vst [vmem:[%s467 + $0x10] sm:$0xf] %v1128
        %1137 = vst [vmem:[%s467 + $0x14] sm:$0xf] %v1129
        %1138 = vst [vmem:[%s467 + $0x18] sm:$0xf] %v1130
        %1139 = vst [vmem:[%s467 + $0x1c] sm:$0xf] %v1131
        %v1140 = vld [vmem:[#allocation7] sm:$0xf]
        %v1141 = vld [vmem:[#allocation7 + $0x4] sm:$0xf]
        %v1142 = vld [vmem:[#allocation7 + $0x8] sm:$0xf]
        %v1143 = vld [vmem:[#allocation7 + $0xc] sm:$0xf]
        %v1144 = vld [vmem:[#allocation7 + $0x10] sm:$0xf]
        %v1145 = vld [vmem:[#allocation7 + $0x14] sm:$0xf]
        %v1146 = vld [vmem:[#allocation7 + $0x18] sm:$0xf]
        %v1147 = vld [vmem:[#allocation7 + $0x1c] sm:$0xf]
        %v1148 = vld [vmem:[#allocation7 + $0x20] sm:$0xf]
        %v1149 = vld [vmem:[#allocation7 + $0x24] sm:$0xf]
        %v1150 = vld [vmem:[#allocation7 + $0x28] sm:$0xf]
        %v1151 = vld [vmem:[#allocation7 + $0x2c] sm:$0xf]
        %v1152 = vld [vmem:[#allocation7 + $0x30] sm:$0xf]
        %v1153 = vld [vmem:[#allocation7 + $0x34] sm:$0xf]
        %v1154 = vld [vmem:[#allocation7 + $0x38] sm:$0xf]
        %v1155 = vld [vmem:[#allocation7 + $0x3c] sm:$0xf]
        %v1172 = vunpack.c.l.b16 %v1140
        %v1173 = vunpack.c.l.b16 %v1141
        %v1174 = vunpack.c.l.b16 %v1142
        %v1175 = vunpack.c.l.b16 %v1143
        %v1176 = vunpack.c.l.b16 %v1144
        %v1177 = vunpack.c.l.b16 %v1145
        %v1178 = vunpack.c.l.b16 %v1146
        %v1179 = vunpack.c.l.b16 %v1147
        %v1180 = vunpack.c.l.b16 %v1148
        %v1181 = vunpack.c.l.b16 %v1149
        %v1182 = vunpack.c.l.b16 %v1150
        %v1183 = vunpack.c.l.b16 %v1151
        %v1184 = vunpack.c.l.b16 %v1152
        %v1185 = vunpack.c.l.b16 %v1153
        %v1186 = vunpack.c.l.b16 %v1154
        %v1187 = vunpack.c.l.b16 %v1155
        %v1188 = vpack.c.b16 %v1173, %v1172
        %v1189 = vpack.c.b16 %v1175, %v1174
        %v1190 = vpack.c.b16 %v1177, %v1176
        %v1191 = vpack.c.b16 %v1179, %v1178
        %v1192 = vpack.c.b16 %v1181, %v1180
        %v1193 = vpack.c.b16 %v1183, %v1182
        %v1194 = vpack.c.b16 %v1185, %v1184
        %v1195 = vpack.c.b16 %v1187, %v1186
        %1204 = vmatpush.bf16.msra.mxu0 %v1195
        %1205 = vmatpush.bf16.msra.mxu0 %v1194
        %1206 = vmatpush.bf16.msra.mxu0 %v1193
        %1207 = vmatpush.bf16.msra.mxu0 %v1192
        %1208 = vmatpush.bf16.msra.mxu0 %v1191
        %1209 = vmatpush.bf16.msra.mxu0 %v1190
        %1210 = vmatpush.bf16.msra.mxu0 %v1189
        %1211 = vmatpush.bf16.msra.mxu0 %v1188
        %1212 = vmatmul.bf16.gmra.mxu0 %v1027
        %v1213 = vpop.f32.mrf.mxu0
        %v1214 = vadd.f32 0.0, %v1213
        %v1215 = vpop.f32.mrf.mxu0
        %v1216 = vadd.f32 0.0, %v1215
        %1217 = vmatmul.bf16.gmra.mxu0 %v1028
        %v1218 = vpop.f32.mrf.mxu0
        %v1219 = vadd.f32 0.0, %v1218
        %v1220 = vpop.f32.mrf.mxu0
        %v1221 = vadd.f32 0.0, %v1220
        %1222 = vmatmul.bf16.gmra.mxu0 %v1029
        %v1223 = vpop.f32.mrf.mxu0
        %v1224 = vadd.f32 0.0, %v1223
        %v1225 = vpop.f32.mrf.mxu0
        %v1226 = vadd.f32 0.0, %v1225
        %1227 = vmatmul.bf16.gmra.mxu0 %v1030
        %v1228 = vpop.f32.mrf.mxu0
        %v1229 = vadd.f32 0.0, %v1228
        %v1230 = vpop.f32.mrf.mxu0
        %v1231 = vadd.f32 0.0, %v1230
        %1232 = vdwg.mxu0
        %v1233 = vpack.c.bf16 %v1214, %v1214
        %v1234 = vpack.c.bf16 %v1216, %v1216
        %v1235 = vpack.c.bf16 %v1219, %v1219
        %v1236 = vpack.c.bf16 %v1221, %v1221
        %v1237 = vpack.c.bf16 %v1224, %v1224
        %v1238 = vpack.c.bf16 %v1226, %v1226
        %v1239 = vpack.c.bf16 %v1229, %v1229
        %v1240 = vpack.c.bf16 %v1231, %v1231
        %1241 = vst [vmem:[%s474] sm:$0xf] %v1233
        %1242 = vst [vmem:[%s474 + $0x4] sm:$0xf] %v1234
        %1243 = vst [vmem:[%s474 + $0x8] sm:$0xf] %v1235
        %1244 = vst [vmem:[%s474 + $0xc] sm:$0xf] %v1236
        %1245 = vst [vmem:[%s474 + $0x10] sm:$0xf] %v1237
        %1246 = vst [vmem:[%s474 + $0x14] sm:$0xf] %v1238
        %1247 = vst [vmem:[%s474 + $0x18] sm:$0xf] %v1239
        %1248 = vst [vmem:[%s474 + $0x1c] sm:$0xf] %v1240
        %s1249 = sand.u32 %s255, 1
        %s1250 = scalar_lea.sflag [#allocation4], %s1249
        %s1251 = sand.u32 %s255, 1
        %s1252 = smul.addr %s1251, 64
        %s1253 = scalar_lea.vmem [#allocation8], %s1252
        %s1254 = sand.u32 %s32, 1
        %s1255 = scalar_lea.sflag [#allocation10], %s1254
        %s1256 = sand.u32 %s281, 1
        %s1257 = smul.addr %s1256, 32
        %s1258 = scalar_lea.vmem [#allocation9], %s1257
        %s1259 = sand.u32 %s32, 1
        %s1260 = scalar_lea.sflag [#allocation10], %s1259
        %s1261 = sand.u32 %s307, 1
        %s1262 = smul.addr %s1261, 32
        %s1263 = scalar_lea.vmem [#allocation11], %s1262
        // Predicated region
        $region73: #{tpu_custom_call.1} parent=59 // pred_check
          %p1264 = pneg %p265
        $region74: #{tpu_custom_call.1} parent=59 // pred_check_branch
          %1266 = sbr.rel (%p1264) target = $region76
        $region75: #{tpu_custom_call.1} parent=59 // pred_region
          %1268 = vsyncadd %s1250, 0
          %s1269 = smul.addr %s32, 8
          %s1270 = smul.addr %s1269, 8
          %s1271 = scalar_lea.hbm %s10, %s1270
          %s1272 = sshll.u32 %s1253, 4
          %s1273 = int_to_ptr.vmem [resolvable:$true] %s1272
          %s1274 = sshll.u32 %s1271, 4
          %s1275 = int_to_ptr.hbm [resolvable:$true] %s1274
          %1280 = dma.vmem_to_hbm [thread:$0]  %s1273, 1024, %s1275, %s1250, 128, 128, 8
        $region76: #{tpu_custom_call.1} parent=59 // pred_fallthru
          _
        // Predicated region
        $region77: #{tpu_custom_call.1} parent=59 // pred_check
          %p1281 = pneg %p291
        $region78: #{tpu_custom_call.1} parent=59 // pred_check_branch
          %1283 = sbr.rel (%p1281) target = $region80
        $region79: #{tpu_custom_call.1} parent=59 // pred_region
          %1285 = vsyncadd %s1255, 0
          %s1286 = smul.addr %s32, 8
          %s1287 = smul.addr %s1286, 4
          %s1288 = scalar_lea.hbm %s11, %s1287
          %s1289 = sshll.u32 %s1258, 4
          %s1290 = int_to_ptr.vmem [resolvable:$true] %s1289
          %s1291 = sshll.u32 %s1288, 4
          %s1292 = int_to_ptr.hbm [resolvable:$true] %s1291
          %1297 = dma.vmem_to_hbm [thread:$0]  %s1290, 512, %s1292, %s1255, 64, 64, 4
        $region80: #{tpu_custom_call.1} parent=59 // pred_fallthru
          _
        // Predicated region
        $region81: #{tpu_custom_call.1} parent=59 // pred_check
          %p1298 = pneg %p317
        $region82: #{tpu_custom_call.1} parent=59 // pred_check_branch
          %1300 = sbr.rel (%p1298) target = $region84
        $region83: #{tpu_custom_call.1} parent=59 // pred_region
          %1302 = vsyncadd %s1260, 0
          %s1303 = smul.addr %s32, 8
          %s1304 = smul.addr %s1303, 4
          %s1305 = scalar_lea.hbm %s12, %s1304
          %s1306 = sshll.u32 %s1263, 4
          %s1307 = int_to_ptr.vmem [resolvable:$true] %s1306
          %s1308 = sshll.u32 %s1305, 4
          %s1309 = int_to_ptr.hbm [resolvable:$true] %s1308
          %1314 = dma.vmem_to_hbm [thread:$0]  %s1307, 512, %s1309, %s1260, 64, 64, 4
        $region84: #{tpu_custom_call.1} parent=59 // pred_fallthru
          _
      $region60: #{tpu_custom_call.1} parent=5 // pred_fallthru
        _
      %p1315 = scmp.le.s32.totalorder 2, %s27
      // Predicated region
      $region85: #{tpu_custom_call.1} parent=5 // pred_check
        %p1316 = pneg %p1315
      $region86: #{tpu_custom_call.1} parent=5 // pred_check_branch
        %1318 = sbr.rel (%p1316) target = $region88
      $region87: #{tpu_custom_call.1} parent=5 // pred_region
        %s1319 = ssub.s32 %s27, 2
        // Predicated region
        $region89: #{tpu_custom_call.1} parent=87 // pred_check
          %p1320 = pneg %p271
        $region90: #{tpu_custom_call.1} parent=87 // pred_check_branch
          %1322 = sbr.rel (%p1320) target = $region92
        $region91: #{tpu_custom_call.1} parent=87 // pred_region
          %s1323 = sand.u32 %s256, 1
          %s1324 = scalar_lea.sflag [#allocation4], %s1323
          %s1325 = sand.u32 %s256, 1
          %s1326 = smul.addr %s1325, 64
          %s1327 = scalar_lea.vmem [#allocation8], %s1326
          %1329 = dma.done %s1324, 1024
        $region92: #{tpu_custom_call.1} parent=87 // pred_fallthru
          _
        // Predicated region
        $region93: #{tpu_custom_call.1} parent=87 // pred_check
          %p1330 = pneg %p297
        $region94: #{tpu_custom_call.1} parent=87 // pred_check_branch
          %1332 = sbr.rel (%p1330) target = $region96
        $region95: #{tpu_custom_call.1} parent=87 // pred_region
          %s1333 = sand.u32 %s33, 1
          %s1334 = scalar_lea.sflag [#allocation10], %s1333
          %s1335 = sand.u32 %s282, 1
          %s1336 = smul.addr %s1335, 32
          %s1337 = scalar_lea.vmem [#allocation9], %s1336
          %1339 = dma.done %s1334, 512
        $region96: #{tpu_custom_call.1} parent=87 // pred_fallthru
          _
        // Predicated region
        $region97: #{tpu_custom_call.1} parent=87 // pred_check
          %p1340 = pneg %p323
        $region98: #{tpu_custom_call.1} parent=87 // pred_check_branch
          %1342 = sbr.rel (%p1340) target = $region100
        $region99: #{tpu_custom_call.1} parent=87 // pred_region
          %s1343 = sand.u32 %s33, 1
          %s1344 = scalar_lea.sflag [#allocation10], %s1343
          %s1345 = sand.u32 %s308, 1
          %s1346 = smul.addr %s1345, 32
          %s1347 = scalar_lea.vmem [#allocation11], %s1346
          %1349 = dma.done %s1344, 512
        $region100: #{tpu_custom_call.1} parent=87 // pred_fallthru
          _
      $region88: #{tpu_custom_call.1} parent=5 // pred_fallthru
        _
    $region6: #{tpu_custom_call.1} parent=1 // loop_footer
      %s31 = sadd.s32 1, %s27
    $region7: #{tpu_custom_call.1} parent=1 // loop_footer_branch
      %26 = sbr.rel target = $region3
    $region8: #{tpu_custom_call.1} parent=1 // loop_exit
      _
    %1350 = vsyncpa [#allocation3], 1
    %s1351 = scalar_lea.sflag [#allocation3], 1
    %1352 = vsyncpa %s1351, 1
    %1353 = vsyncpa [#allocation6], 1
    %1354 = vsyncpa [#allocation4], 1
    %s1355 = scalar_lea.sflag [#allocation4], 1
    %1356 = vsyncpa %s1355, 1
    %1357 = vsyncpa [#allocation10], 1
    %s1358 = scalar_lea.sflag [#allocation10], 1
    %1359 = vsyncpa %s1358, 1

// kernel: tpu_custom_call.1
$region0: #{tpu_custom_call.1}
  #allocation0 [shape = 'u32[]', space=smem, size = 0x4, offset = 0x4, fixed_abs, tag = 'smem constant byte address 0x4 - core index']
  #allocation1 [shape = 'u32[72,128]{1,0:T(1,128)}', space=vmem, size = 0x9000, scoped, tag = 'internal scratch']
  %s0 = inlined_call_operand.vmem [shape: f32[2,64,128], index: 0, kind: input, shape index: {}]
  %s1 = inlined_call_operand.vmem [shape: f32[128,32], index: 1, kind: input, shape index: {}]
  %s2 = inlined_call_operand.vmem [shape: f32[1,128], index: 2, kind: input, shape index: {}]
  %s3 = inlined_call_operand.vmem [shape: f32[1,128], index: 3, kind: input, shape index: {}]
  %s4 = inlined_call_operand.hbm [shape: bf16[128,128], index: 4, kind: input, shape index: {}]
  %s5 = inlined_call_operand.vmem [shape: f32[1,128], index: 5, kind: input, shape index: {}]
  %s6 = inlined_call_operand.vmem [shape: f32[1,128], index: 6, kind: input, shape index: {}]
  %s7 = inlined_call_operand.vmem [shape: f32[1,128], index: 7, kind: input, shape index: {}]
  %s8 = inlined_call_operand.hbm [shape: bf16[128,128], index: 8, kind: input, shape index: {}]
  %s9 = inlined_call_operand.hbm [shape: bf16[128,128], index: 9, kind: input, shape index: {}]
  %s10 = inlined_call_operand.hbm [shape: f32[2,64,128], index: 10, kind: output, shape index: {0}]
  %s11 = inlined_call_operand.hbm [shape: bf16[2,64,128], index: 11, kind: output, shape index: {1}]
  %s12 = inlined_call_operand.hbm [shape: bf16[2,64,128], index: 12, kind: output, shape index: {2}]
  %13 = xla_tuple %s10, %s11, %s12
  %s14 = sld [smem:[#allocation0]]
  $region101: #{tpu_custom_call.1} parent=0
    _
  %s16 = ssub.s32 1, %s14
  %s17 = scalar_select 0, %s16, %s14
  $region1: #{tpu_custom_call.1} parent=0
    #allocation2 [shape = 'u8[32768]{0}', space=vmem, size = 0x8000, scoped, tag = 'input window, operand 4, single buffered']
    #allocation3 [shape = 's32[2]{0}', space=sflag, size = 0x8, scoped, tag = 'scoped memory for tpu_custom_call.1']
    #allocation4 [shape = 's32[2]{0}', space=sflag, size = 0x8, scoped, tag = 'scoped memory for tpu_custom_call.1']
    #allocation5 [shape = 'u8[32768]{0}', space=vmem, size = 0x8000, scoped, tag = 'input window, operand 8, single buffered']
    #allocation6 [shape = 's32[1]{0}', space=sflag, size = 0x4, scoped, tag = 'scoped memory for tpu_custom_call.1']
    #allocation7 [shape = 'u8[32768]{0}', space=vmem, size = 0x8000, scoped, tag = 'input window, operand 9, single buffered']
    #allocation8 [shape = 'u8[65536]{0}', space=vmem, size = 0x10000, scoped, tag = 'output window, operand 0']
    #allocation9 [shape = 'u8[32768]{0}', space=vmem, size = 0x8000, scoped, tag = 'output window, operand 1']
    #allocation10 [shape = 's32[2]{0}', space=sflag, size = 0x8, scoped, tag = 'scoped memory for tpu_custom_call.1']
    #allocation11 [shape = 'u8[32768]{0}', space=vmem, size = 0x8000, scoped, tag = 'output window, operand 2']
    %18 = vsyncpa [#allocation3], 0
    %19 = vsyncpa [#allocation6], 0
    %20 = vsyncpa [#allocation4], 0
    %s21 = scalar_lea.sflag [#allocation4], 1
    %22 = vsyncpa %s21, 0
    %23 = vsyncpa [#allocation10], 0
    %s24 = scalar_lea.sflag [#allocation10], 1
    %25 = vsyncpa %s24, 0
    loop: start=0, step=1, limit=4
    $region2: #{tpu_custom_call.1} parent=1 // loop_pre_header
      _
    $region3: #{tpu_custom_call.1} parent=1 // loop_header
      %s27 = sphi 0, %s31
      %p28 = scmp.ge.s32.totalorder %s27, 4
      %s37 = sphi 0, %s39
      %s40 = sphi 0, %s37
      %s41 = sphi 0, %s40
      %s57 = sphi 0, %s41
      %s61 = sphi 0, %s61
      %s63 = sphi 0, %s61
      %s64 = sphi 0, %s63
      %s78 = sphi 0, %s64
      %s82 = sphi 0, %s82
      %s84 = sphi 0, %s82
      %s85 = sphi 0, %s84
      %s99 = sphi 0, %s85
      %s103 = sphi 0, %s103
      %s105 = sphi 0, %s103
      %s106 = sphi 0, %s105
      %s120 = sphi 0, %s106
      %s124 = sphi 0, %s124
      %s126 = sphi 0, %s124
      %s127 = sphi 0, %s126
      %s141 = sphi 0, %s127
      %s145 = sphi 0, %s145
      %s147 = sphi 0, %s145
      %s148 = sphi 0, %s147
      %s162 = sphi 0, %s148
      %s166 = sphi 0, %s166
      %s168 = sphi 0, %s166
      %s169 = sphi 0, %s168
      %s183 = sphi 0, %s169
      %s187 = sphi 0, %s187
      %s189 = sphi 0, %s187
      %s190 = sphi 0, %s189
      %s204 = sphi 0, %s190
      %s208 = sphi 0, %s208
      %s210 = sphi 0, %s208
      %s211 = sphi 0, %s210
      %s225 = sphi 0, %s211
      %s229 = sphi 0, %s229
      %s231 = sphi 0, %s229
      %s232 = sphi 0, %s231
      %s246 = sphi 0, %s232
      %s252 = sphi 0, %s254
      %s255 = sphi 0, %s252
      %s256 = sphi 0, %s255
      %s272 = sphi 0, %s256
      %s278 = sphi 0, %s280
      %s281 = sphi 0, %s278
      %s282 = sphi 0, %s281
      %s298 = sphi 0, %s282
      %s304 = sphi 0, %s306
      %s307 = sphi 0, %s304
      %s308 = sphi 0, %s307
      %s324 = sphi 0, %s308
    $region4: #{tpu_custom_call.1} parent=1 // loop_header_branch
      %30 = sbr.rel (%p28) target = $region8
    $region5: #{tpu_custom_call.1} parent=1 // loop_body
      %s32 = ssub.s32 %s27, 1
      %s33 = ssub.s32 %s27, 2
      %s34 = sadd.s32 %s27, 1
      %s35 = ssub.s32 %s27, %s34
      %p36 = scmp.eq.s32.totalorder %s35, 0
      %s38 = sadd.s32 %s37, 1
      %s39 = scalar_select %p36, %s37, %s38
      %p42 = pneg %p36
      %p43 = scmp.eq.s32.totalorder %s27, 1
      %p44 = por %p42, %p43
      %p45 = scmp.ne.s32.totalorder %s37, %s40
      %p46 = scmp.eq.s32.totalorder %s27, 0
      %p47 = por %p45, %p46
      %p48 = scmp.ne.s32.totalorder %s37, %s40
      %p49 = scmp.eq.s32.totalorder %s32, 1
      %p50 = por %p48, %p49
      %p51 = scmp.ne.s32.totalorder %s40, %s41
      %p52 = scmp.eq.s32.totalorder %s32, 0
      %p53 = por %p51, %p52
      %p54 = scmp.ne.s32.totalorder %s40, %s41
      %p55 = scmp.eq.s32.totalorder %s33, 1
      %p56 = por %p54, %p55
      %p58 = scmp.ne.s32.totalorder %s41, %s57
      %p59 = scmp.eq.s32.totalorder %s33, 0
      %p60 = por %p58, %p59
      %s62 = sadd.s32 %s61, 1
      %p65 = scmp.eq.s32.totalorder %s27, 1
      %p66 = scmp.ne.s32.totalorder %s61, %s63
      %p67 = scmp.eq.s32.totalorder %s27, 0
      %p68 = por %p66, %p67
      %p69 = scmp.ne.s32.totalorder %s61, %s63
      %p70 = scmp.eq.s32.totalorder %s32, 1
      %p71 = por %p69, %p70
      %p72 = scmp.ne.s32.totalorder %s63, %s64
      %p73 = scmp.eq.s32.totalorder %s32, 0
      %p74 = por %p72, %p73
      %p75 = scmp.ne.s32.totalorder %s63, %s64
      %p76 = scmp.eq.s32.totalorder %s33, 1
      %p77 = por %p75, %p76
      %p79 = scmp.ne.s32.totalorder %s64, %s78
      %p80 = scmp.eq.s32.totalorder %s33, 0
      %p81 = por %p79, %p80
      %s83 = sadd.s32 %s82, 1
      %p86 = scmp.eq.s32.totalorder %s27, 1
      %p87 = scmp.ne.s32.totalorder %s82, %s84
      %p88 = scmp.eq.s32.totalorder %s27, 0
      %p89 = por %p87, %p88
      %p90 = scmp.ne.s32.totalorder %s82, %s84
      %p91 = scmp.eq.s32.totalorder %s32, 1
      %p92 = por %p90, %p91
      %p93 = scmp.ne.s32.totalorder %s84, %s85
      %p94 = scmp.eq.s32.totalorder %s32, 0
      %p95 = por %p93, %p94
      %p96 = scmp.ne.s32.totalorder %s84, %s85
      %p97 = scmp.eq.s32.totalorder %s33, 1
      %p98 = por %p96, %p97
      %p100 = scmp.ne.s32.totalorder %s85, %s99
      %p101 = scmp.eq.s32.totalorder %s33, 0
      %p102 = por %p100, %p101
      %s104 = sadd.s32 %s103, 1
      %p107 = scmp.eq.s32.totalorder %s27, 1
      %p108 = scmp.ne.s32.totalorder %s103, %s105
      %p109 = scmp.eq.s32.totalorder %s27, 0
      %p110 = por %p108, %p109
      %p111 = scmp.ne.s32.totalorder %s103, %s105
      %p112 = scmp.eq.s32.totalorder %s32, 1
      %p113 = por %p111, %p112
      %p114 = scmp.ne.s32.totalorder %s105, %s106
      %p115 = scmp.eq.s32.totalorder %s32, 0
      %p116 = por %p114, %p115
      %p117 = scmp.ne.s32.totalorder %s105, %s106
      %p118 = scmp.eq.s32.totalorder %s33, 1
      %p119 = por %p117, %p118
      %p121 = scmp.ne.s32.totalorder %s106, %s120
      %p122 = scmp.eq.s32.totalorder %s33, 0
      %p123 = por %p121, %p122
      %s125 = sadd.s32 %s124, 1
      %p128 = scmp.eq.s32.totalorder %s27, 1
      %p129 = scmp.ne.s32.totalorder %s124, %s126
      %p130 = scmp.eq.s32.totalorder %s27, 0
      %p131 = por %p129, %p130
      %p132 = scmp.ne.s32.totalorder %s124, %s126
      %p133 = scmp.eq.s32.totalorder %s32, 1
      %p134 = por %p132, %p133
      %p135 = scmp.ne.s32.totalorder %s126, %s127
      %p136 = scmp.eq.s32.totalorder %s32, 0
      %p137 = por %p135, %p136
      %p138 = scmp.ne.s32.totalorder %s126, %s127
      %p139 = scmp.eq.s32.totalorder %s33, 1
      %p140 = por %p138, %p139
      %p142 = scmp.ne.s32.totalorder %s127, %s141
      %p143 = scmp.eq.s32.totalorder %s33, 0
      %p144 = por %p142, %p143
      %s146 = sadd.s32 %s145, 1
      %p149 = scmp.eq.s32.totalorder %s27, 1
      %p150 = scmp.ne.s32.totalorder %s145, %s147
      %p151 = scmp.eq.s32.totalorder %s27, 0
      %p152 = por %p150, %p151
      %p153 = scmp.ne.s32.totalorder %s145, %s147
      %p154 = scmp.eq.s32.totalorder %s32, 1
      %p155 = por %p153, %p154
      %p156 = scmp.ne.s32.totalorder %s147, %s148
      %p157 = scmp.eq.s32.totalorder %s32, 0
      %p158 = por %p156, %p157
      %p159 = scmp.ne.s32.totalorder %s147, %s148
      %p160 = scmp.eq.s32.totalorder %s33, 1
      %p161 = por %p159, %p160
      %p163 = scmp.ne.s32.totalorder %s148, %s162
      %p164 = scmp.eq.s32.totalorder %s33, 0
      %p165 = por %p163, %p164
      %s167 = sadd.s32 %s166, 1
      %p170 = scmp.eq.s32.totalorder %s27, 1
      %p171 = scmp.ne.s32.totalorder %s166, %s168
      %p172 = scmp.eq.s32.totalorder %s27, 0
      %p173 = por %p171, %p172
      %p174 = scmp.ne.s32.totalorder %s166, %s168
      %p175 = scmp.eq.s32.totalorder %s32, 1
      %p176 = por %p174, %p175
      %p177 = scmp.ne.s32.totalorder %s168, %s169
      %p178 = scmp.eq.s32.totalorder %s32, 0
      %p179 = por %p177, %p178
      %p180 = scmp.ne.s32.totalorder %s168, %s169
      %p181 = scmp.eq.s32.totalorder %s33, 1
      %p182 = por %p180, %p181
      %p184 = scmp.ne.s32.totalorder %s169, %s183
      %p185 = scmp.eq.s32.totalorder %s33, 0
      %p186 = por %p184, %p185
      %s188 = sadd.s32 %s187, 1
      %p191 = scmp.eq.s32.totalorder %s27, 1
      %p192 = scmp.ne.s32.totalorder %s187, %s189
      %p193 = scmp.eq.s32.totalorder %s27, 0
      %p194 = por %p192, %p193
      %p195 = scmp.ne.s32.totalorder %s187, %s189
      %p196 = scmp.eq.s32.totalorder %s32, 1
      %p197 = por %p195, %p196
      %p198 = scmp.ne.s32.totalorder %s189, %s190
      %p199 = scmp.eq.s32.totalorder %s32, 0
      %p200 = por %p198, %p199
      %p201 = scmp.ne.s32.totalorder %s189, %s190
      %p202 = scmp.eq.s32.totalorder %s33, 1
      %p203 = por %p201, %p202
      %p205 = scmp.ne.s32.totalorder %s190, %s204
      %p206 = scmp.eq.s32.totalorder %s33, 0
      %p207 = por %p205, %p206
      %s209 = sadd.s32 %s208, 1
      %p212 = scmp.eq.s32.totalorder %s27, 1
      %p213 = scmp.ne.s32.totalorder %s208, %s210
      %p214 = scmp.eq.s32.totalorder %s27, 0
      %p215 = por %p213, %p214
      %p216 = scmp.ne.s32.totalorder %s208, %s210
      %p217 = scmp.eq.s32.totalorder %s32, 1
      %p218 = por %p216, %p217
      %p219 = scmp.ne.s32.totalorder %s210, %s211
      %p220 = scmp.eq.s32.totalorder %s32, 0
      %p221 = por %p219, %p220
      %p222 = scmp.ne.s32.totalorder %s210, %s211
      %p223 = scmp.eq.s32.totalorder %s33, 1
      %p224 = por %p222, %p223
      %p226 = scmp.ne.s32.totalorder %s211, %s225
      %p227 = scmp.eq.s32.totalorder %s33, 0
      %p228 = por %p226, %p227
      %s230 = sadd.s32 %s229, 1
      %p233 = scmp.eq.s32.totalorder %s27, 1
      %p234 = scmp.ne.s32.totalorder %s229, %s231
      %p235 = scmp.eq.s32.totalorder %s27, 0
      %p236 = por %p234, %p235
      %p237 = scmp.ne.s32.totalorder %s229, %s231
      %p238 = scmp.eq.s32.totalorder %s32, 1
      %p239 = por %p237, %p238
      %p240 = scmp.ne.s32.totalorder %s231, %s232
      %p241 = scmp.eq.s32.totalorder %s32, 0
      %p242 = por %p240, %p241
      %p243 = scmp.ne.s32.totalorder %s231, %s232
      %p244 = scmp.eq.s32.totalorder %s33, 1
      %p245 = por %p243, %p244
      %p247 = scmp.ne.s32.totalorder %s232, %s246
      %p248 = scmp.eq.s32.totalorder %s33, 0
      %p249 = por %p247, %p248
      %s250 = ssub.s32 %s27, %s34
      %p251 = scmp.eq.s32.totalorder %s250, 0
      %s253 = sadd.s32 %s252, 1
      %s254 = scalar_select %p251, %s252, %s253
      %p257 = pneg %p251
      %p258 = scmp.eq.s32.totalorder %s27, 1
      %p259 = por %p257, %p258
      %p260 = scmp.ne.s32.totalorder %s252, %s255
      %p261 = scmp.eq.s32.totalorder %s27, 0
      %p262 = por %p260, %p261
      %p263 = scmp.ne.s32.totalorder %s252, %s255
      %p264 = scmp.eq.s32.totalorder %s32, 1
      %p265 = por %p263, %p264
      %p266 = scmp.ne.s32.totalorder %s255, %s256
      %p267 = scmp.eq.s32.totalorder %s32, 0
      %p268 = por %p266, %p267
      %p269 = scmp.ne.s32.totalorder %s255, %s256
      %p270 = scmp.eq.s32.totalorder %s33, 1
      %p271 = por %p269, %p270
      %p273 = scmp.ne.s32.totalorder %s256, %s272
      %p274 = scmp.eq.s32.totalorder %s33, 0
      %p275 = por %p273, %p274
      %s276 = ssub.s32 %s27, %s34
      %p277 = scmp.eq.s32.totalorder %s276, 0
      %s279 = sadd.s32 %s278, 1
      %s280 = scalar_select %p277, %s278, %s279
      %p283 = pneg %p277
      %p284 = scmp.eq.s32.totalorder %s27, 1
      %p285 = por %p283, %p284
      %p286 = scmp.ne.s32.totalorder %s278, %s281
      %p287 = scmp.eq.s32.totalorder %s27, 0
      %p288 = por %p286, %p287
      %p289 = scmp.ne.s32.totalorder %s278, %s281
      %p290 = scmp.eq.s32.totalorder %s32, 1
      %p291 = por %p289, %p290
      %p292 = scmp.ne.s32.totalorder %s281, %s282
      %p293 = scmp.eq.s32.totalorder %s32, 0
      %p294 = por %p292, %p293
      %p295 = scmp.ne.s32.totalorder %s281, %s282
      %p296 = scmp.eq.s32.totalorder %s33, 1
      %p297 = por %p295, %p296
      %p299 = scmp.ne.s32.totalorder %s282, %s298
      %p300 = scmp.eq.s32.totalorder %s33, 0
      %p301 = por %p299, %p300
      %s302 = ssub.s32 %s27, %s34
      %p303 = scmp.eq.s32.totalorder %s302, 0
      %s305 = sadd.s32 %s304, 1
      %s306 = scalar_select %p303, %s304, %s305
      %p309 = pneg %p303
      %p310 = scmp.eq.s32.totalorder %s27, 1
      %p311 = por %p309, %p310
      %p312 = scmp.ne.s32.totalorder %s304, %s307
      %p313 = scmp.eq.s32.totalorder %s27, 0
      %p314 = por %p312, %p313
      %p315 = scmp.ne.s32.totalorder %s304, %s307
      %p316 = scmp.eq.s32.totalorder %s32, 1
      %p317 = por %p315, %p316
      %p318 = scmp.ne.s32.totalorder %s307, %s308
      %p319 = scmp.eq.s32.totalorder %s32, 0
      %p320 = por %p318, %p319
      %p321 = scmp.ne.s32.totalorder %s307, %s308
      %p322 = scmp.eq.s32.totalorder %s33, 1
      %p323 = por %p321, %p322
      %p325 = scmp.ne.s32.totalorder %s308, %s324
      %p326 = scmp.eq.s32.totalorder %s33, 0
      %p327 = por %p325, %p326
      %p328 = scmp.le.s32.totalorder 1, %s27
      %p329 = scmp.lt.s32.totalorder %s27, 3
      %p330 = pnand %p328, %p329
      %p331 = pneg %p330
      // Predicated region
      $region9: #{tpu_custom_call.1} parent=5 // pred_check
        _
      $region10: #{tpu_custom_call.1} parent=5 // pred_check_branch
        %333 = sbr.rel (%p330) target = $region12
      $region11: #{tpu_custom_call.1} parent=5 // pred_region
        %s334 = ssub.s32 %s27, 1
        // Predicated region
        $region13: #{tpu_custom_call.1} parent=11 // pred_check
          %p335 = pneg %p74
        $region14: #{tpu_custom_call.1} parent=11 // pred_check_branch
          %337 = sbr.rel (%p335) target = $region16
        $region15: #{tpu_custom_call.1} parent=11 // pred_region
          _
        $region16: #{tpu_custom_call.1} parent=11 // pred_fallthru
          _
        // Predicated region
        $region17: #{tpu_custom_call.1} parent=11 // pred_check
          %p338 = pneg %p95
        $region18: #{tpu_custom_call.1} parent=11 // pred_check_branch
          %340 = sbr.rel (%p338) target = $region20
        $region19: #{tpu_custom_call.1} parent=11 // pred_region
          _
        $region20: #{tpu_custom_call.1} parent=11 // pred_fallthru
          _
        // Predicated region
        $region21: #{tpu_custom_call.1} parent=11 // pred_check
          %p341 = pneg %p116
        $region22: #{tpu_custom_call.1} parent=11 // pred_check_branch
          %343 = sbr.rel (%p341) target = $region24
        $region23: #{tpu_custom_call.1} parent=11 // pred_region
          _
        $region24: #{tpu_custom_call.1} parent=11 // pred_fallthru
          _
        // Predicated region
        $region25: #{tpu_custom_call.1} parent=11 // pred_check
          %p344 = pneg %p137
        $region26: #{tpu_custom_call.1} parent=11 // pred_check_branch
          %346 = sbr.rel (%p344) target = $region28
        $region27: #{tpu_custom_call.1} parent=11 // pred_region
          %348 = vsyncadd [#allocation3], 0
          %s349 = sshll.u32 %s4, 4
          %s350 = int_to_ptr.hbm [resolvable:$true] %s349
          %s351 = sshll.u32 [#allocation2], 4
          %s352 = int_to_ptr.vmem [resolvable:$true] %s351
          %357 = dma.hbm_to_vmem [thread:$0]  %s350, 1024, %s352, [#allocation3], 64, 64, 4
        $region28: #{tpu_custom_call.1} parent=11 // pred_fallthru
          _
        // Predicated region
        $region29: #{tpu_custom_call.1} parent=11 // pred_check
          %p358 = pneg %p158
        $region30: #{tpu_custom_call.1} parent=11 // pred_check_branch
          %360 = sbr.rel (%p358) target = $region32
        $region31: #{tpu_custom_call.1} parent=11 // pred_region
          _
        $region32: #{tpu_custom_call.1} parent=11 // pred_fallthru
          _
        // Predicated region
        $region33: #{tpu_custom_call.1} parent=11 // pred_check
          %p361 = pneg %p179
        $region34: #{tpu_custom_call.1} parent=11 // pred_check_branch
          %363 = sbr.rel (%p361) target = $region36
        $region35: #{tpu_custom_call.1} parent=11 // pred_region
          _
        $region36: #{tpu_custom_call.1} parent=11 // pred_fallthru
          _
        // Predicated region
        $region37: #{tpu_custom_call.1} parent=11 // pred_check
          %p364 = pneg %p200
        $region38: #{tpu_custom_call.1} parent=11 // pred_check_branch
          %366 = sbr.rel (%p364) target = $region40
        $region39: #{tpu_custom_call.1} parent=11 // pred_region
          _
        $region40: #{tpu_custom_call.1} parent=11 // pred_fallthru
          _
        // Predicated region
        $region41: #{tpu_custom_call.1} parent=11 // pred_check
          %p367 = pneg %p221
        $region42: #{tpu_custom_call.1} parent=11 // pred_check_branch
          %369 = sbr.rel (%p367) target = $region44
        $region43: #{tpu_custom_call.1} parent=11 // pred_region
          %371 = vsyncadd [#allocation6], 0
          %s372 = sshll.u32 %s8, 4
          %s373 = int_to_ptr.hbm [resolvable:$true] %s372
          %s374 = sshll.u32 [#allocation5], 4
          %s375 = int_to_ptr.vmem [resolvable:$true] %s374
          %380 = dma.hbm_to_vmem [thread:$0]  %s373, 1024, %s375, [#allocation6], 64, 64, 4
        $region44: #{tpu_custom_call.1} parent=11 // pred_fallthru
          _
        // Predicated region
        $region45: #{tpu_custom_call.1} parent=11 // pred_check
          %p381 = pneg %p242
        $region46: #{tpu_custom_call.1} parent=11 // pred_check_branch
          %383 = sbr.rel (%p381) target = $region48
        $region47: #{tpu_custom_call.1} parent=11 // pred_region
          %385 = vsyncadd [#allocation6], 0
          %s386 = sshll.u32 %s9, 4
          %s387 = int_to_ptr.hbm [resolvable:$true] %s386
          %s388 = sshll.u32 [#allocation7], 4
          %s389 = int_to_ptr.vmem [resolvable:$true] %s388
          %394 = dma.hbm_to_vmem [thread:$0]  %s387, 1024, %s389, [#allocation6], 64, 64, 4
        $region48: #{tpu_custom_call.1} parent=11 // pred_fallthru
          _
      $region12: #{tpu_custom_call.1} parent=5 // pred_fallthru
        _
      %p395 = scmp.lt.s32.totalorder %s27, 2
      // Predicated region
      $region49: #{tpu_custom_call.1} parent=5 // pred_check
        %p396 = pneg %p395
      $region50: #{tpu_custom_call.1} parent=5 // pred_check_branch
        %398 = sbr.rel (%p396) target = $region52
      $region51: #{tpu_custom_call.1} parent=5 // pred_region
        // Predicated region
        $region53: #{tpu_custom_call.1} parent=51 // pred_check
          %p399 = pneg %p47
        $region54: #{tpu_custom_call.1} parent=51 // pred_check_branch
          %401 = sbr.rel (%p399) target = $region56
        $region55: #{tpu_custom_call.1} parent=51 // pred_region
          %p402 = scmp.lt.s32.totalorder %s27, 1
          %s403 = scalar_select %p402, %s27, 1
          %s404 = smul.addr %s403, 8
          %s405 = smul.addr %s404, 8
          %s406 = scalar_lea.vmem %s0, %s405
        $region56: #{tpu_custom_call.1} parent=51 // pred_fallthru
          _
      $region52: #{tpu_custom_call.1} parent=5 // pred_fallthru
        _
      %p407 = scmp.le.s32.totalorder 1, %s27
      %p408 = scmp.lt.s32.totalorder %s27, 3
      %p409 = pnand %p407, %p408
      %p410 = pneg %p409
      // Predicated region
      $region57: #{tpu_custom_call.1} parent=5 // pred_check
        _
      $region58: #{tpu_custom_call.1} parent=5 // pred_check_branch
        %412 = sbr.rel (%p409) target = $region60
      $region59: #{tpu_custom_call.1} parent=5 // pred_region
        %s413 = ssub.s32 %s27, 1
        // Predicated region
        $region61: #{tpu_custom_call.1} parent=59 // pred_check
          %p414 = pneg %p137
        $region62: #{tpu_custom_call.1} parent=59 // pred_check_branch
          %416 = sbr.rel (%p414) target = $region64
        $region63: #{tpu_custom_call.1} parent=59 // pred_region
          %418 = dma.done [#allocation3], 1024
        $region64: #{tpu_custom_call.1} parent=59 // pred_fallthru
          _
        // Predicated region
        $region65: #{tpu_custom_call.1} parent=59 // pred_check
          %p419 = pneg %p221
        $region66: #{tpu_custom_call.1} parent=59 // pred_check_branch
          %421 = sbr.rel (%p419) target = $region68
        $region67: #{tpu_custom_call.1} parent=59 // pred_region
          %423 = dma.done [#allocation6], 1024
        $region68: #{tpu_custom_call.1} parent=59 // pred_fallthru
          _
        // Predicated region
        $region69: #{tpu_custom_call.1} parent=59 // pred_check
          %p424 = pneg %p242
        $region70: #{tpu_custom_call.1} parent=59 // pred_check_branch
          %426 = sbr.rel (%p424) target = $region72
        $region71: #{tpu_custom_call.1} parent=59 // pred_region
          %428 = dma.done [#allocation6], 1024
        $region72: #{tpu_custom_call.1} parent=59 // pred_fallthru
          _
        %p429 = scmp.lt.s32.totalorder %s32, 1
        %s430 = scalar_select %p429, %s32, 1
        %s431 = smul.addr %s430, 8
        %s432 = smul.addr %s431, 8
        %s433 = scalar_lea.vmem %s0, %s432
        %p434 = pneg %p53
        %p435 = pneg %p50
        %p436 = pneg %p74
        %p437 = pneg %p71
        %p438 = pneg %p95
        %p439 = pneg %p92
        %p440 = pneg %p116
        %p441 = pneg %p113
        %p442 = pneg %p137
        %p443 = pneg %p134
        %p444 = pneg %p158
        %p445 = pneg %p155
        %p446 = pneg %p179
        %p447 = pneg %p176
        %p448 = pneg %p200
        %p449 = pneg %p197
        %p450 = pneg %p221
        %p451 = pneg %p218
        %p452 = pneg %p242
        %p453 = pneg %p239
        %p454 = pneg %p268
        %p455 = pneg %p265
        %s456 = sand.u32 %s255, 1
        %s457 = scalar_lea.sflag [#allocation4], %s456
        %s458 = sand.u32 %s255, 1
        %s459 = smul.addr %s458, 64
        %s460 = scalar_lea.vmem [#allocation8], %s459
        %p461 = pneg %p294
        %p462 = pneg %p291
        %s463 = sand.u32 %s32, 1
        %s464 = scalar_lea.sflag [#allocation10], %s463
        %s465 = sand.u32 %s281, 1
        %s466 = smul.addr %s465, 32
        %s467 = scalar_lea.vmem [#allocation9], %s466
        %p468 = pneg %p320
        %p469 = pneg %p317
        %s470 = sand.u32 %s32, 1
        %s471 = scalar_lea.sflag [#allocation10], %s470
        %s472 = sand.u32 %s307, 1
        %s473 = smul.addr %s472, 32
        %s474 = scalar_lea.vmem [#allocation11], %s473
        %p475 = scmp.lt.s32.totalorder %s32, 1
        %s476 = scalar_select %p475, %s32, 1
        %s477 = smul.addr %s476, 8
        %s478 = smul.addr %s477, 8
        %s479 = scalar_lea.vmem %s0, %s478
        %v480 = vld [vmem:[%s479] sm:$0xff]
        %v481 = vld [vmem:[%s479 + $0x8] sm:$0xff]
        %v482 = vld [vmem:[%s479 + $0x10] sm:$0xff]
        %v483 = vld [vmem:[%s479 + $0x18] sm:$0xff]
        %v484 = vld [vmem:[%s479 + $0x20] sm:$0xff]
        %v485 = vld [vmem:[%s479 + $0x28] sm:$0xff]
        %v486 = vld [vmem:[%s479 + $0x30] sm:$0xff]
        %v487 = vld [vmem:[%s479 + $0x38] sm:$0xff]
        %v488 = vld [vmem:[%s1] sm:$0xff]
        %v489 = vld [vmem:[%s1 + $0x8] sm:$0xff]
        %v490 = vld [vmem:[%s1 + $0x10] sm:$0xff]
        %v491 = vld [vmem:[%s1 + $0x18] sm:$0xff]
        %v492 = vld [vmem:[%s1 + $0x20] sm:$0xff]
        %v493 = vld [vmem:[%s1 + $0x28] sm:$0xff]
        %v494 = vld [vmem:[%s1 + $0x30] sm:$0xff]
        %v495 = vld [vmem:[%s1 + $0x38] sm:$0xff]
        %v496 = vld [vmem:[%s1 + $0x40] sm:$0xff]
        %v497 = vld [vmem:[%s1 + $0x48] sm:$0xff]
        %v498 = vld [vmem:[%s1 + $0x50] sm:$0xff]
        %v499 = vld [vmem:[%s1 + $0x58] sm:$0xff]
        %v500 = vld [vmem:[%s1 + $0x60] sm:$0xff]
        %v501 = vld [vmem:[%s1 + $0x68] sm:$0xff]
        %v502 = vld [vmem:[%s1 + $0x70] sm:$0xff]
        %v503 = vld [vmem:[%s1 + $0x78] sm:$0xff]
        %v504 = vadd.f32 %v480, %v481
        %v505 = vadd.f32 %v504, %v482
        %v506 = vadd.f32 %v505, %v483
        %v507 = vadd.f32 %v506, %v484
        %v508 = vadd.f32 %v507, %v485
        %v509 = vadd.f32 %v508, %v486
        %v510 = vadd.f32 %v509, %v487
        %v511 = vrot.slane %v510, 4
        %v512 = vadd.f32 %v510, %v511
        %v513 = vrot.slane %v512, 2
        %v514 = vadd.f32 %v512, %v513
        %v515 = vrot.slane %v514, 1
        %v516 = vadd.f32 %v514, %v515
        %517 = vmatpush.msra.mxu0 %v503
        %518 = vmatpush.msra.mxu0 %v502
        %519 = vmatpush.msra.mxu0 %v501
        %520 = vmatpush.msra.mxu0 %v500
        %521 = vmatpush.msra.mxu0 %v499
        %522 = vmatpush.msra.mxu0 %v498
        %523 = vmatpush.msra.mxu0 %v497
        %524 = vmatpush.msra.mxu0 %v496
        %525 = vmatpush.msra.mxu0 %v495
        %526 = vmatpush.msra.mxu0 %v494
        %527 = vmatpush.msra.mxu0 %v493
        %528 = vmatpush.msra.mxu0 %v492
        %529 = vmatpush.msra.mxu0 %v491
        %530 = vmatpush.msra.mxu0 %v490
        %531 = vmatpush.msra.mxu0 %v489
        %532 = vmatpush.msra.mxu0 %v488
        %533 = vmatmul.f32.gmra.mxu0 %v516
        %v534 = vpop.f32.mrf.mxu0
        %v535 = vadd.f32 0.0, %v534
        %536 = vdwg.mxu0
        %v537 = vmul.f32 %v535, 0.00390625
        %vm538 = vcmask 261120
        %v540 = vsel %vm538, %v537, 0
        %v543 = vsel %vm538, %v488, 0
        %v546 = vsel %vm538, %v489, 0
        %v549 = vsel %vm538, %v490, 0
        %v552 = vsel %vm538, %v491, 0
        %v555 = vsel %vm538, %v492, 0
        %v558 = vsel %vm538, %v493, 0
        %v561 = vsel %vm538, %v494, 0
        %v564 = vsel %vm538, %v495, 0
        %v567 = vsel %vm538, %v496, 0
        %v570 = vsel %vm538, %v497, 0
        %v573 = vsel %vm538, %v498, 0
        %v576 = vsel %vm538, %v499, 0
        %v579 = vsel %vm538, %v500, 0
        %v582 = vsel %vm538, %v501, 0
        %v585 = vsel %vm538, %v502, 0
        %v588 = vsel %vm538, %v503, 0
        %590 = vmatpush.xpose.msra.mxu0 %v588
        %591 = vmatpush.xpose.msra.mxu0 %v585
        %592 = vmatpush.xpose.msra.mxu0 %v582
        %593 = vmatpush.xpose.msra.mxu0 %v579
        %594 = vmatpush.xpose.msra.mxu0 %v576
        %595 = vmatpush.xpose.msra.mxu0 %v573
        %596 = vmatpush.xpose.msra.mxu0 %v570
        %597 = vmatpush.xpose.msra.mxu0 %v567
        %598 = vmatpush.xpose.msra.mxu0 %v564
        %599 = vmatpush.xpose.msra.mxu0 %v561
        %600 = vmatpush.xpose.msra.mxu0 %v558
        %601 = vmatpush.xpose.msra.mxu0 %v555
        %602 = vmatpush.xpose.msra.mxu0 %v552
        %603 = vmatpush.xpose.msra.mxu0 %v549
        %604 = vmatpush.xpose.msra.mxu0 %v546
        %605 = vmatpush.xpose.msra.mxu0 %v543
        %606 = vmatmul.f32.gmra.mxu0 %v540
        %v607 = vpop.f32.mrf.mxu0
        %v608 = vadd.f32 0.0, %v607
        %609 = vdwg.mxu0
        %v610 = vperm.slane %v608, 0
        %v611 = vsub.f32 %v480, %v610
        %v612 = vsub.f32 %v481, %v610
        %v613 = vsub.f32 %v482, %v610
        %v614 = vsub.f32 %v483, %v610
        %v615 = vsub.f32 %v484, %v610
        %v616 = vsub.f32 %v485, %v610
        %v617 = vsub.f32 %v486, %v610
        %v618 = vsub.f32 %v487, %v610
        %v619 = vmul.f32 %v611, %v611
        %v620 = vmul.f32 %v612, %v612
        %v621 = vmul.f32 %v613, %v613
        %v622 = vmul.f32 %v614, %v614
        %v623 = vmul.f32 %v615, %v615
        %v624 = vmul.f32 %v616, %v616
        %v625 = vmul.f32 %v617, %v617
        %v626 = vmul.f32 %v618, %v618
        %v627 = vadd.f32 %v619, %v620
        %v628 = vadd.f32 %v627, %v621
        %v629 = vadd.f32 %v628, %v622
        %v630 = vadd.f32 %v629, %v623
        %v631 = vadd.f32 %v630, %v624
        %v632 = vadd.f32 %v631, %v625
        %v633 = vadd.f32 %v632, %v626
        %v634 = vrot.slane %v633, 4
        %v635 = vadd.f32 %v633, %v634
        %v636 = vrot.slane %v635, 2
        %v637 = vadd.f32 %v635, %v636
        %v638 = vrot.slane %v637, 1
        %v639 = vadd.f32 %v637, %v638
        %640 = vmatpush.msra.mxu0 %v503
        %641 = vmatpush.msra.mxu0 %v502
        %642 = vmatpush.msra.mxu0 %v501
        %643 = vmatpush.msra.mxu0 %v500
        %644 = vmatpush.msra.mxu0 %v499
        %645 = vmatpush.msra.mxu0 %v498
        %646 = vmatpush.msra.mxu0 %v497
        %647 = vmatpush.msra.mxu0 %v496
        %648 = vmatpush.msra.mxu0 %v495
        %649 = vmatpush.msra.mxu0 %v494
        %650 = vmatpush.msra.mxu0 %v493
        %651 = vmatpush.msra.mxu0 %v492
        %652 = vmatpush.msra.mxu0 %v491
        %653 = vmatpush.msra.mxu0 %v490
        %654 = vmatpush.msra.mxu0 %v489
        %655 = vmatpush.msra.mxu0 %v488
        %656 = vmatmul.f32.gmra.mxu0 %v639
        %v657 = vpop.f32.mrf.mxu0
        %v658 = vadd.f32 0.0, %v657
        %659 = vdwg.mxu0
        %v660 = vmul.f32 %v658, 0.00390625
        %v662 = vsel %vm538, %v660, 0
        %664 = vmatpush.xpose.msra.mxu0 %v588
        %665 = vmatpush.xpose.msra.mxu0 %v585
        %666 = vmatpush.xpose.msra.mxu0 %v582
        %667 = vmatpush.xpose.msra.mxu0 %v579
        %668 = vmatpush.xpose.msra.mxu0 %v576
        %669 = vmatpush.xpose.msra.mxu0 %v573
        %670 = vmatpush.xpose.msra.mxu0 %v570
        %671 = vmatpush.xpose.msra.mxu0 %v567
        %672 = vmatpush.xpose.msra.mxu0 %v564
        %673 = vmatpush.xpose.msra.mxu0 %v561
        %674 = vmatpush.xpose.msra.mxu0 %v558
        %675 = vmatpush.xpose.msra.mxu0 %v555
        %676 = vmatpush.xpose.msra.mxu0 %v552
        %677 = vmatpush.xpose.msra.mxu0 %v549
        %678 = vmatpush.xpose.msra.mxu0 %v546
        %679 = vmatpush.xpose.msra.mxu0 %v543
        %680 = vmatmul.f32.gmra.mxu0 %v662
        %v681 = vpop.f32.mrf.mxu0
        %v682 = vadd.f32 1e-06, %v681
        %683 = vdwg.mxu0
        %v684 = vrsqrt.pop %v682
        %v685 = vmul.f32 %v684, %v682
        %v686 = vmul.f32 %v685, %v684
        %v687 = vmul.f32 0.5, %v686
        %v688 = vsub.f32 1.5, %v687
        %v689 = vmul.f32 %v684, %v688
        %vm690 = vweird.f32 %v682
        %vm691 = vweird.f32 %v684
        %vm692 = vmor %vm690, %vm691
        %v693 = vsel %vm692, %v684, %v689
        %v694 = vperm.slane %v693, 0
        %v695 = vmul.f32 %v611, %v694
        %v696 = vmul.f32 %v612, %v694
        %v697 = vmul.f32 %v613, %v694
        %v698 = vmul.f32 %v614, %v694
        %v699 = vmul.f32 %v615, %v694
        %v700 = vmul.f32 %v616, %v694
        %v701 = vmul.f32 %v617, %v694
        %v702 = vmul.f32 %v618, %v694
        %v703 = vld [vmem:[%s2] sm:$0x1]
        %v705 = vperm.slane %v703, 0
        %v707 = vmul.f32 %v695, %v705
        %v708 = vmul.f32 %v696, %v705
        %v709 = vmul.f32 %v697, %v705
        %v710 = vmul.f32 %v698, %v705
        %v711 = vmul.f32 %v699, %v705
        %v712 = vmul.f32 %v700, %v705
        %v713 = vmul.f32 %v701, %v705
        %v714 = vmul.f32 %v702, %v705
        %v715 = vld [vmem:[%s3] sm:$0x1]
        %v717 = vperm.slane %v715, 0
        %v719 = vadd.f32 %v707, %v717
        %v720 = vadd.f32 %v708, %v717
        %v721 = vadd.f32 %v709, %v717
        %v722 = vadd.f32 %v710, %v717
        %v723 = vadd.f32 %v711, %v717
        %v724 = vadd.f32 %v712, %v717
        %v725 = vadd.f32 %v713, %v717
        %v726 = vadd.f32 %v714, %v717
        %v727 = vpack.c.bf16 %v720, %v719
        %v728 = vpack.c.bf16 %v722, %v721
        %v729 = vpack.c.bf16 %v724, %v723
        %v730 = vpack.c.bf16 %v726, %v725
        %v731 = vld [vmem:[#allocation2] sm:$0xf]
        %v732 = vld [vmem:[#allocation2 + $0x4] sm:$0xf]
        %v733 = vld [vmem:[#allocation2 + $0x8] sm:$0xf]
        %v734 = vld [vmem:[#allocation2 + $0xc] sm:$0xf]
        %v735 = vld [vmem:[#allocation2 + $0x10] sm:$0xf]
        %v736 = vld [vmem:[#allocation2 + $0x14] sm:$0xf]
        %v737 = vld [vmem:[#allocation2 + $0x18] sm:$0xf]
        %v738 = vld [vmem:[#allocation2 + $0x1c] sm:$0xf]
        %v739 = vld [vmem:[#allocation2 + $0x20] sm:$0xf]
        %v740 = vld [vmem:[#allocation2 + $0x24] sm:$0xf]
        %v741 = vld [vmem:[#allocation2 + $0x28] sm:$0xf]
        %v742 = vld [vmem:[#allocation2 + $0x2c] sm:$0xf]
        %v743 = vld [vmem:[#allocation2 + $0x30] sm:$0xf]
        %v744 = vld [vmem:[#allocation2 + $0x34] sm:$0xf]
        %v745 = vld [vmem:[#allocation2 + $0x38] sm:$0xf]
        %v746 = vld [vmem:[#allocation2 + $0x3c] sm:$0xf]
        %v747 = vld [vmem:[%s5] sm:$0x1]
        %v749 = vperm.slane %v747, 0
        %v767 = vunpack.c.l.b16 %v731
        %v768 = vunpack.c.l.b16 %v732
        %v769 = vunpack.c.l.b16 %v733
        %v770 = vunpack.c.l.b16 %v734
        %v771 = vunpack.c.l.b16 %v735
        %v772 = vunpack.c.l.b16 %v736
        %v773 = vunpack.c.l.b16 %v737
        %v774 = vunpack.c.l.b16 %v738
        %v775 = vunpack.c.l.b16 %v739
        %v776 = vunpack.c.l.b16 %v740
        %v777 = vunpack.c.l.b16 %v741
        %v778 = vunpack.c.l.b16 %v742
        %v779 = vunpack.c.l.b16 %v743
        %v780 = vunpack.c.l.b16 %v744
        %v781 = vunpack.c.l.b16 %v745
        %v782 = vunpack.c.l.b16 %v746
        %v783 = vpack.c.b16 %v768, %v767
        %v784 = vpack.c.b16 %v770, %v769
        %v785 = vpack.c.b16 %v772, %v771
        %v786 = vpack.c.b16 %v774, %v773
        %v787 = vpack.c.b16 %v776, %v775
        %v788 = vpack.c.b16 %v778, %v777
        %v789 = vpack.c.b16 %v780, %v779
        %v790 = vpack.c.b16 %v782, %v781
        %799 = vmatpush.bf16.msra.mxu0 %v790
        %800 = vmatpush.bf16.msra.mxu0 %v789
        %801 = vmatpush.bf16.msra.mxu0 %v788
        %802 = vmatpush.bf16.msra.mxu0 %v787
        %803 = vmatpush.bf16.msra.mxu0 %v786
        %804 = vmatpush.bf16.msra.mxu0 %v785
        %805 = vmatpush.bf16.msra.mxu0 %v784
        %806 = vmatpush.bf16.msra.mxu0 %v783
        %807 = vmatmul.bf16.gmra.mxu0 %v727
        %v808 = vpop.f32.mrf.mxu0
        %v809 = vadd.f32 %v749, %v808
        %v810 = vpop.f32.mrf.mxu0
        %v811 = vadd.f32 %v749, %v810
        %812 = vmatmul.bf16.gmra.mxu0 %v728
        %v813 = vpop.f32.mrf.mxu0
        %v814 = vadd.f32 %v749, %v813
        %v815 = vpop.f32.mrf.mxu0
        %v816 = vadd.f32 %v749, %v815
        %817 = vmatmul.bf16.gmra.mxu0 %v729
        %v818 = vpop.f32.mrf.mxu0
        %v819 = vadd.f32 %v749, %v818
        %v820 = vpop.f32.mrf.mxu0
        %v821 = vadd.f32 %v749, %v820
        %822 = vmatmul.bf16.gmra.mxu0 %v730
        %v823 = vpop.f32.mrf.mxu0
        %v824 = vadd.f32 %v749, %v823
        %v825 = vpop.f32.mrf.mxu0
        %v826 = vadd.f32 %v749, %v825
        %827 = vdwg.mxu0
        %828 = vst [vmem:[%s460] sm:$0xff] %v809
        %829 = vst [vmem:[%s460 + $0x8] sm:$0xff] %v811
        %830 = vst [vmem:[%s460 + $0x10] sm:$0xff] %v814
        %831 = vst [vmem:[%s460 + $0x18] sm:$0xff] %v816
        %832 = vst [vmem:[%s460 + $0x20] sm:$0xff] %v819
        %833 = vst [vmem:[%s460 + $0x28] sm:$0xff] %v821
        %834 = vst [vmem:[%s460 + $0x30] sm:$0xff] %v824
        %835 = vst [vmem:[%s460 + $0x38] sm:$0xff] %v826
        %v836 = vld [vmem:[%s6] sm:$0x1]
        %v837 = vld [vmem:[%s7] sm:$0x1]
        %838 = vadd.xlane.f32.xlu0 %v809
        %v839 = vpop.xlane.xlu0 %838
        %840 = vadd.xlane.f32.xlu0 %v811
        %v841 = vpop.xlane.xlu0 %840
        %842 = vadd.xlane.f32.xlu0 %v814
        %v843 = vpop.xlane.xlu0 %842
        %844 = vadd.xlane.f32.xlu0 %v816
        %v845 = vpop.xlane.xlu0 %844
        %846 = vadd.xlane.f32.xlu0 %v819
        %v847 = vpop.xlane.xlu0 %846
        %848 = vadd.xlane.f32.xlu0 %v821
        %v849 = vpop.xlane.xlu0 %848
        %850 = vadd.xlane.f32.xlu0 %v824
        %v851 = vpop.xlane.xlu0 %850
        %852 = vadd.xlane.f32.xlu0 %v826
        %v853 = vpop.xlane.xlu0 %852
        %v854 = vrcp.pop 128.0
        %v855 = vmul.f32 128.0, %v854
        %v856 = vsub.f32 1.0, %v855
        %v857 = vmul.f32 %v854, %v856
        %v858 = vadd.f32 %v854, %v857
        %vm859 = vweird.f32 %v854
        %v860 = vsel %vm859, %v854, %v858
        %v861 = vmul.f32 %v839, %v860
        %v862 = vmul.f32 %v841, %v860
        %v863 = vmul.f32 %v843, %v860
        %v864 = vmul.f32 %v845, %v860
        %v865 = vmul.f32 %v847, %v860
        %v866 = vmul.f32 %v849, %v860
        %v867 = vmul.f32 %v851, %v860
        %v868 = vmul.f32 %v853, %v860
        %v869 = vsub.f32 %v809, %v861
        %v870 = vsub.f32 %v811, %v862
        %v871 = vsub.f32 %v814, %v863
        %v872 = vsub.f32 %v816, %v864
        %v873 = vsub.f32 %v819, %v865
        %v874 = vsub.f32 %v821, %v866
        %v875 = vsub.f32 %v824, %v867
        %v876 = vsub.f32 %v826, %v868
        %v877 = vmul.f32 %v869, %v869
        %v878 = vmul.f32 %v870, %v870
        %v879 = vmul.f32 %v871, %v871
        %v880 = vmul.f32 %v872, %v872
        %v881 = vmul.f32 %v873, %v873
        %v882 = vmul.f32 %v874, %v874
        %v883 = vmul.f32 %v875, %v875
        %v884 = vmul.f32 %v876, %v876
        %885 = vadd.xlane.f32.xlu0 %v877
        %v886 = vpop.xlane.xlu0 %885
        %887 = vadd.xlane.f32.xlu0 %v878
        %v888 = vpop.xlane.xlu0 %887
        %889 = vadd.xlane.f32.xlu0 %v879
        %v890 = vpop.xlane.xlu0 %889
        %891 = vadd.xlane.f32.xlu0 %v880
        %v892 = vpop.xlane.xlu0 %891
        %893 = vadd.xlane.f32.xlu0 %v881
        %v894 = vpop.xlane.xlu0 %893
        %895 = vadd.xlane.f32.xlu0 %v882
        %v896 = vpop.xlane.xlu0 %895
        %897 = vadd.xlane.f32.xlu0 %v883
        %v898 = vpop.xlane.xlu0 %897
        %899 = vadd.xlane.f32.xlu0 %v884
        %v900 = vpop.xlane.xlu0 %899
        %v901 = vmul.f32 %v886, %v860
        %v902 = vmul.f32 %v888, %v860
        %v903 = vmul.f32 %v890, %v860
        %v904 = vmul.f32 %v892, %v860
        %v905 = vmul.f32 %v894, %v860
        %v906 = vmul.f32 %v896, %v860
        %v907 = vmul.f32 %v898, %v860
        %v908 = vmul.f32 %v900, %v860
        %v909 = vadd.f32 %v901, 1e-05
        %v910 = vadd.f32 %v902, 1e-05
        %v911 = vadd.f32 %v903, 1e-05
        %v912 = vadd.f32 %v904, 1e-05
        %v913 = vadd.f32 %v905, 1e-05
        %v914 = vadd.f32 %v906, 1e-05
        %v915 = vadd.f32 %v907, 1e-05
        %v916 = vadd.f32 %v908, 1e-05
        %v917 = vrsqrt.pop %v909
        %v918 = vmul.f32 %v917, %v909
        %v919 = vmul.f32 %v918, %v917
        %v920 = vmul.f32 0.5, %v919
        %v921 = vsub.f32 1.5, %v920
        %v922 = vmul.f32 %v917, %v921
        %vm923 = vweird.f32 %v909
        %vm924 = vweird.f32 %v917
        %vm925 = vmor %vm923, %vm924
        %v926 = vsel %vm925, %v917, %v922
        %v927 = vrsqrt.pop %v910
        %v928 = vmul.f32 %v927, %v910
        %v929 = vmul.f32 %v928, %v927
        %v930 = vmul.f32 0.5, %v929
        %v931 = vsub.f32 1.5, %v930
        %v932 = vmul.f32 %v927, %v931
        %vm933 = vweird.f32 %v910
        %vm934 = vweird.f32 %v927
        %vm935 = vmor %vm933, %vm934
        %v936 = vsel %vm935, %v927, %v932
        %v937 = vrsqrt.pop %v911
        %v938 = vmul.f32 %v937, %v911
        %v939 = vmul.f32 %v938, %v937
        %v940 = vmul.f32 0.5, %v939
        %v941 = vsub.f32 1.5, %v940
        %v942 = vmul.f32 %v937, %v941
        %vm943 = vweird.f32 %v911
        %vm944 = vweird.f32 %v937
        %vm945 = vmor %vm943, %vm944
        %v946 = vsel %vm945, %v937, %v942
        %v947 = vrsqrt.pop %v912
        %v948 = vmul.f32 %v947, %v912
        %v949 = vmul.f32 %v948, %v947
        %v950 = vmul.f32 0.5, %v949
        %v951 = vsub.f32 1.5, %v950
        %v952 = vmul.f32 %v947, %v951
        %vm953 = vweird.f32 %v912
        %vm954 = vweird.f32 %v947
        %vm955 = vmor %vm953, %vm954
        %v956 = vsel %vm955, %v947, %v952
        %v957 = vrsqrt.pop %v913
        %v958 = vmul.f32 %v957, %v913
        %v959 = vmul.f32 %v958, %v957
        %v960 = vmul.f32 0.5, %v959
        %v961 = vsub.f32 1.5, %v960
        %v962 = vmul.f32 %v957, %v961
        %vm963 = vweird.f32 %v913
        %vm964 = vweird.f32 %v957
        %vm965 = vmor %vm963, %vm964
        %v966 = vsel %vm965, %v957, %v962
        %v967 = vrsqrt.pop %v914
        %v968 = vmul.f32 %v967, %v914
        %v969 = vmul.f32 %v968, %v967
        %v970 = vmul.f32 0.5, %v969
        %v971 = vsub.f32 1.5, %v970
        %v972 = vmul.f32 %v967, %v971
        %vm973 = vweird.f32 %v914
        %vm974 = vweird.f32 %v967
        %vm975 = vmor %vm973, %vm974
        %v976 = vsel %vm975, %v967, %v972
        %v977 = vrsqrt.pop %v915
        %v978 = vmul.f32 %v977, %v915
        %v979 = vmul.f32 %v978, %v977
        %v980 = vmul.f32 0.5, %v979
        %v981 = vsub.f32 1.5, %v980
        %v982 = vmul.f32 %v977, %v981
        %vm983 = vweird.f32 %v915
        %vm984 = vweird.f32 %v977
        %vm985 = vmor %vm983, %vm984
        %v986 = vsel %vm985, %v977, %v982
        %v987 = vrsqrt.pop %v916
        %v988 = vmul.f32 %v987, %v916
        %v989 = vmul.f32 %v988, %v987
        %v990 = vmul.f32 0.5, %v989
        %v991 = vsub.f32 1.5, %v990
        %v992 = vmul.f32 %v987, %v991
        %vm993 = vweird.f32 %v916
        %vm994 = vweird.f32 %v987
        %vm995 = vmor %vm993, %vm994
        %v996 = vsel %vm995, %v987, %v992
        %v997 = vmul.f32 %v869, %v926
        %v998 = vmul.f32 %v870, %v936
        %v999 = vmul.f32 %v871, %v946
        %v1000 = vmul.f32 %v872, %v956
        %v1001 = vmul.f32 %v873, %v966
        %v1002 = vmul.f32 %v874, %v976
        %v1003 = vmul.f32 %v875, %v986
        %v1004 = vmul.f32 %v876, %v996
        %v1006 = vperm.slane %v836, 0
        %v1008 = vmul.f32 %v997, %v1006
        %v1009 = vmul.f32 %v998, %v1006
        %v1010 = vmul.f32 %v999, %v1006
        %v1011 = vmul.f32 %v1000, %v1006
        %v1012 = vmul.f32 %v1001, %v1006
        %v1013 = vmul.f32 %v1002, %v1006
        %v1014 = vmul.f32 %v1003, %v1006
        %v1015 = vmul.f32 %v1004, %v1006
        %v1017 = vperm.slane %v837, 0
        %v1019 = vadd.f32 %v1008, %v1017
        %v1020 = vadd.f32 %v1009, %v1017
        %v1021 = vadd.f32 %v1010, %v1017
        %v1022 = vadd.f32 %v1011, %v1017
        %v1023 = vadd.f32 %v1012, %v1017
        %v1024 = vadd.f32 %v1013, %v1017
        %v1025 = vadd.f32 %v1014, %v1017
        %v1026 = vadd.f32 %v1015, %v1017
        %v1027 = vpack.c.bf16 %v1020, %v1019
        %v1028 = vpack.c.bf16 %v1022, %v1021
        %v1029 = vpack.c.bf16 %v1024, %v1023
        %v1030 = vpack.c.bf16 %v1026, %v1025
        %v1031 = vld [vmem:[#allocation5] sm:$0xf]
        %v1032 = vld [vmem:[#allocation5 + $0x4] sm:$0xf]
        %v1033 = vld [vmem:[#allocation5 + $0x8] sm:$0xf]
        %v1034 = vld [vmem:[#allocation5 + $0xc] sm:$0xf]
        %v1035 = vld [vmem:[#allocation5 + $0x10] sm:$0xf]
        %v1036 = vld [vmem:[#allocation5 + $0x14] sm:$0xf]
        %v1037 = vld [vmem:[#allocation5 + $0x18] sm:$0xf]
        %v1038 = vld [vmem:[#allocation5 + $0x1c] sm:$0xf]
        %v1039 = vld [vmem:[#allocation5 + $0x20] sm:$0xf]
        %v1040 = vld [vmem:[#allocation5 + $0x24] sm:$0xf]
        %v1041 = vld [vmem:[#allocation5 + $0x28] sm:$0xf]
        %v1042 = vld [vmem:[#allocation5 + $0x2c] sm:$0xf]
        %v1043 = vld [vmem:[#allocation5 + $0x30] sm:$0xf]
        %v1044 = vld [vmem:[#allocation5 + $0x34] sm:$0xf]
        %v1045 = vld [vmem:[#allocation5 + $0x38] sm:$0xf]
        %v1046 = vld [vmem:[#allocation5 + $0x3c] sm:$0xf]
        %v1063 = vunpack.c.l.b16 %v1031
        %v1064 = vunpack.c.l.b16 %v1032
        %v1065 = vunpack.c.l.b16 %v1033
        %v1066 = vunpack.c.l.b16 %v1034
        %v1067 = vunpack.c.l.b16 %v1035
        %v1068 = vunpack.c.l.b16 %v1036
        %v1069 = vunpack.c.l.b16 %v1037
        %v1070 = vunpack.c.l.b16 %v1038
        %v1071 = vunpack.c.l.b16 %v1039
        %v1072 = vunpack.c.l.b16 %v1040
        %v1073 = vunpack.c.l.b16 %v1041
        %v1074 = vunpack.c.l.b16 %v1042
        %v1075 = vunpack.c.l.b16 %v1043
        %v1076 = vunpack.c.l.b16 %v1044
        %v1077 = vunpack.c.l.b16 %v1045
        %v1078 = vunpack.c.l.b16 %v1046
        %v1079 = vpack.c.b16 %v1064, %v1063
        %v1080 = vpack.c.b16 %v1066, %v1065
        %v1081 = vpack.c.b16 %v1068, %v1067
        %v1082 = vpack.c.b16 %v1070, %v1069
        %v1083 = vpack.c.b16 %v1072, %v1071
        %v1084 = vpack.c.b16 %v1074, %v1073
        %v1085 = vpack.c.b16 %v1076, %v1075
        %v1086 = vpack.c.b16 %v1078, %v1077
        %1095 = vmatpush.bf16.msra.mxu0 %v1086
        %1096 = vmatpush.bf16.msra.mxu0 %v1085
        %1097 = vmatpush.bf16.msra.mxu0 %v1084
        %1098 = vmatpush.bf16.msra.mxu0 %v1083
        %1099 = vmatpush.bf16.msra.mxu0 %v1082
        %1100 = vmatpush.bf16.msra.mxu0 %v1081
        %1101 = vmatpush.bf16.msra.mxu0 %v1080
        %1102 = vmatpush.bf16.msra.mxu0 %v1079
        %1103 = vmatmul.bf16.gmra.mxu0 %v1027
        %v1104 = vpop.f32.mrf.mxu0
        %v1105 = vadd.f32 0.0, %v1104
        %v1106 = vpop.f32.mrf.mxu0
        %v1107 = vadd.f32 0.0, %v1106
        %1108 = vmatmul.bf16.gmra.mxu0 %v1028
        %v1109 = vpop.f32.mrf.mxu0
        %v1110 = vadd.f32 0.0, %v1109
        %v1111 = vpop.f32.mrf.mxu0
        %v1112 = vadd.f32 0.0, %v1111
        %1113 = vmatmul.bf16.gmra.mxu0 %v1029
        %v1114 = vpop.f32.mrf.mxu0
        %v1115 = vadd.f32 0.0, %v1114
        %v1116 = vpop.f32.mrf.mxu0
        %v1117 = vadd.f32 0.0, %v1116
        %1118 = vmatmul.bf16.gmra.mxu0 %v1030
        %v1119 = vpop.f32.mrf.mxu0
        %v1120 = vadd.f32 0.0, %v1119
        %v1121 = vpop.f32.mrf.mxu0
        %v1122 = vadd.f32 0.0, %v1121
        %1123 = vdwg.mxu0
        %v1124 = vpack.c.bf16 %v1105, %v1105
        %v1125 = vpack.c.bf16 %v1107, %v1107
        %v1126 = vpack.c.bf16 %v1110, %v1110
        %v1127 = vpack.c.bf16 %v1112, %v1112
        %v1128 = vpack.c.bf16 %v1115, %v1115
        %v1129 = vpack.c.bf16 %v1117, %v1117
        %v1130 = vpack.c.bf16 %v1120, %v1120
        %v1131 = vpack.c.bf16 %v1122, %v1122
        %1132 = vst [vmem:[%s467] sm:$0xf] %v1124
        %1133 = vst [vmem:[%s467 + $0x4] sm:$0xf] %v1125
        %1134 = vst [vmem:[%s467 + $0x8] sm:$0xf] %v1126
        %1135 = vst [vmem:[%s467 + $0xc] sm:$0xf] %v1127
        %1136 = vst [vmem:[%s467 + $0x10] sm:$0xf] %v1128
        %1137 = vst [vmem:[%s467 + $0x14] sm:$0xf] %v1129
        %1138 = vst [vmem:[%s467 + $0x18] sm:$0xf] %v1130
        %1139 = vst [vmem:[%s467 + $0x1c] sm:$0xf] %v1131
        %v1140 = vld [vmem:[#allocation7] sm:$0xf]
        %v1141 = vld [vmem:[#allocation7 + $0x4] sm:$0xf]
        %v1142 = vld [vmem:[#allocation7 + $0x8] sm:$0xf]
        %v1143 = vld [vmem:[#allocation7 + $0xc] sm:$0xf]
        %v1144 = vld [vmem:[#allocation7 + $0x10] sm:$0xf]
        %v1145 = vld [vmem:[#allocation7 + $0x14] sm:$0xf]
        %v1146 = vld [vmem:[#allocation7 + $0x18] sm:$0xf]
        %v1147 = vld [vmem:[#allocation7 + $0x1c] sm:$0xf]
        %v1148 = vld [vmem:[#allocation7 + $0x20] sm:$0xf]
        %v1149 = vld [vmem:[#allocation7 + $0x24] sm:$0xf]
        %v1150 = vld [vmem:[#allocation7 + $0x28] sm:$0xf]
        %v1151 = vld [vmem:[#allocation7 + $0x2c] sm:$0xf]
        %v1152 = vld [vmem:[#allocation7 + $0x30] sm:$0xf]
        %v1153 = vld [vmem:[#allocation7 + $0x34] sm:$0xf]
        %v1154 = vld [vmem:[#allocation7 + $0x38] sm:$0xf]
        %v1155 = vld [vmem:[#allocation7 + $0x3c] sm:$0xf]
        %v1172 = vunpack.c.l.b16 %v1140
        %v1173 = vunpack.c.l.b16 %v1141
        %v1174 = vunpack.c.l.b16 %v1142
        %v1175 = vunpack.c.l.b16 %v1143
        %v1176 = vunpack.c.l.b16 %v1144
        %v1177 = vunpack.c.l.b16 %v1145
        %v1178 = vunpack.c.l.b16 %v1146
        %v1179 = vunpack.c.l.b16 %v1147
        %v1180 = vunpack.c.l.b16 %v1148
        %v1181 = vunpack.c.l.b16 %v1149
        %v1182 = vunpack.c.l.b16 %v1150
        %v1183 = vunpack.c.l.b16 %v1151
        %v1184 = vunpack.c.l.b16 %v1152
        %v1185 = vunpack.c.l.b16 %v1153
        %v1186 = vunpack.c.l.b16 %v1154
        %v1187 = vunpack.c.l.b16 %v1155
        %v1188 = vpack.c.b16 %v1173, %v1172
        %v1189 = vpack.c.b16 %v1175, %v1174
        %v1190 = vpack.c.b16 %v1177, %v1176
        %v1191 = vpack.c.b16 %v1179, %v1178
        %v1192 = vpack.c.b16 %v1181, %v1180
        %v1193 = vpack.c.b16 %v1183, %v1182
        %v1194 = vpack.c.b16 %v1185, %v1184
        %v1195 = vpack.c.b16 %v1187, %v1186
        %1204 = vmatpush.bf16.msra.mxu0 %v1195
        %1205 = vmatpush.bf16.msra.mxu0 %v1194
        %1206 = vmatpush.bf16.msra.mxu0 %v1193
        %1207 = vmatpush.bf16.msra.mxu0 %v1192
        %1208 = vmatpush.bf16.msra.mxu0 %v1191
        %1209 = vmatpush.bf16.msra.mxu0 %v1190
        %1210 = vmatpush.bf16.msra.mxu0 %v1189
        %1211 = vmatpush.bf16.msra.mxu0 %v1188
        %1212 = vmatmul.bf16.gmra.mxu0 %v1027
        %v1213 = vpop.f32.mrf.mxu0
        %v1214 = vadd.f32 0.0, %v1213
        %v1215 = vpop.f32.mrf.mxu0
        %v1216 = vadd.f32 0.0, %v1215
        %1217 = vmatmul.bf16.gmra.mxu0 %v1028
        %v1218 = vpop.f32.mrf.mxu0
        %v1219 = vadd.f32 0.0, %v1218
        %v1220 = vpop.f32.mrf.mxu0
        %v1221 = vadd.f32 0.0, %v1220
        %1222 = vmatmul.bf16.gmra.mxu0 %v1029
        %v1223 = vpop.f32.mrf.mxu0
        %v1224 = vadd.f32 0.0, %v1223
        %v1225 = vpop.f32.mrf.mxu0
        %v1226 = vadd.f32 0.0, %v1225
        %1227 = vmatmul.bf16.gmra.mxu0 %v1030
        %v1228 = vpop.f32.mrf.mxu0
        %v1229 = vadd.f32 0.0, %v1228
        %v1230 = vpop.f32.mrf.mxu0
        %v1231 = vadd.f32 0.0, %v1230
        %1232 = vdwg.mxu0
        %v1233 = vpack.c.bf16 %v1214, %v1214
        %v1234 = vpack.c.bf16 %v1216, %v1216
        %v1235 = vpack.c.bf16 %v1219, %v1219
        %v1236 = vpack.c.bf16 %v1221, %v1221
        %v1237 = vpack.c.bf16 %v1224, %v1224
        %v1238 = vpack.c.bf16 %v1226, %v1226
        %v1239 = vpack.c.bf16 %v1229, %v1229
        %v1240 = vpack.c.bf16 %v1231, %v1231
        %1241 = vst [vmem:[%s474] sm:$0xf] %v1233
        %1242 = vst [vmem:[%s474 + $0x4] sm:$0xf] %v1234
        %1243 = vst [vmem:[%s474 + $0x8] sm:$0xf] %v1235
        %1244 = vst [vmem:[%s474 + $0xc] sm:$0xf] %v1236
        %1245 = vst [vmem:[%s474 + $0x10] sm:$0xf] %v1237
        %1246 = vst [vmem:[%s474 + $0x14] sm:$0xf] %v1238
        %1247 = vst [vmem:[%s474 + $0x18] sm:$0xf] %v1239
        %1248 = vst [vmem:[%s474 + $0x1c] sm:$0xf] %v1240
        %s1249 = sand.u32 %s255, 1
        %s1250 = scalar_lea.sflag [#allocation4], %s1249
        %s1251 = sand.u32 %s255, 1
        %s1252 = smul.addr %s1251, 64
        %s1253 = scalar_lea.vmem [#allocation8], %s1252
        %s1254 = sand.u32 %s32, 1
        %s1255 = scalar_lea.sflag [#allocation10], %s1254
        %s1256 = sand.u32 %s281, 1
        %s1257 = smul.addr %s1256, 32
        %s1258 = scalar_lea.vmem [#allocation9], %s1257
        %s1259 = sand.u32 %s32, 1
        %s1260 = scalar_lea.sflag [#allocation10], %s1259
        %s1261 = sand.u32 %s307, 1
        %s1262 = smul.addr %s1261, 32
        %s1263 = scalar_lea.vmem [#allocation11], %s1262
        // Predicated region
        $region73: #{tpu_custom_call.1} parent=59 // pred_check
          %p1264 = pneg %p265
        $region74: #{tpu_custom_call.1} parent=59 // pred_check_branch
          %1266 = sbr.rel (%p1264) target = $region76
        $region75: #{tpu_custom_call.1} parent=59 // pred_region
          %1268 = vsyncadd %s1250, 0
          %s1269 = smul.addr %s32, 8
          %s1270 = smul.addr %s1269, 8
          %s1271 = scalar_lea.hbm %s10, %s1270
          %s1272 = sshll.u32 %s1253, 4
          %s1273 = int_to_ptr.vmem [resolvable:$true] %s1272
          %s1274 = sshll.u32 %s1271, 4
          %s1275 = int_to_ptr.hbm [resolvable:$true] %s1274
          %1280 = dma.vmem_to_hbm [thread:$0]  %s1273, 1024, %s1275, %s1250, 128, 128, 8
        $region76: #{tpu_custom_call.1} parent=59 // pred_fallthru
          _
        // Predicated region
        $region77: #{tpu_custom_call.1} parent=59 // pred_check
          %p1281 = pneg %p291
        $region78: #{tpu_custom_call.1} parent=59 // pred_check_branch
          %1283 = sbr.rel (%p1281) target = $region80
        $region79: #{tpu_custom_call.1} parent=59 // pred_region
          %1285 = vsyncadd %s1255, 0
          %s1286 = smul.addr %s32, 8
          %s1287 = smul.addr %s1286, 4
          %s1288 = scalar_lea.hbm %s11, %s1287
          %s1289 = sshll.u32 %s1258, 4
          %s1290 = int_to_ptr.vmem [resolvable:$true] %s1289
          %s1291 = sshll.u32 %s1288, 4
          %s1292 = int_to_ptr.hbm [resolvable:$true] %s1291
          %1297 = dma.vmem_to_hbm [thread:$0]  %s1290, 512, %s1292, %s1255, 64, 64, 4
        $region80: #{tpu_custom_call.1} parent=59 // pred_fallthru
          _
        // Predicated region
        $region81: #{tpu_custom_call.1} parent=59 // pred_check
          %p1298 = pneg %p317
        $region82: #{tpu_custom_call.1} parent=59 // pred_check_branch
          %1300 = sbr.rel (%p1298) target = $region84
        $region83: #{tpu_custom_call.1} parent=59 // pred_region
          %1302 = vsyncadd %s1260, 0
          %s1303 = smul.addr %s32, 8
          %s1304 = smul.addr %s1303, 4
          %s1305 = scalar_lea.hbm %s12, %s1304
          %s1306 = sshll.u32 %s1263, 4
          %s1307 = int_to_ptr.vmem [resolvable:$true] %s1306
          %s1308 = sshll.u32 %s1305, 4
          %s1309 = int_to_ptr.hbm [resolvable:$true] %s1308
          %1314 = dma.vmem_to_hbm [thread:$0]  %s1307, 512, %s1309, %s1260, 64, 64, 4
        $region84: #{tpu_custom_call.1} parent=59 // pred_fallthru
          _
      $region60: #{tpu_custom_call.1} parent=5 // pred_fallthru
        _
      %p1315 = scmp.le.s32.totalorder 2, %s27
      // Predicated region
      $region85: #{tpu_custom_call.1} parent=5 // pred_check
        %p1316 = pneg %p1315
      $region86: #{tpu_custom_call.1} parent=5 // pred_check_branch
        %1318 = sbr.rel (%p1316) target = $region88
      $region87: #{tpu_custom_call.1} parent=5 // pred_region
        %s1319 = ssub.s32 %s27, 2
        // Predicated region
        $region89: #{tpu_custom_call.1} parent=87 // pred_check
          %p1320 = pneg %p271
        $region90: #{tpu_custom_call.1} parent=87 // pred_check_branch
          %1322 = sbr.rel (%p1320) target = $region92
        $region91: #{tpu_custom_call.1} parent=87 // pred_region
          %s1323 = sand.u32 %s256, 1
          %s1324 = scalar_lea.sflag [#allocation4], %s1323
          %s1325 = sand.u32 %s256, 1
          %s1326 = smul.addr %s1325, 64
          %s1327 = scalar_lea.vmem [#allocation8], %s1326
          %1329 = dma.done %s1324, 1024
        $region92: #{tpu_custom_call.1} parent=87 // pred_fallthru
          _
        // Predicated region
        $region93: #{tpu_custom_call.1} parent=87 // pred_check
          %p1330 = pneg %p297
        $region94: #{tpu_custom_call.1} parent=87 // pred_check_branch
          %1332 = sbr.rel (%p1330) target = $region96
        $region95: #{tpu_custom_call.1} parent=87 // pred_region
          %s1333 = sand.u32 %s33, 1
          %s1334 = scalar_lea.sflag [#allocation10], %s1333
          %s1335 = sand.u32 %s282, 1
          %s1336 = smul.addr %s1335, 32
          %s1337 = scalar_lea.vmem [#allocation9], %s1336
          %1339 = dma.done %s1334, 512
        $region96: #{tpu_custom_call.1} parent=87 // pred_fallthru
          _
        // Predicated region
        $region97: #{tpu_custom_call.1} parent=87 // pred_check
          %p1340 = pneg %p323
        $region98: #{tpu_custom_call.1} parent=87 // pred_check_branch
          %1342 = sbr.rel (%p1340) target = $region100
        $region99: #{tpu_custom_call.1} parent=87 // pred_region
          %s1343 = sand.u32 %s33, 1
          %s1344 = scalar_lea.sflag [#allocation10], %s1343
          %s1345 = sand.u32 %s308, 1
          %s1346 = smul.addr %s1345, 32
          %s1347 = scalar_lea.vmem [#allocation11], %s1346
          %1349 = dma.done %s1344, 512
        $region100: #{tpu_custom_call.1} parent=87 // pred_fallthru
          _
      $region88: #{tpu_custom_call.1} parent=5 // pred_fallthru
        _
    $region6: #{tpu_custom_call.1} parent=1 // loop_footer
      %s31 = sadd.s32 1, %s27
    $region7: #{tpu_custom_call.1} parent=1 // loop_footer_branch
      %26 = sbr.rel target = $region3
    $region8: #{tpu_custom_call.1} parent=1 // loop_exit
      _
    %1350 = vsyncpa [#allocation3], 1
    %s1351 = scalar_lea.sflag [#allocation3], 1
    %1352 = vsyncpa %s1351, 1
    %1353 = vsyncpa [#allocation6], 1
    %1354 = vsyncpa [#allocation4], 1
    %s1355 = scalar_lea.sflag [#allocation4], 1
    %1356 = vsyncpa %s1355, 1
    %1357 = vsyncpa [#allocation10], 1
    %s1358 = scalar_lea.sflag [#allocation10], 1
    %1359 = vsyncpa %s1358, 1

</llo_original>
